<compile_context>
chip_gen: v6e
topology: v6e:2x2x1
jax: 0.10.0
libtpu: 0.0.40
codegen_flags: <defaults>
</compile_context>

<pallas_src>
import functools

import jax
import jax.numpy as jnp
from jax.experimental import pallas as pl
from jax.experimental.pallas import tpu as pltpu


def _round_up(v, m):
    return (v + m - 1) // m * m


def _vmem_limit_bytes():
    """Pick a per-generation VMEM limit (96 MiB on 128-MiB parts, 48 MiB on v7x)."""
    cap = 0
    try:
        cap = int(pltpu.get_tpu_info().vmem_capacity_bytes)
    except Exception:
        cap = 0
    if cap < (32 << 20):
        try:
            kind = jax.devices()[0].device_kind.lower()
        except Exception:
            kind = ""
        cap = (128 << 20) if ("v5" in kind or "v6" in kind) else (64 << 20)
    return min(96 << 20, (cap * 3) // 4)


def _dsconv_kernel(x_hbm, wc_ref, bias_ref, o_ref, xbuf, copy_sem, *,
                   K, stride, TH, Wo_pad, n_rt_local):
    # x_hbm   : (N, Hp, Wp, Cp)     padded input, resident in HBM (manual DMA)
    # wc_ref  : (K*K, Cp, Op)       folded per-tap weights wd[kh,kw,c] * wp[c,o]
    # bias_ref: (1, Op)             folded bias  bp + bd @ wp   (f32)
    # o_ref   : (1, TH, Wo_pad, Op) output row slab (lane/sublane dense -> unmasked vst)
    # xbuf    : (2, H_blk, Wp, Cp)  VMEM double buffer for the haloed input slab
    # copy_sem: (2,)                DMA semaphores
    n = pl.program_id(0)
    s = pl.program_id(1)
    rt = pl.program_id(2)
    slot = rt % 2

    H_blk = xbuf.shape[1]
    Wp = xbuf.shape[2]
    Cp = xbuf.shape[3]
    Op = o_ref.shape[3]

    grt = s * n_rt_local + rt          # global output row-tile index

    def slab_copy(row_tile, dst_slot):
        row0 = row_tile * (TH * stride)
        return pltpu.make_async_copy(
            x_hbm.at[n, pl.ds(row0, H_blk)],
            xbuf.at[dst_slot],
            copy_sem.at[dst_slot])

    # Prime this (n, s) chain's first slab.
    @pl.when(rt == 0)
    def _():
        slab_copy(grt, slot).start()

    # Wait using the *same* descriptor (slice + semaphore) that started this slab.
    slab_copy(grt, slot).wait()

    # Prefetch the next row tile's slab; overlaps with the MXU work below.
    # TODO(synk): cross-(n, s) prefetch of the next chain's first slab is not done;
    # with the batch/split axes marked "parallel" the per-core iteration order is
    # not simply n+1, so it would be unsafe without core-aware bookkeeping.
    @pl.when(rt + 1 < n_rt_local)
    def _():
        slab_copy(grt + 1, 1 - slot).start()

    y = jnp.zeros((TH * Wo_pad, Op), jnp.float32)

    if stride == 1:
        # One aligned ref-load per kh; the kw shift runs on the XLU via pltpu.roll,
        # so there are no sublane-misaligned loads and no VPU depthwise accumulator.
        for kh in range(K):
            rb = xbuf[slot, kh:kh + TH, :, :]                 # (TH, Wp, Cp)
            rb2 = rb.reshape(TH * Wp, Cp)
            for kw in range(K):
                shifted = rb2 if kw == 0 else pltpu.roll(
                    rb2, shift=TH * Wp - kw, axis=0)          # rolled[i] = rb2[i + kw]
                patch = (shifted.reshape(TH, Wp, Cp)[:, :Wo_pad, :]
                         .reshape(TH * Wo_pad, Cp)
                         .astype(wc_ref.dtype))
                y = y + jnp.dot(patch, wc_ref[kh * K + kw],
                                preferred_element_type=jnp.float32)
    else:
        # TODO(synk): stride > 1 uses strided per-tap ref loads (slower, rarely hot).
        for kh in range(K):
            for kw in range(K):
                patch = xbuf[slot, pl.ds(kh, TH, stride),
                             pl.ds(kw, Wo_pad, stride), :]
                patch = patch.reshape(TH * Wo_pad, Cp).astype(wc_ref.dtype)
                y = y + jnp.dot(patch, wc_ref[kh * K + kw],
                                preferred_element_type=jnp.float32)

    y = y + bias_ref[...]                                     # (1, Op) broadcast
    o_ref[0] = y.reshape(TH, Wo_pad, Op).astype(o_ref.dtype)


def depthwise_separable_conv(x_nchw, wd, bd, wp, bp, *, stride=1, padding=0,
                             mxu_dtype=None):
    """x_nchw: (N, C, H, W); wd: (K, K, C); bd: (C,); wp: (C, O); bp: (O,)."""
    # TODO(synk): pointwise `groups != 1` (grouped 1x1 conv) is not implemented.
    # TODO(synk): very large K*K*C*O folded weights may exceed VMEM; fall back to
    # a split depthwise+pointwise kernel in that regime.
    N, C, H, W = x_nchw.shape
    K = wd.shape[0]
    O = wp.shape[1]
    Ho = (H + 2 * padding - K) // stride + 1
    Wo = (W + 2 * padding - K) // stride + 1
    assert Ho > 0 and Wo > 0

    LANE, SUB = 128, 8
    Cp = _round_up(C, LANE)
    Op = _round_up(O, LANE)
    Wo_pad = _round_up(Wo, SUB)          # tile-aligned reshapes + unmasked stores

    x_dtype = x_nchw.dtype
    # MXU operand dtype; keep the input dtype by default (f32 input -> f32 matmul)
    # to preserve the module's numerics; pass mxu_dtype=jnp.bfloat16 to trade
    # accuracy for MXU throughput.
    op_dtype = x_dtype if mxu_dtype is None else mxu_dtype
    xsz = jnp.dtype(x_dtype).itemsize
    vmem_limit = _vmem_limit_bytes()

    # Padded input width: covers every tap of every (padded) output column.
    Wp0 = W + 2 * padding
    W_in_need = (Wo_pad - 1) * stride + K
    Wp_total = _round_up(max(W_in_need, Wp0), SUB)

    # ---- pick the output row tile TH (MXU M dim = TH * Wo_pad) -------------
    TH = min(Ho, max(-(-512 // Wo_pad), 8))
    n_splits = 1
    if N == 1 and Ho > 1:
        # v7x megacore: with a single image, split rows over a second "parallel"
        # grid axis so both TensorCores get work (no-op on 1-TC chips).
        n_splits = 2
        TH = min(TH, -(-Ho // 2))

    def _step_bytes(th):
        h_blk = (th - 1) * stride + K
        xb = 2 * h_blk * Wp_total * Cp * xsz                  # haloed slab x2
        ob = 2 * th * Wo_pad * Op * xsz                       # output block x2
        wt = K * K * Cp * Op * jnp.dtype(op_dtype).itemsize + Op * 4
        acc = th * Wo_pad * Op * 4 + th * Wp_total * Cp * 4   # y acc + row block
        return xb + ob + wt + acc

    while TH > 1 and _step_bytes(TH) > (vmem_limit * 3) // 5:
        TH = max(1, TH // 2)

    n_rt = -(-Ho // TH)
    n_rt_local = -(-n_rt // n_splits)
    n_total_rt = n_splits * n_rt_local
    H_blk = (TH - 1) * stride + K
    H_out_pad = n_total_rt * TH
    H_in_need = (H_out_pad - 1) * stride + K

    # ---- pad / lay out operands ---------------------------------------------
    # NCHW -> NHWC (channels on the 128-lane axis); pad spatial dims + channels.
    x = jnp.transpose(x_nchw, (0, 2, 3, 1))
    Hp0 = H + 2 * padding
    x = jnp.pad(x, ((0, 0),
                    (padding, padding + max(0, H_in_need - Hp0)),
                    (padding, padding + (Wp_total - Wp0)),
                    (0, Cp - C)))

    # Fold depthwise weights through the (linear) pointwise conv:
    #   y = sum_t patch_t @ (wd_t[:, None] * wp)
    wd_p = jnp.pad(wd, ((0, 0), (0, 0), (0, Cp - C))).astype(jnp.float32)
    wp_p = jnp.pad(wp, ((0, Cp - C), (0, Op - O))).astype(jnp.float32)
    wcomb = (wd_p.reshape(K * K, Cp)[:, :, None] * wp_p[None, :, :]).astype(op_dtype)

    # Fold the depthwise bias: (dw + bd) @ wp + bp == dw @ wp + (bd @ wp + bp).
    bias = (bp.astype(jnp.float32)
            + bd.astype(jnp.float32) @ wp.astype(jnp.float32))
    bias = jnp.pad(bias, (0, Op - O)).reshape(1, Op)

    kernel = functools.partial(_dsconv_kernel, K=K, stride=stride, TH=TH,
                               Wo_pad=Wo_pad, n_rt_local=n_rt_local)

    out = pl.pallas_call(
        kernel,
        out_shape=jax.ShapeDtypeStruct((N, H_out_pad, Wo_pad, Op), x_dtype),
        grid_spec=pltpu.PrefetchScalarGridSpec(
            num_scalar_prefetch=0,
            grid=(N, n_splits, n_rt_local),
            in_specs=[
                pl.BlockSpec(memory_space=pl.ANY),            # x stays in HBM
                pl.BlockSpec((K * K, Cp, Op), lambda n, s, r: (0, 0, 0),
                             pipeline_mode=pl.Buffered(1)),   # constant weights
                pl.BlockSpec((1, Op), lambda n, s, r: (0, 0),
                             pipeline_mode=pl.Buffered(1)),   # folded bias
            ],
            out_specs=pl.BlockSpec(
                (1, TH, Wo_pad, Op),
                lambda n, s, r: (n, s * n_rt_local + r, 0, 0)),
            scratch_shapes=[
                pltpu.VMEM((2, H_blk, Wp_total, Cp), x_dtype),  # haloed slab x2
                pltpu.SemaphoreType.DMA((2,)),
            ],
        ),
        compiler_params=pltpu.CompilerParams(
            dimension_semantics=("parallel", "parallel", "arbitrary"),
            vmem_limit_bytes=vmem_limit,
        ),
    )(x, wcomb, bias)

    # Crop row/column/channel padding, NHWC -> NCHW.
    out = out[:, :Ho, :Wo, :O]
    return jnp.transpose(out, (0, 3, 1, 2))


def _reference(x_nchw, wd, bd, wp, bp, *, stride, padding):
    """Pure-JAX reference using lax.conv_general_dilated (NCHW, like PyTorch)."""
    C = x_nchw.shape[1]
    wd_oihw = jnp.transpose(wd, (2, 0, 1))[:, None, :, :]        # (C,1,K,K)
    y = jax.lax.conv_general_dilated(
        x_nchw.astype(jnp.float32), wd_oihw.astype(jnp.float32),
        window_strides=(stride, stride),
        padding=((padding, padding), (padding, padding)),
        feature_group_count=C,
        dimension_numbers=("NCHW", "OIHW", "NCHW"))
    y = y + bd.astype(jnp.float32)[None, :, None, None]
    wp_oihw = jnp.transpose(wp, (1, 0))[:, :, None, None]         # (O,C,1,1)
    z = jax.lax.conv_general_dilated(
        y, wp_oihw.astype(jnp.float32),
        window_strides=(1, 1), padding="VALID",
        dimension_numbers=("NCHW", "OIHW", "NCHW"))
    z = z + bp.astype(jnp.float32)[None, :, None, None]
    return z.astype(x_nchw.dtype)


if __name__ == "__main__":
    # Small, module-consistent shapes: N=2, C_in=4, C_out=8, 16x16 spatial,
    # kernel_size=3, stride=1, padding=1 (groups=1 on the pointwise conv).
    N, C, O, H, W = 2, 4, 8, 16, 16
    K, STRIDE, PAD = 3, 1, 1

    key = jax.random.PRNGKey(0)
    kx, kwd, kbd, kwp, kbp = jax.random.split(key, 5)

    x = jax.random.normal(kx, (N, C, H, W), dtype=jnp.float32)
    # Shapes match nn.Conv2d weights/biases (torch depthwise (C,1,K,K) -> (K,K,C);
    # torch pointwise (O,C,1,1) -> (C,O)).
    wd = jax.random.normal(kwd, (K, K, C), dtype=jnp.float32) * 0.1
    bd = jax.random.normal(kbd, (C,), dtype=jnp.float32) * 0.1
    wp = jax.random.normal(kwp, (C, O), dtype=jnp.float32) * 0.1
    bp = jax.random.normal(kbp, (O,), dtype=jnp.float32) * 0.1

    out = depthwise_separable_conv(x, wd, bd, wp, bp, stride=STRIDE, padding=PAD)
    out = jax.block_until_ready(out)

    ref = _reference(x, wd, bd, wp, bp, stride=STRIDE, padding=PAD)
    assert out.shape == (N, O, H, W), out.shape
    assert jnp.allclose(out, ref, atol=1e-4, rtol=1e-4), "mismatch vs reference"

    print("KERNEL_OK")
</pallas_src>

<mosaic_0001>
module attributes {stable_mosaic.version = 11 : i64} {
  func.func @_dsconv_kernel(%arg0: i32, %arg1: i32, %arg2: i32, %arg3: memref<2x18x24x128xf32, #tpu.memory_space<any>>, %arg4: memref<9x128x128xf32, #tpu.memory_space<vmem>>, %arg5: memref<1x128xf32, #tpu.memory_space<vmem>>, %arg6: memref<1x16x16x128xf32, #tpu.memory_space<vmem>>, %arg7: memref<2x18x24x128xf32, #tpu.memory_space<vmem>>, %arg8: memref<2x!tpu.dma_semaphore, #tpu.memory_space<semaphore_mem>>) attributes {dimension_semantics = [#tpu.dimension_semantics<parallel>, #tpu.dimension_semantics<parallel>, #tpu.dimension_semantics<arbitrary>], iteration_bounds = array<i64: 2, 1, 1>, scalar_prefetch = 0 : i64, scratch_operands = 2 : i64, tpu.core_type = #tpu.core_type<tc>, window_params = [{}, {pipeline_mode = #tpu.pipeline_mode<synchronous>, transform_indices = @transform_1, window_bounds = array<i64: 9, 128, 128>}, {pipeline_mode = #tpu.pipeline_mode<synchronous>, transform_indices = @transform_2, window_bounds = array<i64: 1, 128>}, {transform_indices = @transform_3, window_bounds = array<i64: 1, 16, 16, 128>}]} {
    %c2_i32 = arith.constant 2 : i32
    %c0_i32 = arith.constant 0 : i32
    %0 = arith.cmpi eq, %c2_i32, %c0_i32 : i32
    %c1_i32 = arith.constant 1 : i32
    %1 = arith.select %0, %c1_i32, %c2_i32 : i32
    %2 = arith.remsi %arg2, %1 : i32
    %c0_i32_0 = arith.constant 0 : i32
    %3 = arith.cmpi ne, %2, %c0_i32_0 : i32
    %c0_i32_1 = arith.constant 0 : i32
    %4 = arith.cmpi slt, %2, %c0_i32_1 : i32
    %c0_i32_2 = arith.constant 0 : i32
    %5 = arith.cmpi slt, %1, %c0_i32_2 : i32
    %6 = arith.xori %4, %5 : i1
    %7 = arith.andi %6, %3 : i1
    %8 = arith.addi %2, %1 : i32
    %9 = arith.select %7, %8, %2 : i32
    %c1_i32_3 = arith.constant 1 : i32
    %10 = arith.muli %arg1, %c1_i32_3 : i32
    %11 = arith.addi %10, %arg2 : i32
    %c0_i32_4 = arith.constant 0 : i32
    %12 = arith.cmpi eq, %arg2, %c0_i32_4 : i32
    %13 = arith.extui %12 : i1 to i32
    %c0_i32_5 = arith.constant 0 : i32
    %14 = arith.cmpi ne, %13, %c0_i32_5 : i32
    scf.if %14 {
      %c16_i32_60 = arith.constant 16 : i32
      %115 = arith.muli %11, %c16_i32_60 : i32
      %c0_i32_61 = arith.constant 0 : i32
      %c0_i32_62 = arith.constant 0 : i32
      %116 = tpu.memref_slice %arg3[%arg0, %115, %c0_i32_61, %c0_i32_62] : memref<2x18x24x128xf32, #tpu.memory_space<any>> -> memref<1x18x24x128xf32, #tpu.memory_space<any>>
      %117 = tpu.memref_squeeze %116 : memref<1x18x24x128xf32, #tpu.memory_space<any>> -> memref<18x24x128xf32, #tpu.memory_space<any>>
      %c0_i32_63 = arith.constant 0 : i32
      %c0_i32_64 = arith.constant 0 : i32
      %c0_i32_65 = arith.constant 0 : i32
      %118 = tpu.memref_slice %arg7[%9, %c0_i32_63, %c0_i32_64, %c0_i32_65] : memref<2x18x24x128xf32, #tpu.memory_space<vmem>> -> memref<1x18x24x128xf32, #tpu.memory_space<vmem>>
      %119 = tpu.memref_squeeze %118 : memref<1x18x24x128xf32, #tpu.memory_space<vmem>> -> memref<18x24x128xf32, #tpu.memory_space<vmem>>
      %120 = tpu.memref_slice %arg8[%9] : memref<2x!tpu.dma_semaphore, #tpu.memory_space<semaphore_mem>> -> memref<1x!tpu.dma_semaphore, #tpu.memory_space<semaphore_mem>>
      %121 = tpu.memref_squeeze %120 : memref<1x!tpu.dma_semaphore, #tpu.memory_space<semaphore_mem>> -> memref<!tpu.dma_semaphore, #tpu.memory_space<semaphore_mem>>
      tpu.enqueue_dma source(%117 : memref<18x24x128xf32, #tpu.memory_space<any>>) target(%119 : memref<18x24x128xf32, #tpu.memory_space<vmem>>) target_semaphore(%121 : memref<!tpu.dma_semaphore, #tpu.memory_space<semaphore_mem>>)
    } else {
    }
    %c16_i32 = arith.constant 16 : i32
    %15 = arith.muli %11, %c16_i32 : i32
    %c0_i32_6 = arith.constant 0 : i32
    %c0_i32_7 = arith.constant 0 : i32
    %16 = tpu.memref_slice %arg3[%arg0, %15, %c0_i32_6, %c0_i32_7] : memref<2x18x24x128xf32, #tpu.memory_space<any>> -> memref<1x18x24x128xf32, #tpu.memory_space<any>>
    %17 = tpu.memref_squeeze %16 : memref<1x18x24x128xf32, #tpu.memory_space<any>> -> memref<18x24x128xf32, #tpu.memory_space<any>>
    %c0_i32_8 = arith.constant 0 : i32
    %c0_i32_9 = arith.constant 0 : i32
    %c0_i32_10 = arith.constant 0 : i32
    %18 = tpu.memref_slice %arg7[%9, %c0_i32_8, %c0_i32_9, %c0_i32_10] : memref<2x18x24x128xf32, #tpu.memory_space<vmem>> -> memref<1x18x24x128xf32, #tpu.memory_space<vmem>>
    %19 = tpu.memref_squeeze %18 : memref<1x18x24x128xf32, #tpu.memory_space<vmem>> -> memref<18x24x128xf32, #tpu.memory_space<vmem>>
    %20 = tpu.memref_slice %arg8[%9] : memref<2x!tpu.dma_semaphore, #tpu.memory_space<semaphore_mem>> -> memref<1x!tpu.dma_semaphore, #tpu.memory_space<semaphore_mem>>
    %21 = tpu.memref_squeeze %20 : memref<1x!tpu.dma_semaphore, #tpu.memory_space<semaphore_mem>> -> memref<!tpu.dma_semaphore, #tpu.memory_space<semaphore_mem>>
    tpu.wait_dma2 semaphore(%21 : memref<!tpu.dma_semaphore, #tpu.memory_space<semaphore_mem>>) src(%17 : memref<18x24x128xf32, #tpu.memory_space<any>>) dst(%19 : memref<18x24x128xf32, #tpu.memory_space<vmem>>)
    %c1_i32_11 = arith.constant 1 : i32
    %22 = arith.addi %arg2, %c1_i32_11 : i32
    %c1_i32_12 = arith.constant 1 : i32
    %23 = arith.cmpi slt, %22, %c1_i32_12 : i32
    %24 = arith.extui %23 : i1 to i32
    %c0_i32_13 = arith.constant 0 : i32
    %25 = arith.cmpi ne, %24, %c0_i32_13 : i32
    scf.if %25 {
      %c1_i32_60 = arith.constant 1 : i32
      %115 = arith.addi %11, %c1_i32_60 : i32
      %c1_i32_61 = arith.constant 1 : i32
      %116 = arith.subi %c1_i32_61, %9 : i32
      %c16_i32_62 = arith.constant 16 : i32
      %117 = arith.muli %115, %c16_i32_62 : i32
      %c0_i32_63 = arith.constant 0 : i32
      %c0_i32_64 = arith.constant 0 : i32
      %118 = tpu.memref_slice %arg3[%arg0, %117, %c0_i32_63, %c0_i32_64] : memref<2x18x24x128xf32, #tpu.memory_space<any>> -> memref<1x18x24x128xf32, #tpu.memory_space<any>>
      %119 = tpu.memref_squeeze %118 : memref<1x18x24x128xf32, #tpu.memory_space<any>> -> memref<18x24x128xf32, #tpu.memory_space<any>>
      %c0_i32_65 = arith.constant 0 : i32
      %c0_i32_66 = arith.constant 0 : i32
      %c0_i32_67 = arith.constant 0 : i32
      %120 = tpu.memref_slice %arg7[%116, %c0_i32_65, %c0_i32_66, %c0_i32_67] : memref<2x18x24x128xf32, #tpu.memory_space<vmem>> -> memref<1x18x24x128xf32, #tpu.memory_space<vmem>>
      %121 = tpu.memref_squeeze %120 : memref<1x18x24x128xf32, #tpu.memory_space<vmem>> -> memref<18x24x128xf32, #tpu.memory_space<vmem>>
      %122 = tpu.memref_slice %arg8[%116] : memref<2x!tpu.dma_semaphore, #tpu.memory_space<semaphore_mem>> -> memref<1x!tpu.dma_semaphore, #tpu.memory_space<semaphore_mem>>
      %123 = tpu.memref_squeeze %122 : memref<1x!tpu.dma_semaphore, #tpu.memory_space<semaphore_mem>> -> memref<!tpu.dma_semaphore, #tpu.memory_space<semaphore_mem>>
      tpu.enqueue_dma source(%119 : memref<18x24x128xf32, #tpu.memory_space<any>>) target(%121 : memref<18x24x128xf32, #tpu.memory_space<vmem>>) target_semaphore(%123 : memref<!tpu.dma_semaphore, #tpu.memory_space<semaphore_mem>>)
    } else {
    }
    %cst = arith.constant 0.000000e+00 : f32
    %26 = vector.broadcast %cst : f32 to vector<256x128xf32>
    %27 = arith.index_cast %9 : i32 to index
    %c0 = arith.constant 0 : index
    %c0_14 = arith.constant 0 : index
    %c0_15 = arith.constant 0 : index
    %28 = vector.load %arg7[%27, %c0, %c0_14, %c0_15] : memref<2x18x24x128xf32, #tpu.memory_space<vmem>>, vector<1x16x24x128xf32>
    %29 = vector.shape_cast %28 : vector<1x16x24x128xf32> to vector<16x24x128xf32>
    %30 = vector.shape_cast %29 : vector<16x24x128xf32> to vector<384x128xf32>
    %31 = vector.shape_cast %30 : vector<384x128xf32> to vector<16x24x128xf32>
    %32 = vector.extract_strided_slice %31 {offsets = [0, 0, 0], sizes = [16, 16, 128], strides = [1, 1, 1]} : vector<16x24x128xf32> to vector<16x16x128xf32>
    %33 = vector.shape_cast %32 : vector<16x16x128xf32> to vector<256x128xf32>
    %c0_16 = arith.constant 0 : index
    %c0_17 = arith.constant 0 : index
    %c0_18 = arith.constant 0 : index
    %34 = vector.load %arg4[%c0_16, %c0_17, %c0_18] : memref<9x128x128xf32, #tpu.memory_space<vmem>>, vector<1x128x128xf32>
    %35 = vector.shape_cast %34 : vector<1x128x128xf32> to vector<128x128xf32>
    %cst_19 = arith.constant dense<0.000000e+00> : vector<256x128xf32>
    %36 = tpu.matmul %33, %35, %cst_19 {dimension_numbers = #tpu.dot_dimension_numbers<[1], [0], [0], [1], [0, 0, 1, 1], [], []>} : vector<256x128xf32>, vector<128x128xf32>, vector<256x128xf32> -> vector<256x128xf32>
    %37 = arith.addf %26, %36 : vector<256x128xf32>
    %c383_i32 = arith.constant 383 : i32
    %38 = tpu.dynamic_rotate %30 by %c383_i32 dim 0 : vector<384x128xf32>, i32 -> vector<384x128xf32>
    %39 = vector.shape_cast %38 : vector<384x128xf32> to vector<16x24x128xf32>
    %40 = vector.extract_strided_slice %39 {offsets = [0, 0, 0], sizes = [16, 16, 128], strides = [1, 1, 1]} : vector<16x24x128xf32> to vector<16x16x128xf32>
    %41 = vector.shape_cast %40 : vector<16x16x128xf32> to vector<256x128xf32>
    %c1 = arith.constant 1 : index
    %c0_20 = arith.constant 0 : index
    %c0_21 = arith.constant 0 : index
    %42 = vector.load %arg4[%c1, %c0_20, %c0_21] : memref<9x128x128xf32, #tpu.memory_space<vmem>>, vector<1x128x128xf32>
    %43 = vector.shape_cast %42 : vector<1x128x128xf32> to vector<128x128xf32>
    %cst_22 = arith.constant dense<0.000000e+00> : vector<256x128xf32>
    %44 = tpu.matmul %41, %43, %cst_22 {dimension_numbers = #tpu.dot_dimension_numbers<[1], [0], [0], [1], [0, 0, 1, 1], [], []>} : vector<256x128xf32>, vector<128x128xf32>, vector<256x128xf32> -> vector<256x128xf32>
    %45 = arith.addf %37, %44 : vector<256x128xf32>
    %c382_i32 = arith.constant 382 : i32
    %46 = tpu.dynamic_rotate %30 by %c382_i32 dim 0 : vector<384x128xf32>, i32 -> vector<384x128xf32>
    %47 = vector.shape_cast %46 : vector<384x128xf32> to vector<16x24x128xf32>
    %48 = vector.extract_strided_slice %47 {offsets = [0, 0, 0], sizes = [16, 16, 128], strides = [1, 1, 1]} : vector<16x24x128xf32> to vector<16x16x128xf32>
    %49 = vector.shape_cast %48 : vector<16x16x128xf32> to vector<256x128xf32>
    %c2 = arith.constant 2 : index
    %c0_23 = arith.constant 0 : index
    %c0_24 = arith.constant 0 : index
    %50 = vector.load %arg4[%c2, %c0_23, %c0_24] : memref<9x128x128xf32, #tpu.memory_space<vmem>>, vector<1x128x128xf32>
    %51 = vector.shape_cast %50 : vector<1x128x128xf32> to vector<128x128xf32>
    %cst_25 = arith.constant dense<0.000000e+00> : vector<256x128xf32>
    %52 = tpu.matmul %49, %51, %cst_25 {dimension_numbers = #tpu.dot_dimension_numbers<[1], [0], [0], [1], [0, 0, 1, 1], [], []>} : vector<256x128xf32>, vector<128x128xf32>, vector<256x128xf32> -> vector<256x128xf32>
    %53 = arith.addf %45, %52 : vector<256x128xf32>
    %54 = arith.index_cast %9 : i32 to index
    %c1_26 = arith.constant 1 : index
    %c0_27 = arith.constant 0 : index
    %c0_28 = arith.constant 0 : index
    %55 = vector.load %arg7[%54, %c1_26, %c0_27, %c0_28] : memref<2x18x24x128xf32, #tpu.memory_space<vmem>>, vector<1x16x24x128xf32>
    %56 = vector.shape_cast %55 : vector<1x16x24x128xf32> to vector<16x24x128xf32>
    %57 = vector.shape_cast %56 : vector<16x24x128xf32> to vector<384x128xf32>
    %58 = vector.shape_cast %57 : vector<384x128xf32> to vector<16x24x128xf32>
    %59 = vector.extract_strided_slice %58 {offsets = [0, 0, 0], sizes = [16, 16, 128], strides = [1, 1, 1]} : vector<16x24x128xf32> to vector<16x16x128xf32>
    %60 = vector.shape_cast %59 : vector<16x16x128xf32> to vector<256x128xf32>
    %c3 = arith.constant 3 : index
    %c0_29 = arith.constant 0 : index
    %c0_30 = arith.constant 0 : index
    %61 = vector.load %arg4[%c3, %c0_29, %c0_30] : memref<9x128x128xf32, #tpu.memory_space<vmem>>, vector<1x128x128xf32>
    %62 = vector.shape_cast %61 : vector<1x128x128xf32> to vector<128x128xf32>
    %cst_31 = arith.constant dense<0.000000e+00> : vector<256x128xf32>
    %63 = tpu.matmul %60, %62, %cst_31 {dimension_numbers = #tpu.dot_dimension_numbers<[1], [0], [0], [1], [0, 0, 1, 1], [], []>} : vector<256x128xf32>, vector<128x128xf32>, vector<256x128xf32> -> vector<256x128xf32>
    %64 = arith.addf %53, %63 : vector<256x128xf32>
    %c383_i32_32 = arith.constant 383 : i32
    %65 = tpu.dynamic_rotate %57 by %c383_i32_32 dim 0 : vector<384x128xf32>, i32 -> vector<384x128xf32>
    %66 = vector.shape_cast %65 : vector<384x128xf32> to vector<16x24x128xf32>
    %67 = vector.extract_strided_slice %66 {offsets = [0, 0, 0], sizes = [16, 16, 128], strides = [1, 1, 1]} : vector<16x24x128xf32> to vector<16x16x128xf32>
    %68 = vector.shape_cast %67 : vector<16x16x128xf32> to vector<256x128xf32>
    %c4 = arith.constant 4 : index
    %c0_33 = arith.constant 0 : index
    %c0_34 = arith.constant 0 : index
    %69 = vector.load %arg4[%c4, %c0_33, %c0_34] : memref<9x128x128xf32, #tpu.memory_space<vmem>>, vector<1x128x128xf32>
    %70 = vector.shape_cast %69 : vector<1x128x128xf32> to vector<128x128xf32>
    %cst_35 = arith.constant dense<0.000000e+00> : vector<256x128xf32>
    %71 = tpu.matmul %68, %70, %cst_35 {dimension_numbers = #tpu.dot_dimension_numbers<[1], [0], [0], [1], [0, 0, 1, 1], [], []>} : vector<256x128xf32>, vector<128x128xf32>, vector<256x128xf32> -> vector<256x128xf32>
    %72 = arith.addf %64, %71 : vector<256x128xf32>
    %c382_i32_36 = arith.constant 382 : i32
    %73 = tpu.dynamic_rotate %57 by %c382_i32_36 dim 0 : vector<384x128xf32>, i32 -> vector<384x128xf32>
    %74 = vector.shape_cast %73 : vector<384x128xf32> to vector<16x24x128xf32>
    %75 = vector.extract_strided_slice %74 {offsets = [0, 0, 0], sizes = [16, 16, 128], strides = [1, 1, 1]} : vector<16x24x128xf32> to vector<16x16x128xf32>
    %76 = vector.shape_cast %75 : vector<16x16x128xf32> to vector<256x128xf32>
    %c5 = arith.constant 5 : index
    %c0_37 = arith.constant 0 : index
    %c0_38 = arith.constant 0 : index
    %77 = vector.load %arg4[%c5, %c0_37, %c0_38] : memref<9x128x128xf32, #tpu.memory_space<vmem>>, vector<1x128x128xf32>
    %78 = vector.shape_cast %77 : vector<1x128x128xf32> to vector<128x128xf32>
    %cst_39 = arith.constant dense<0.000000e+00> : vector<256x128xf32>
    %79 = tpu.matmul %76, %78, %cst_39 {dimension_numbers = #tpu.dot_dimension_numbers<[1], [0], [0], [1], [0, 0, 1, 1], [], []>} : vector<256x128xf32>, vector<128x128xf32>, vector<256x128xf32> -> vector<256x128xf32>
    %80 = arith.addf %72, %79 : vector<256x128xf32>
    %81 = arith.index_cast %9 : i32 to index
    %c2_40 = arith.constant 2 : index
    %c0_41 = arith.constant 0 : index
    %c0_42 = arith.constant 0 : index
    %82 = vector.load %arg7[%81, %c2_40, %c0_41, %c0_42] : memref<2x18x24x128xf32, #tpu.memory_space<vmem>>, vector<1x16x24x128xf32>
    %83 = vector.shape_cast %82 : vector<1x16x24x128xf32> to vector<16x24x128xf32>
    %84 = vector.shape_cast %83 : vector<16x24x128xf32> to vector<384x128xf32>
    %85 = vector.shape_cast %84 : vector<384x128xf32> to vector<16x24x128xf32>
    %86 = vector.extract_strided_slice %85 {offsets = [0, 0, 0], sizes = [16, 16, 128], strides = [1, 1, 1]} : vector<16x24x128xf32> to vector<16x16x128xf32>
    %87 = vector.shape_cast %86 : vector<16x16x128xf32> to vector<256x128xf32>
    %c6 = arith.constant 6 : index
    %c0_43 = arith.constant 0 : index
    %c0_44 = arith.constant 0 : index
    %88 = vector.load %arg4[%c6, %c0_43, %c0_44] : memref<9x128x128xf32, #tpu.memory_space<vmem>>, vector<1x128x128xf32>
    %89 = vector.shape_cast %88 : vector<1x128x128xf32> to vector<128x128xf32>
    %cst_45 = arith.constant dense<0.000000e+00> : vector<256x128xf32>
    %90 = tpu.matmul %87, %89, %cst_45 {dimension_numbers = #tpu.dot_dimension_numbers<[1], [0], [0], [1], [0, 0, 1, 1], [], []>} : vector<256x128xf32>, vector<128x128xf32>, vector<256x128xf32> -> vector<256x128xf32>
    %91 = arith.addf %80, %90 : vector<256x128xf32>
    %c383_i32_46 = arith.constant 383 : i32
    %92 = tpu.dynamic_rotate %84 by %c383_i32_46 dim 0 : vector<384x128xf32>, i32 -> vector<384x128xf32>
    %93 = vector.shape_cast %92 : vector<384x128xf32> to vector<16x24x128xf32>
    %94 = vector.extract_strided_slice %93 {offsets = [0, 0, 0], sizes = [16, 16, 128], strides = [1, 1, 1]} : vector<16x24x128xf32> to vector<16x16x128xf32>
    %95 = vector.shape_cast %94 : vector<16x16x128xf32> to vector<256x128xf32>
    %c7 = arith.constant 7 : index
    %c0_47 = arith.constant 0 : index
    %c0_48 = arith.constant 0 : index
    %96 = vector.load %arg4[%c7, %c0_47, %c0_48] : memref<9x128x128xf32, #tpu.memory_space<vmem>>, vector<1x128x128xf32>
    %97 = vector.shape_cast %96 : vector<1x128x128xf32> to vector<128x128xf32>
    %cst_49 = arith.constant dense<0.000000e+00> : vector<256x128xf32>
    %98 = tpu.matmul %95, %97, %cst_49 {dimension_numbers = #tpu.dot_dimension_numbers<[1], [0], [0], [1], [0, 0, 1, 1], [], []>} : vector<256x128xf32>, vector<128x128xf32>, vector<256x128xf32> -> vector<256x128xf32>
    %99 = arith.addf %91, %98 : vector<256x128xf32>
    %c382_i32_50 = arith.constant 382 : i32
    %100 = tpu.dynamic_rotate %84 by %c382_i32_50 dim 0 : vector<384x128xf32>, i32 -> vector<384x128xf32>
    %101 = vector.shape_cast %100 : vector<384x128xf32> to vector<16x24x128xf32>
    %102 = vector.extract_strided_slice %101 {offsets = [0, 0, 0], sizes = [16, 16, 128], strides = [1, 1, 1]} : vector<16x24x128xf32> to vector<16x16x128xf32>
    %103 = vector.shape_cast %102 : vector<16x16x128xf32> to vector<256x128xf32>
    %c8 = arith.constant 8 : index
    %c0_51 = arith.constant 0 : index
    %c0_52 = arith.constant 0 : index
    %104 = vector.load %arg4[%c8, %c0_51, %c0_52] : memref<9x128x128xf32, #tpu.memory_space<vmem>>, vector<1x128x128xf32>
    %105 = vector.shape_cast %104 : vector<1x128x128xf32> to vector<128x128xf32>
    %cst_53 = arith.constant dense<0.000000e+00> : vector<256x128xf32>
    %106 = tpu.matmul %103, %105, %cst_53 {dimension_numbers = #tpu.dot_dimension_numbers<[1], [0], [0], [1], [0, 0, 1, 1], [], []>} : vector<256x128xf32>, vector<128x128xf32>, vector<256x128xf32> -> vector<256x128xf32>
    %107 = arith.addf %99, %106 : vector<256x128xf32>
    %c0_54 = arith.constant 0 : index
    %c0_55 = arith.constant 0 : index
    %108 = vector.load %arg5[%c0_54, %c0_55] : memref<1x128xf32, #tpu.memory_space<vmem>>, vector<1x128xf32>
    %109 = vector.broadcast %108 : vector<1x128xf32> to vector<256x128xf32>
    %110 = arith.addf %107, %109 : vector<256x128xf32>
    %111 = vector.shape_cast %110 : vector<256x128xf32> to vector<16x16x128xf32>
    %c0_56 = arith.constant 0 : index
    %c0_57 = arith.constant 0 : index
    %c0_58 = arith.constant 0 : index
    %c0_59 = arith.constant 0 : index
    %112 = vector.load %arg6[%c0_56, %c0_57, %c0_58, %c0_59] : memref<1x16x16x128xf32, #tpu.memory_space<vmem>>, vector<1x16x16x128xf32>
    %113 = vector.shape_cast %112 : vector<1x16x16x128xf32> to vector<16x16x128xf32>
    %114 = vector.shape_cast %111 : vector<16x16x128xf32> to vector<1x16x16x128xf32>
    tpu.vector_store %arg6[%c0_56, %c0_57, %c0_58, %c0_59], %114 {strides = array<i32>} : memref<1x16x16x128xf32, #tpu.memory_space<vmem>>, vector<1x16x16x128xf32>,
    return
  }
  func.func @transform_1(%arg0: i32, %arg1: i32, %arg2: i32) -> (i32, i32, i32) {
    %c0_i32 = arith.constant 0 : i32
    %c0_i32_0 = arith.constant 0 : i32
    %c0_i32_1 = arith.constant 0 : i32
    %c0_i32_2 = arith.constant 0 : i32
    return %c0_i32, %c0_i32_0, %c0_i32_1 : i32, i32, i32
  }
  func.func @transform_2(%arg0: i32, %arg1: i32, %arg2: i32) -> (i32, i32) {
    %c0_i32 = arith.constant 0 : i32
    %c0_i32_0 = arith.constant 0 : i32
    %c0_i32_1 = arith.constant 0 : i32
    return %c0_i32, %c0_i32_0 : i32, i32
  }
  func.func @transform_3(%arg0: i32, %arg1: i32, %arg2: i32) -> (i32, i32, i32, i32) {
    %c1_i32 = arith.constant 1 : i32
    %0 = arith.muli %arg1, %c1_i32 : i32
    %1 = arith.addi %0, %arg2 : i32
    %c0_i32 = arith.constant 0 : i32
    %c0_i32_0 = arith.constant 0 : i32
    %c0_i32_1 = arith.constant 0 : i32
    return %arg0, %1, %c0_i32, %c0_i32_0 : i32, i32, i32, i32
  }
}

</mosaic_0001>

<llo_original>
// kernel: tpu_custom_call.1
$region0: #{tpu_custom_call.1}
  #allocation0 [shape = 'u32[]', space=smem, size = 0x4, offset = 0x4, fixed_abs, tag = 'smem constant byte address 0x4 - core index']
  #allocation1 [shape = 'u32[144,128]{1,0:T(1,128)}', space=vmem, size = 0x12000, scoped, tag = 'internal scratch']
  #allocation2 [shape = 'f32[2,18,24,128]{3,2,1,0:T(8,128)}', space=vmem, size = 0x6c000, scoped, tag = 'scratch operand']
  #allocation3 [shape = 's32[2]{0}', space=sflag, size = 0x8, scoped, tag = 'scratch operand']
  #allocation8 [shape = 's32[]', space=sflag, size = 0x4, offset = 0, fixed_abs, tag = 'sflag constant byte address 0x0 - dummy sync flag']
  #allocation9 [shape = 's32[]', space=sflag, size = 0x4, offset = 0, fixed_abs, tag = 'sflag constant byte address 0x0 - dummy sync flag']
  #allocation10 [shape = 'u32[]', space=smem, size = 0x4, offset = 0x44, fixed_abs, tag = 'smem constant byte address 0x44 - assertion arg 0']
  #allocation11 [shape = 'u32[]', space=smem, size = 0x4, offset = 0x48, fixed_abs, tag = 'smem constant byte address 0x48 - assertion arg 1']
  #allocation12 [shape = 's32[]', space=sflag, size = 0x4, offset = 0, fixed_abs, tag = 'sflag constant byte address 0x0 - dummy sync flag']
  #allocation13 [shape = 's32[]', space=sflag, size = 0x4, offset = 0, fixed_abs, tag = 'sflag constant byte address 0x0 - dummy sync flag']
  %s0 = inlined_call_operand.hbm [shape: f32[2,18,24,128], index: 0, kind: input, shape index: {}]
  %s1 = inlined_call_operand.hbm [shape: f32[9,128,128], index: 1, kind: input, shape index: {}]
  %s2 = inlined_call_operand.vmem [shape: f32[1,128], index: 2, kind: input, shape index: {}]
  %s3 = inlined_call_operand.hbm [shape: f32[2,16,16,128], index: 3, kind: output, shape index: {}]
  %s4 = sld [smem:[#allocation0]]
  $region61: #{tpu_custom_call.1} parent=0
    _
  %s6 = ssub.s32 1, %s4
  %s7 = scalar_select 0, %s6, %s4
  $region1: #{tpu_custom_call.1} parent=0
    #allocation4 [shape = 'u8[589824]{0}', space=vmem, size = 0x90000, scoped, tag = 'input window, operand 1, single buffered']
    #allocation5 [shape = 's32[2]{0}', space=sflag, size = 0x8, scoped, tag = 'scoped memory for tpu_custom_call.1']
    #allocation6 [shape = 's32[2]{0}', space=sflag, size = 0x8, scoped, tag = 'scoped memory for tpu_custom_call.1']
    #allocation7 [shape = 'u8[262144]{0}', space=vmem, size = 0x40000, scoped, tag = 'output window, operand 0']
    %8 = vsyncpa [#allocation5], 0
    %9 = vsyncpa [#allocation6], 0
    %s10 = scalar_lea.sflag [#allocation6], 1
    %11 = vsyncpa %s10, 0
    loop: start=0, step=1, limit=4
    $region2: #{tpu_custom_call.1} parent=1 // loop_pre_header
      _
    $region3: #{tpu_custom_call.1} parent=1 // loop_header
      %s13 = sphi 0, %s17
      %p14 = scmp.ge.s32.totalorder %s13, 4
      %s20 = sphi 0, %s39
      %s21 = sphi 0, %s35
      %s22 = sphi 0, %s31
      %s23 = sphi 0, %s20
      %s24 = sphi 0, %s21
      %s25 = sphi 0, %s22
      %s26 = sphi 0, %s23
      %s27 = sphi 0, %s24
      %s28 = sphi 0, %s25
      %s40 = sphi 0, %s40
      %s42 = sphi 0, %s40
      %s43 = sphi 0, %s42
      %s57 = sphi 0, %s43
      %s61 = sphi 0, %s61
      %s63 = sphi 0, %s61
      %s64 = sphi 0, %s63
      %s78 = sphi 0, %s64
      %s88 = sphi 0, %s90
      %s91 = sphi 0, %s88
      %s92 = sphi 0, %s91
      %s108 = sphi 0, %s92
    $region4: #{tpu_custom_call.1} parent=1 // loop_header_branch
      %16 = sbr.rel (%p14) target = $region8
    $region5: #{tpu_custom_call.1} parent=1 // loop_body
      %s18 = ssub.s32 %s13, 1
      %s19 = ssub.s32 %s13, 2
      %s29 = sadd.s32 1, %s22
      %p30 = scmp.ge.s32.totalorder %s29, 1
      %s31 = scalar_select %p30, 0, %s29
      %s32 = sadd.s32 1, %s21
      %s33 = scalar_select %p30, %s32, %s21
      %p34 = scmp.ge.s32.totalorder %s33, 1
      %s35 = scalar_select %p34, 0, %s33
      %s36 = sadd.s32 1, %s20
      %s37 = scalar_select %p34, %s36, %s20
      %p38 = scmp.ge.s32.totalorder %s37, 2
      %s39 = scalar_select %p38, 0, %s37
      %s41 = sadd.s32 %s40, 1
      %p44 = scmp.eq.s32.totalorder %s13, 1
      %p45 = scmp.ne.s32.totalorder %s40, %s42
      %p46 = scmp.eq.s32.totalorder %s13, 0
      %p47 = por %p45, %p46
      %p48 = scmp.ne.s32.totalorder %s40, %s42
      %p49 = scmp.eq.s32.totalorder %s18, 1
      %p50 = por %p48, %p49
      %p51 = scmp.ne.s32.totalorder %s42, %s43
      %p52 = scmp.eq.s32.totalorder %s18, 0
      %p53 = por %p51, %p52
      %p54 = scmp.ne.s32.totalorder %s42, %s43
      %p55 = scmp.eq.s32.totalorder %s19, 1
      %p56 = por %p54, %p55
      %p58 = scmp.ne.s32.totalorder %s43, %s57
      %p59 = scmp.eq.s32.totalorder %s19, 0
      %p60 = por %p58, %p59
      %s62 = sadd.s32 %s61, 1
      %p65 = scmp.eq.s32.totalorder %s13, 1
      %p66 = scmp.ne.s32.totalorder %s61, %s63
      %p67 = scmp.eq.s32.totalorder %s13, 0
      %p68 = por %p66, %p67
      %p69 = scmp.ne.s32.totalorder %s61, %s63
      %p70 = scmp.eq.s32.totalorder %s18, 1
      %p71 = por %p69, %p70
      %p72 = scmp.ne.s32.totalorder %s63, %s64
      %p73 = scmp.eq.s32.totalorder %s18, 0
      %p74 = por %p72, %p73
      %p75 = scmp.ne.s32.totalorder %s63, %s64
      %p76 = scmp.eq.s32.totalorder %s19, 1
      %p77 = por %p75, %p76
      %p79 = scmp.ne.s32.totalorder %s64, %s78
      %p80 = scmp.eq.s32.totalorder %s19, 0
      %p81 = por %p79, %p80
      %s82 = sadd.s32 %s21, %s22
      %s83 = sadd.s32 %s35, %s31
      %s84 = ssub.s32 %s20, %s39
      %s85 = ssub.s32 %s82, %s83
      %s86 = sor.u32 %s84, %s85
      %p87 = scmp.eq.s32.totalorder %s86, 0
      %s89 = sadd.s32 %s88, 1
      %s90 = scalar_select %p87, %s88, %s89
      %p93 = pneg %p87
      %p94 = scmp.eq.s32.totalorder %s13, 1
      %p95 = por %p93, %p94
      %p96 = scmp.ne.s32.totalorder %s88, %s91
      %p97 = scmp.eq.s32.totalorder %s13, 0
      %p98 = por %p96, %p97
      %p99 = scmp.ne.s32.totalorder %s88, %s91
      %p100 = scmp.eq.s32.totalorder %s18, 1
      %p101 = por %p99, %p100
      %p102 = scmp.ne.s32.totalorder %s91, %s92
      %p103 = scmp.eq.s32.totalorder %s18, 0
      %p104 = por %p102, %p103
      %p105 = scmp.ne.s32.totalorder %s91, %s92
      %p106 = scmp.eq.s32.totalorder %s19, 1
      %p107 = por %p105, %p106
      %p109 = scmp.ne.s32.totalorder %s92, %s108
      %p110 = scmp.eq.s32.totalorder %s19, 0
      %p111 = por %p109, %p110
      %p112 = scmp.le.s32.totalorder 1, %s13
      %p113 = scmp.lt.s32.totalorder %s13, 3
      %p114 = pnand %p112, %p113
      %p115 = pneg %p114
      // Predicated region
      $region9: #{tpu_custom_call.1} parent=5 // pred_check
        _
      $region10: #{tpu_custom_call.1} parent=5 // pred_check_branch
        %117 = sbr.rel (%p114) target = $region12
      $region11: #{tpu_custom_call.1} parent=5 // pred_region
        %s118 = ssub.s32 %s13, 1
        // Predicated region
        $region13: #{tpu_custom_call.1} parent=11 // pred_check
          %p119 = pneg %p53
        $region14: #{tpu_custom_call.1} parent=11 // pred_check_branch
          %121 = sbr.rel (%p119) target = $region16
        $region15: #{tpu_custom_call.1} parent=11 // pred_region
          %s123 = ssub.s32 18432, 18432
          %124 = vsyncadd [#allocation5], %s123
          %s125 = sshll.u32 [#allocation4], 4
          %s126 = int_to_ptr.vmem [resolvable:$true] %s125
          %131 = dma.hbm_to_vmem [thread:$0]  %s1, 18432, %s126, [#allocation5], 128, 128, 8
        $region16: #{tpu_custom_call.1} parent=11 // pred_fallthru
          _
        // Predicated region
        $region17: #{tpu_custom_call.1} parent=11 // pred_check
          %p132 = pneg %p74
        $region18: #{tpu_custom_call.1} parent=11 // pred_check_branch
          %134 = sbr.rel (%p132) target = $region20
        $region19: #{tpu_custom_call.1} parent=11 // pred_region
          _
        $region20: #{tpu_custom_call.1} parent=11 // pred_fallthru
          _
      $region12: #{tpu_custom_call.1} parent=5 // pred_fallthru
        _
      %p135 = scmp.lt.s32.totalorder %s13, 2
      // Predicated region
      $region21: #{tpu_custom_call.1} parent=5 // pred_check
        %p136 = pneg %p135
      $region22: #{tpu_custom_call.1} parent=5 // pred_check_branch
        %138 = sbr.rel (%p136) target = $region24
      $region23: #{tpu_custom_call.1} parent=5 // pred_region
        _
      $region24: #{tpu_custom_call.1} parent=5 // pred_fallthru
        _
      %p139 = scmp.le.s32.totalorder 1, %s13
      %p140 = scmp.lt.s32.totalorder %s13, 3
      %p141 = pnand %p139, %p140
      %p142 = pneg %p141
      // Predicated region
      $region25: #{tpu_custom_call.1} parent=5 // pred_check
        _
      $region26: #{tpu_custom_call.1} parent=5 // pred_check_branch
        %144 = sbr.rel (%p141) target = $region28
      $region27: #{tpu_custom_call.1} parent=5 // pred_region
        %s145 = ssub.s32 %s13, 1
        // Predicated region
        $region29: #{tpu_custom_call.1} parent=27 // pred_check
          %p146 = pneg %p53
        $region30: #{tpu_custom_call.1} parent=27 // pred_check_branch
          %148 = sbr.rel (%p146) target = $region32
        $region31: #{tpu_custom_call.1} parent=27 // pred_region
          %149 = dma.done [#allocation5], 18432
        $region32: #{tpu_custom_call.1} parent=27 // pred_fallthru
          _
        %p150 = pneg %p53
        %p151 = pneg %p50
        %p152 = pneg %p74
        %p153 = pneg %p71
        %p154 = pneg %p104
        %p155 = pneg %p101
        %s156 = sand.u32 %s91, 1
        %s157 = scalar_lea.sflag [#allocation6], %s156
        %s158 = sand.u32 %s91, 1
        %s159 = smul.addr %s158, 256
        %s160 = scalar_lea.vmem [#allocation7], %s159
        %s161 = sadd.s32 %s24, %s25
        %s162 = smul.u32 16, %s161
        %p163 = scmp.lt.s32.totalorder %s25, 0
        %s164 = ssub.s32 0, %s25
        %s165 = scalar_select %p163, %s164, %s25
        %s166 = sand.u32 %s165, 1
        %s167 = ssub.s32 0, %s166
        %s168 = scalar_select %p163, %s167, %s166
        %p169 = scmp.ne.s32.totalorder %s168, 0
        %p170 = scmp.lt.s32.totalorder %s168, 0
        %p171 = pnand %p170, %p169
        %p172 = pneg %p171
        %s173 = sadd.s32 %s168, 2
        %s174 = scalar_select %p172, %s173, %s168
        %s175 = sadd.s32 %s24, %s25
        %p176 = scmp.eq.s32.totalorder %s25, 0
        // Predicated region
        $region33: #{tpu_custom_call.1} parent=27 // pred_check
          %p177 = pneg %p176
        $region34: #{tpu_custom_call.1} parent=27 // pred_check_branch
          %179 = sbr.rel (%p177) target = $region36
        $region35: #{tpu_custom_call.1} parent=27 // pred_region
          %s180 = smul.u32 %s175, 16
          %s181 = smul.u32 %s180, 24
          %s182 = smul.u32 %s23, 432
          %s183 = sadd.s32 %s181, %s182
          %s184 = smul.addr %s183, 16
          %s185 = scalar_lea.hbm %s0, %s184
          %s186 = smul.u32 %s174, 432
          %s187 = scalar_lea.vmem [#allocation2], %s186
          %s188 = scalar_lea.sflag [#allocation3], %s174
          // Predicated region
          $region37: #{tpu_custom_call.1} parent=35 // pred_check
            _
          $region38: #{tpu_custom_call.1} parent=35 // pred_check_branch
            %190 = sbr.rel target = $region40
          $region39: #{tpu_custom_call.1} parent=35 // pred_region
            %191 = sst [smem:[#allocation10]] [#allocation9]
            %192 = sst [smem:[#allocation11]] [#allocation8]
          $region40: #{tpu_custom_call.1} parent=35 // pred_fallthru
            _
          %194 = shalt.err (0)
          %s196 = sshll.u32 %s187, 4
          %s197 = int_to_ptr.vmem [resolvable:$true] %s196
          %199 = dma.hbm_to_vmem [thread:$0]  %s185, 6912, %s197, %s188
        $region36: #{tpu_custom_call.1} parent=27 // pred_fallthru
          _
        %s200 = scalar_lea.sflag [#allocation3], %s174
        %s201 = smul.u32 18, 24
        %s202 = smul.u32 %s201, 1
        %s203 = sshll.u32 %s202, 4
        %204 = dma.done %s200, %s203
        %s205 = sadd.s32 %s25, 1
        %p206 = scmp.lt.s32.totalorder %s205, 1
        // Predicated region
        $region41: #{tpu_custom_call.1} parent=27 // pred_check
          %p207 = pneg %p206
        $region42: #{tpu_custom_call.1} parent=27 // pred_check_branch
          %209 = sbr.rel (%p207) target = $region44
        $region43: #{tpu_custom_call.1} parent=27 // pred_region
          %s210 = sadd.s32 %s175, 1
          %s211 = ssub.s32 1, %s174
          %s212 = smul.u32 %s210, 16
          %s213 = smul.u32 %s212, 24
          %s214 = smul.u32 %s23, 432
          %s215 = sadd.s32 %s213, %s214
          %s216 = smul.addr %s215, 16
          %s217 = scalar_lea.hbm %s0, %s216
          %s218 = smul.u32 %s211, 432
          %s219 = scalar_lea.vmem [#allocation2], %s218
          %s220 = scalar_lea.sflag [#allocation3], %s211
          // Predicated region
          $region45: #{tpu_custom_call.1} parent=43 // pred_check
            _
          $region46: #{tpu_custom_call.1} parent=43 // pred_check_branch
            %222 = sbr.rel target = $region48
          $region47: #{tpu_custom_call.1} parent=43 // pred_region
            %223 = sst [smem:[#allocation10]] [#allocation13]
            %224 = sst [smem:[#allocation11]] [#allocation12]
          $region48: #{tpu_custom_call.1} parent=43 // pred_fallthru
            _
          %226 = shalt.err (0)
          %s228 = sshll.u32 %s219, 4
          %s229 = int_to_ptr.vmem [resolvable:$true] %s228
          %231 = dma.hbm_to_vmem [thread:$0]  %s217, 6912, %s229, %s220
        $region44: #{tpu_custom_call.1} parent=27 // pred_fallthru
          _
        %s232 = smul.u32 %s174, 432
        %s233 = scalar_lea.vmem [#allocation2], %s232
        %v234 = vld [vmem:[%s233] sm:$0xff]
        %v235 = vld [vmem:[%s233 + $0x8] sm:$0xff]
        %v236 = vld [vmem:[%s233 + $0x10] sm:$0xff]
        %v237 = vld [vmem:[%s233 + $0x18] sm:$0xff]
        %v238 = vld [vmem:[%s233 + $0x20] sm:$0xff]
        %v239 = vld [vmem:[%s233 + $0x28] sm:$0xff]
        %v240 = vld [vmem:[%s233 + $0x30] sm:$0xff]
        %v241 = vld [vmem:[%s233 + $0x38] sm:$0xff]
        %v242 = vld [vmem:[%s233 + $0x40] sm:$0xff]
        %v243 = vld [vmem:[%s233 + $0x48] sm:$0xff]
        %v244 = vld [vmem:[%s233 + $0x50] sm:$0xff]
        %v245 = vld [vmem:[%s233 + $0x58] sm:$0xff]
        %v246 = vld [vmem:[%s233 + $0x60] sm:$0xff]
        %v247 = vld [vmem:[%s233 + $0x68] sm:$0xff]
        %v248 = vld [vmem:[%s233 + $0x70] sm:$0xff]
        %v249 = vld [vmem:[%s233 + $0x78] sm:$0xff]
        %v250 = vld [vmem:[%s233 + $0x80] sm:$0xff]
        %v251 = vld [vmem:[%s233 + $0x88] sm:$0xff]
        %v252 = vld [vmem:[%s233 + $0x90] sm:$0xff]
        %v253 = vld [vmem:[%s233 + $0x98] sm:$0xff]
        %v254 = vld [vmem:[%s233 + $0xa0] sm:$0xff]
        %v255 = vld [vmem:[%s233 + $0xa8] sm:$0xff]
        %v256 = vld [vmem:[%s233 + $0xb0] sm:$0xff]
        %v257 = vld [vmem:[%s233 + $0xb8] sm:$0xff]
        %v258 = vld [vmem:[%s233 + $0xc0] sm:$0xff]
        %v259 = vld [vmem:[%s233 + $0xc8] sm:$0xff]
        %v260 = vld [vmem:[%s233 + $0xd0] sm:$0xff]
        %v261 = vld [vmem:[%s233 + $0xd8] sm:$0xff]
        %v262 = vld [vmem:[%s233 + $0xe0] sm:$0xff]
        %v263 = vld [vmem:[%s233 + $0xe8] sm:$0xff]
        %v264 = vld [vmem:[%s233 + $0xf0] sm:$0xff]
        %v265 = vld [vmem:[%s233 + $0xf8] sm:$0xff]
        %v266 = vld [vmem:[%s233 + $0x100] sm:$0xff]
        %v267 = vld [vmem:[%s233 + $0x108] sm:$0xff]
        %v268 = vld [vmem:[%s233 + $0x110] sm:$0xff]
        %v269 = vld [vmem:[%s233 + $0x118] sm:$0xff]
        %v270 = vld [vmem:[%s233 + $0x120] sm:$0xff]
        %v271 = vld [vmem:[%s233 + $0x128] sm:$0xff]
        %v272 = vld [vmem:[%s233 + $0x130] sm:$0xff]
        %v273 = vld [vmem:[%s233 + $0x138] sm:$0xff]
        %v274 = vld [vmem:[%s233 + $0x140] sm:$0xff]
        %v275 = vld [vmem:[%s233 + $0x148] sm:$0xff]
        %v276 = vld [vmem:[%s233 + $0x150] sm:$0xff]
        %v277 = vld [vmem:[%s233 + $0x158] sm:$0xff]
        %v278 = vld [vmem:[%s233 + $0x160] sm:$0xff]
        %v279 = vld [vmem:[%s233 + $0x168] sm:$0xff]
        %v280 = vld [vmem:[%s233 + $0x170] sm:$0xff]
        %v281 = vld [vmem:[%s233 + $0x178] sm:$0xff]
        %v282 = vld [vmem:[#allocation4] sm:$0xff]
        %v283 = vld [vmem:[#allocation4 + $0x8] sm:$0xff]
        %v284 = vld [vmem:[#allocation4 + $0x10] sm:$0xff]
        %v285 = vld [vmem:[#allocation4 + $0x18] sm:$0xff]
        %v286 = vld [vmem:[#allocation4 + $0x20] sm:$0xff]
        %v287 = vld [vmem:[#allocation4 + $0x28] sm:$0xff]
        %v288 = vld [vmem:[#allocation4 + $0x30] sm:$0xff]
        %v289 = vld [vmem:[#allocation4 + $0x38] sm:$0xff]
        %v290 = vld [vmem:[#allocation4 + $0x40] sm:$0xff]
        %v291 = vld [vmem:[#allocation4 + $0x48] sm:$0xff]
        %v292 = vld [vmem:[#allocation4 + $0x50] sm:$0xff]
        %v293 = vld [vmem:[#allocation4 + $0x58] sm:$0xff]
        %v294 = vld [vmem:[#allocation4 + $0x60] sm:$0xff]
        %v295 = vld [vmem:[#allocation4 + $0x68] sm:$0xff]
        %v296 = vld [vmem:[#allocation4 + $0x70] sm:$0xff]
        %v297 = vld [vmem:[#allocation4 + $0x78] sm:$0xff]
        %v298 = vrot.slane %v234, 1
        %v299 = vrot.slane %v235, 1
        %v300 = vrot.slane %v236, 1
        %v301 = vrot.slane %v237, 1
        %v302 = vrot.slane %v238, 1
        %v303 = vrot.slane %v239, 1
        %v304 = vrot.slane %v240, 1
        %v305 = vrot.slane %v241, 1
        %v306 = vrot.slane %v242, 1
        %v307 = vrot.slane %v243, 1
        %v308 = vrot.slane %v244, 1
        %v309 = vrot.slane %v245, 1
        %v310 = vrot.slane %v246, 1
        %v311 = vrot.slane %v247, 1
        %v312 = vrot.slane %v248, 1
        %v313 = vrot.slane %v249, 1
        %v314 = vrot.slane %v250, 1
        %v315 = vrot.slane %v251, 1
        %v316 = vrot.slane %v252, 1
        %v317 = vrot.slane %v253, 1
        %v318 = vrot.slane %v254, 1
        %v319 = vrot.slane %v255, 1
        %v320 = vrot.slane %v256, 1
        %v321 = vrot.slane %v257, 1
        %v322 = vrot.slane %v258, 1
        %v323 = vrot.slane %v259, 1
        %v324 = vrot.slane %v260, 1
        %v325 = vrot.slane %v261, 1
        %v326 = vrot.slane %v262, 1
        %v327 = vrot.slane %v263, 1
        %v328 = vrot.slane %v264, 1
        %v329 = vrot.slane %v265, 1
        %v330 = vrot.slane %v266, 1
        %v331 = vrot.slane %v267, 1
        %v332 = vrot.slane %v268, 1
        %v333 = vrot.slane %v269, 1
        %v334 = vrot.slane %v270, 1
        %v335 = vrot.slane %v271, 1
        %v336 = vrot.slane %v272, 1
        %v337 = vrot.slane %v273, 1
        %v338 = vrot.slane %v274, 1
        %v339 = vrot.slane %v275, 1
        %v340 = vrot.slane %v276, 1
        %v341 = vrot.slane %v277, 1
        %v342 = vrot.slane %v278, 1
        %v343 = vrot.slane %v279, 1
        %v344 = vrot.slane %v280, 1
        %v345 = vrot.slane %v281, 1
        %v346 = vlaneseq
        %v347 = vshrl.u32 %v346, 7
        %vm348 = vcmp.lt.s32.totalorder %v347, 7
        %v349 = vsel %vm348, %v344, %v345
        %v350 = vsel %vm348, %v343, %v344
        %v351 = vsel %vm348, %v341, %v342
        %v352 = vsel %vm348, %v340, %v341
        %v353 = vsel %vm348, %v338, %v339
        %v354 = vsel %vm348, %v337, %v338
        %v355 = vsel %vm348, %v335, %v336
        %v356 = vsel %vm348, %v334, %v335
        %v357 = vsel %vm348, %v332, %v333
        %v358 = vsel %vm348, %v331, %v332
        %v359 = vsel %vm348, %v329, %v330
        %v360 = vsel %vm348, %v328, %v329
        %v361 = vsel %vm348, %v326, %v327
        %v362 = vsel %vm348, %v325, %v326
        %v363 = vsel %vm348, %v323, %v324
        %v364 = vsel %vm348, %v322, %v323
        %v365 = vsel %vm348, %v320, %v321
        %v366 = vsel %vm348, %v319, %v320
        %v367 = vsel %vm348, %v317, %v318
        %v368 = vsel %vm348, %v316, %v317
        %v369 = vsel %vm348, %v314, %v315
        %v370 = vsel %vm348, %v313, %v314
        %v371 = vsel %vm348, %v311, %v312
        %v372 = vsel %vm348, %v310, %v311
        %v373 = vsel %vm348, %v308, %v309
        %v374 = vsel %vm348, %v307, %v308
        %v375 = vsel %vm348, %v305, %v306
        %v376 = vsel %vm348, %v304, %v305
        %v377 = vsel %vm348, %v302, %v303
        %v378 = vsel %vm348, %v301, %v302
        %v379 = vsel %vm348, %v299, %v300
        %v380 = vsel %vm348, %v298, %v299
        %s381 = scalar_lea.vmem [#allocation4], 128
        %v382 = vld [vmem:[%s381] sm:$0xff]
        %v383 = vld [vmem:[%s381 + $0x8] sm:$0xff]
        %v384 = vld [vmem:[%s381 + $0x10] sm:$0xff]
        %v385 = vld [vmem:[%s381 + $0x18] sm:$0xff]
        %v386 = vld [vmem:[%s381 + $0x20] sm:$0xff]
        %v387 = vld [vmem:[%s381 + $0x28] sm:$0xff]
        %v388 = vld [vmem:[%s381 + $0x30] sm:$0xff]
        %v389 = vld [vmem:[%s381 + $0x38] sm:$0xff]
        %v390 = vld [vmem:[%s381 + $0x40] sm:$0xff]
        %v391 = vld [vmem:[%s381 + $0x48] sm:$0xff]
        %v392 = vld [vmem:[%s381 + $0x50] sm:$0xff]
        %v393 = vld [vmem:[%s381 + $0x58] sm:$0xff]
        %v394 = vld [vmem:[%s381 + $0x60] sm:$0xff]
        %v395 = vld [vmem:[%s381 + $0x68] sm:$0xff]
        %v396 = vld [vmem:[%s381 + $0x70] sm:$0xff]
        %v397 = vld [vmem:[%s381 + $0x78] sm:$0xff]
        %398 = vmatprep.subr.mxu0 0.0
        %399 = vmatpush1.msra.mxu0 %v397
        %400 = vmatprep.subr.mxu0 0.0
        %401 = vmatpush1.msra.mxu0 %v396
        %402 = vmatprep.subr.mxu0 0.0
        %403 = vmatpush1.msra.mxu0 %v395
        %404 = vmatprep.subr.mxu0 0.0
        %405 = vmatpush1.msra.mxu0 %v394
        %406 = vmatprep.subr.mxu0 0.0
        %407 = vmatpush1.msra.mxu0 %v393
        %408 = vmatprep.subr.mxu0 0.0
        %409 = vmatpush1.msra.mxu0 %v392
        %410 = vmatprep.subr.mxu0 0.0
        %411 = vmatpush1.msra.mxu0 %v391
        %412 = vmatprep.subr.mxu0 0.0
        %413 = vmatpush1.msra.mxu0 %v390
        %414 = vmatprep.subr.mxu0 0.0
        %415 = vmatpush1.msra.mxu0 %v389
        %416 = vmatprep.subr.mxu0 0.0
        %417 = vmatpush1.msra.mxu0 %v388
        %418 = vmatprep.subr.mxu0 0.0
        %419 = vmatpush1.msra.mxu0 %v387
        %420 = vmatprep.subr.mxu0 0.0
        %421 = vmatpush1.msra.mxu0 %v386
        %422 = vmatprep.subr.mxu0 0.0
        %423 = vmatpush1.msra.mxu0 %v385
        %424 = vmatprep.subr.mxu0 0.0
        %425 = vmatpush1.msra.mxu0 %v384
        %426 = vmatprep.subr.mxu0 0.0
        %427 = vmatpush1.msra.mxu0 %v383
        %428 = vmatprep.subr.mxu0 0.0
        %429 = vmatpush1.msra.mxu0 %v382
        %430 = vmatprep.subr.mxu0 0.0
        %431 = vmatpush2.msra.mxu0 0.0
        %432 = vmatprep.subr.mxu0 0.0
        %433 = vmatpush2.msra.mxu0 0.0
        %434 = vmatprep.subr.mxu0 0.0
        %435 = vmatpush2.msra.mxu0 0.0
        %436 = vmatprep.subr.mxu0 0.0
        %437 = vmatpush2.msra.mxu0 0.0
        %438 = vmatprep.subr.mxu0 0.0
        %439 = vmatpush2.msra.mxu0 0.0
        %440 = vmatprep.subr.mxu0 0.0
        %441 = vmatpush2.msra.mxu0 0.0
        %442 = vmatprep.subr.mxu0 0.0
        %443 = vmatpush2.msra.mxu0 0.0
        %444 = vmatprep.subr.mxu0 0.0
        %445 = vmatpush2.msra.mxu0 0.0
        %446 = vmatprep.subr.mxu0 0.0
        %447 = vmatpush2.msra.mxu0 0.0
        %448 = vmatprep.subr.mxu0 0.0
        %449 = vmatpush2.msra.mxu0 0.0
        %450 = vmatprep.subr.mxu0 0.0
        %451 = vmatpush2.msra.mxu0 0.0
        %452 = vmatprep.subr.mxu0 0.0
        %453 = vmatpush2.msra.mxu0 0.0
        %454 = vmatprep.subr.mxu0 0.0
        %455 = vmatpush2.msra.mxu0 0.0
        %456 = vmatprep.subr.mxu0 0.0
        %457 = vmatpush2.msra.mxu0 0.0
        %458 = vmatprep.subr.mxu0 0.0
        %459 = vmatpush2.msra.mxu0 0.0
        %460 = vmatprep.subr.mxu0 0.0
        %461 = vmatpush2.msra.mxu0 0.0
        %462 = vmatprep.mubr.f32.mxu0 0.0
        %463 = vmatmul.mubr.f32.gmra.mxu0 %v380
        %v464 = vpop.f32.mrf.mxu0
        %v465 = vadd.f32 0.0, %v464
        %v466 = vpop.f32.mrf.mxu0
        %467 = vmatprep.mubr.f32.mxu0 0.0
        %468 = vmatmul.mubr.f32.gmra.mxu0 %v379
        %v469 = vpop.f32.mrf.mxu0
        %v470 = vadd.f32 0.0, %v469
        %v471 = vpop.f32.mrf.mxu0
        %472 = vmatprep.mubr.f32.mxu0 0.0
        %473 = vmatmul.mubr.f32.gmra.mxu0 %v378
        %v474 = vpop.f32.mrf.mxu0
        %v475 = vadd.f32 0.0, %v474
        %v476 = vpop.f32.mrf.mxu0
        %477 = vmatprep.mubr.f32.mxu0 0.0
        %478 = vmatmul.mubr.f32.gmra.mxu0 %v377
        %v479 = vpop.f32.mrf.mxu0
        %v480 = vadd.f32 0.0, %v479
        %v481 = vpop.f32.mrf.mxu0
        %482 = vmatprep.mubr.f32.mxu0 0.0
        %483 = vmatmul.mubr.f32.gmra.mxu0 %v376
        %v484 = vpop.f32.mrf.mxu0
        %v485 = vadd.f32 0.0, %v484
        %v486 = vpop.f32.mrf.mxu0
        %487 = vmatprep.mubr.f32.mxu0 0.0
        %488 = vmatmul.mubr.f32.gmra.mxu0 %v375
        %v489 = vpop.f32.mrf.mxu0
        %v490 = vadd.f32 0.0, %v489
        %v491 = vpop.f32.mrf.mxu0
        %492 = vmatprep.mubr.f32.mxu0 0.0
        %493 = vmatmul.mubr.f32.gmra.mxu0 %v374
        %v494 = vpop.f32.mrf.mxu0
        %v495 = vadd.f32 0.0, %v494
        %v496 = vpop.f32.mrf.mxu0
        %497 = vmatprep.mubr.f32.mxu0 0.0
        %498 = vmatmul.mubr.f32.gmra.mxu0 %v373
        %v499 = vpop.f32.mrf.mxu0
        %v500 = vadd.f32 0.0, %v499
        %v501 = vpop.f32.mrf.mxu0
        %502 = vmatprep.mubr.f32.mxu0 0.0
        %503 = vmatmul.mubr.f32.gmra.mxu0 %v372
        %v504 = vpop.f32.mrf.mxu0
        %v505 = vadd.f32 0.0, %v504
        %v506 = vpop.f32.mrf.mxu0
        %507 = vmatprep.mubr.f32.mxu0 0.0
        %508 = vmatmul.mubr.f32.gmra.mxu0 %v371
        %v509 = vpop.f32.mrf.mxu0
        %v510 = vadd.f32 0.0, %v509
        %v511 = vpop.f32.mrf.mxu0
        %512 = vmatprep.mubr.f32.mxu0 0.0
        %513 = vmatmul.mubr.f32.gmra.mxu0 %v370
        %v514 = vpop.f32.mrf.mxu0
        %v515 = vadd.f32 0.0, %v514
        %v516 = vpop.f32.mrf.mxu0
        %517 = vmatprep.mubr.f32.mxu0 0.0
        %518 = vmatmul.mubr.f32.gmra.mxu0 %v369
        %v519 = vpop.f32.mrf.mxu0
        %v520 = vadd.f32 0.0, %v519
        %v521 = vpop.f32.mrf.mxu0
        %522 = vmatprep.mubr.f32.mxu0 0.0
        %523 = vmatmul.mubr.f32.gmra.mxu0 %v368
        %v524 = vpop.f32.mrf.mxu0
        %v525 = vadd.f32 0.0, %v524
        %v526 = vpop.f32.mrf.mxu0
        %527 = vmatprep.mubr.f32.mxu0 0.0
        %528 = vmatmul.mubr.f32.gmra.mxu0 %v367
        %v529 = vpop.f32.mrf.mxu0
        %v530 = vadd.f32 0.0, %v529
        %v531 = vpop.f32.mrf.mxu0
        %532 = vmatprep.mubr.f32.mxu0 0.0
        %533 = vmatmul.mubr.f32.gmra.mxu0 %v366
        %v534 = vpop.f32.mrf.mxu0
        %v535 = vadd.f32 0.0, %v534
        %v536 = vpop.f32.mrf.mxu0
        %537 = vmatprep.mubr.f32.mxu0 0.0
        %538 = vmatmul.mubr.f32.gmra.mxu0 %v365
        %v539 = vpop.f32.mrf.mxu0
        %v540 = vadd.f32 0.0, %v539
        %v541 = vpop.f32.mrf.mxu0
        %542 = vmatprep.mubr.f32.mxu0 0.0
        %543 = vmatmul.mubr.f32.gmra.mxu0 %v364
        %v544 = vpop.f32.mrf.mxu0
        %v545 = vadd.f32 0.0, %v544
        %v546 = vpop.f32.mrf.mxu0
        %547 = vmatprep.mubr.f32.mxu0 0.0
        %548 = vmatmul.mubr.f32.gmra.mxu0 %v363
        %v549 = vpop.f32.mrf.mxu0
        %v550 = vadd.f32 0.0, %v549
        %v551 = vpop.f32.mrf.mxu0
        %552 = vmatprep.mubr.f32.mxu0 0.0
        %553 = vmatmul.mubr.f32.gmra.mxu0 %v362
        %v554 = vpop.f32.mrf.mxu0
        %v555 = vadd.f32 0.0, %v554
        %v556 = vpop.f32.mrf.mxu0
        %557 = vmatprep.mubr.f32.mxu0 0.0
        %558 = vmatmul.mubr.f32.gmra.mxu0 %v361
        %v559 = vpop.f32.mrf.mxu0
        %v560 = vadd.f32 0.0, %v559
        %v561 = vpop.f32.mrf.mxu0
        %562 = vmatprep.mubr.f32.mxu0 0.0
        %563 = vmatmul.mubr.f32.gmra.mxu0 %v360
        %v564 = vpop.f32.mrf.mxu0
        %v565 = vadd.f32 0.0, %v564
        %v566 = vpop.f32.mrf.mxu0
        %567 = vmatprep.mubr.f32.mxu0 0.0
        %568 = vmatmul.mubr.f32.gmra.mxu0 %v359
        %v569 = vpop.f32.mrf.mxu0
        %v570 = vadd.f32 0.0, %v569
        %v571 = vpop.f32.mrf.mxu0
        %572 = vmatprep.mubr.f32.mxu0 0.0
        %573 = vmatmul.mubr.f32.gmra.mxu0 %v358
        %v574 = vpop.f32.mrf.mxu0
        %v575 = vadd.f32 0.0, %v574
        %v576 = vpop.f32.mrf.mxu0
        %577 = vmatprep.mubr.f32.mxu0 0.0
        %578 = vmatmul.mubr.f32.gmra.mxu0 %v357
        %v579 = vpop.f32.mrf.mxu0
        %v580 = vadd.f32 0.0, %v579
        %v581 = vpop.f32.mrf.mxu0
        %582 = vmatprep.mubr.f32.mxu0 0.0
        %583 = vmatmul.mubr.f32.gmra.mxu0 %v356
        %v584 = vpop.f32.mrf.mxu0
        %v585 = vadd.f32 0.0, %v584
        %v586 = vpop.f32.mrf.mxu0
        %587 = vmatprep.mubr.f32.mxu0 0.0
        %588 = vmatmul.mubr.f32.gmra.mxu0 %v355
        %v589 = vpop.f32.mrf.mxu0
        %v590 = vadd.f32 0.0, %v589
        %v591 = vpop.f32.mrf.mxu0
        %592 = vmatprep.mubr.f32.mxu0 0.0
        %593 = vmatmul.mubr.f32.gmra.mxu0 %v354
        %v594 = vpop.f32.mrf.mxu0
        %v595 = vadd.f32 0.0, %v594
        %v596 = vpop.f32.mrf.mxu0
        %597 = vmatprep.mubr.f32.mxu0 0.0
        %598 = vmatmul.mubr.f32.gmra.mxu0 %v353
        %v599 = vpop.f32.mrf.mxu0
        %v600 = vadd.f32 0.0, %v599
        %v601 = vpop.f32.mrf.mxu0
        %602 = vmatprep.mubr.f32.mxu0 0.0
        %603 = vmatmul.mubr.f32.gmra.mxu0 %v352
        %v604 = vpop.f32.mrf.mxu0
        %v605 = vadd.f32 0.0, %v604
        %v606 = vpop.f32.mrf.mxu0
        %607 = vmatprep.mubr.f32.mxu0 0.0
        %608 = vmatmul.mubr.f32.gmra.mxu0 %v351
        %v609 = vpop.f32.mrf.mxu0
        %v610 = vadd.f32 0.0, %v609
        %v611 = vpop.f32.mrf.mxu0
        %612 = vmatprep.mubr.f32.mxu0 0.0
        %613 = vmatmul.mubr.f32.gmra.mxu0 %v350
        %v614 = vpop.f32.mrf.mxu0
        %v615 = vadd.f32 0.0, %v614
        %v616 = vpop.f32.mrf.mxu0
        %617 = vmatprep.mubr.f32.mxu0 0.0
        %618 = vmatmul.mubr.f32.gmra.mxu0 %v349
        %v619 = vpop.f32.mrf.mxu0
        %v620 = vadd.f32 0.0, %v619
        %v621 = vpop.f32.mrf.mxu0
        %622 = vdwg.mxu0
        %623 = vmatprep.subr.mxu0 0.0
        %624 = vmatpush1.msra.mxu0 %v297
        %625 = vmatprep.subr.mxu0 0.0
        %626 = vmatpush1.msra.mxu0 %v296
        %627 = vmatprep.subr.mxu0 0.0
        %628 = vmatpush1.msra.mxu0 %v295
        %629 = vmatprep.subr.mxu0 0.0
        %630 = vmatpush1.msra.mxu0 %v294
        %631 = vmatprep.subr.mxu0 0.0
        %632 = vmatpush1.msra.mxu0 %v293
        %633 = vmatprep.subr.mxu0 0.0
        %634 = vmatpush1.msra.mxu0 %v292
        %635 = vmatprep.subr.mxu0 0.0
        %636 = vmatpush1.msra.mxu0 %v291
        %637 = vmatprep.subr.mxu0 0.0
        %638 = vmatpush1.msra.mxu0 %v290
        %639 = vmatprep.subr.mxu0 0.0
        %640 = vmatpush1.msra.mxu0 %v289
        %641 = vmatprep.subr.mxu0 0.0
        %642 = vmatpush1.msra.mxu0 %v288
        %643 = vmatprep.subr.mxu0 0.0
        %644 = vmatpush1.msra.mxu0 %v287
        %645 = vmatprep.subr.mxu0 0.0
        %646 = vmatpush1.msra.mxu0 %v286
        %647 = vmatprep.subr.mxu0 0.0
        %648 = vmatpush1.msra.mxu0 %v285
        %649 = vmatprep.subr.mxu0 0.0
        %650 = vmatpush1.msra.mxu0 %v284
        %651 = vmatprep.subr.mxu0 0.0
        %652 = vmatpush1.msra.mxu0 %v283
        %653 = vmatprep.subr.mxu0 0.0
        %654 = vmatpush1.msra.mxu0 %v282
        %655 = vmatprep.subr.mxu0 0.0
        %656 = vmatpush2.msra.mxu0 0.0
        %657 = vmatprep.subr.mxu0 0.0
        %658 = vmatpush2.msra.mxu0 0.0
        %659 = vmatprep.subr.mxu0 0.0
        %660 = vmatpush2.msra.mxu0 0.0
        %661 = vmatprep.subr.mxu0 0.0
        %662 = vmatpush2.msra.mxu0 0.0
        %663 = vmatprep.subr.mxu0 0.0
        %664 = vmatpush2.msra.mxu0 0.0
        %665 = vmatprep.subr.mxu0 0.0
        %666 = vmatpush2.msra.mxu0 0.0
        %667 = vmatprep.subr.mxu0 0.0
        %668 = vmatpush2.msra.mxu0 0.0
        %669 = vmatprep.subr.mxu0 0.0
        %670 = vmatpush2.msra.mxu0 0.0
        %671 = vmatprep.subr.mxu0 0.0
        %672 = vmatpush2.msra.mxu0 0.0
        %673 = vmatprep.subr.mxu0 0.0
        %674 = vmatpush2.msra.mxu0 0.0
        %675 = vmatprep.subr.mxu0 0.0
        %676 = vmatpush2.msra.mxu0 0.0
        %677 = vmatprep.subr.mxu0 0.0
        %678 = vmatpush2.msra.mxu0 0.0
        %679 = vmatprep.subr.mxu0 0.0
        %680 = vmatpush2.msra.mxu0 0.0
        %681 = vmatprep.subr.mxu0 0.0
        %682 = vmatpush2.msra.mxu0 0.0
        %683 = vmatprep.subr.mxu0 0.0
        %684 = vmatpush2.msra.mxu0 0.0
        %685 = vmatprep.subr.mxu0 0.0
        %686 = vmatpush2.msra.mxu0 0.0
        %687 = vmatprep.mubr.f32.mxu0 0.0
        %688 = vmatmul.mubr.f32.gmra.mxu0 %v234
        %v689 = vpop.f32.mrf.mxu0
        %v690 = vadd.f32 %v465, %v689
        %v691 = vpop.f32.mrf.mxu0
        %692 = vmatprep.mubr.f32.mxu0 0.0
        %693 = vmatmul.mubr.f32.gmra.mxu0 %v235
        %v694 = vpop.f32.mrf.mxu0
        %v695 = vadd.f32 %v470, %v694
        %v696 = vpop.f32.mrf.mxu0
        %697 = vmatprep.mubr.f32.mxu0 0.0
        %698 = vmatmul.mubr.f32.gmra.mxu0 %v237
        %v699 = vpop.f32.mrf.mxu0
        %v700 = vadd.f32 %v475, %v699
        %v701 = vpop.f32.mrf.mxu0
        %702 = vmatprep.mubr.f32.mxu0 0.0
        %703 = vmatmul.mubr.f32.gmra.mxu0 %v238
        %v704 = vpop.f32.mrf.mxu0
        %v705 = vadd.f32 %v480, %v704
        %v706 = vpop.f32.mrf.mxu0
        %707 = vmatprep.mubr.f32.mxu0 0.0
        %708 = vmatmul.mubr.f32.gmra.mxu0 %v240
        %v709 = vpop.f32.mrf.mxu0
        %v710 = vadd.f32 %v485, %v709
        %v711 = vpop.f32.mrf.mxu0
        %712 = vmatprep.mubr.f32.mxu0 0.0
        %713 = vmatmul.mubr.f32.gmra.mxu0 %v241
        %v714 = vpop.f32.mrf.mxu0
        %v715 = vadd.f32 %v490, %v714
        %v716 = vpop.f32.mrf.mxu0
        %717 = vmatprep.mubr.f32.mxu0 0.0
        %718 = vmatmul.mubr.f32.gmra.mxu0 %v243
        %v719 = vpop.f32.mrf.mxu0
        %v720 = vadd.f32 %v495, %v719
        %v721 = vpop.f32.mrf.mxu0
        %722 = vmatprep.mubr.f32.mxu0 0.0
        %723 = vmatmul.mubr.f32.gmra.mxu0 %v244
        %v724 = vpop.f32.mrf.mxu0
        %v725 = vadd.f32 %v500, %v724
        %v726 = vpop.f32.mrf.mxu0
        %727 = vmatprep.mubr.f32.mxu0 0.0
        %728 = vmatmul.mubr.f32.gmra.mxu0 %v246
        %v729 = vpop.f32.mrf.mxu0
        %v730 = vadd.f32 %v505, %v729
        %v731 = vpop.f32.mrf.mxu0
        %732 = vmatprep.mubr.f32.mxu0 0.0
        %733 = vmatmul.mubr.f32.gmra.mxu0 %v247
        %v734 = vpop.f32.mrf.mxu0
        %v735 = vadd.f32 %v510, %v734
        %v736 = vpop.f32.mrf.mxu0
        %737 = vmatprep.mubr.f32.mxu0 0.0
        %738 = vmatmul.mubr.f32.gmra.mxu0 %v249
        %v739 = vpop.f32.mrf.mxu0
        %v740 = vadd.f32 %v515, %v739
        %v741 = vpop.f32.mrf.mxu0
        %742 = vmatprep.mubr.f32.mxu0 0.0
        %743 = vmatmul.mubr.f32.gmra.mxu0 %v250
        %v744 = vpop.f32.mrf.mxu0
        %v745 = vadd.f32 %v520, %v744
        %v746 = vpop.f32.mrf.mxu0
        %747 = vmatprep.mubr.f32.mxu0 0.0
        %748 = vmatmul.mubr.f32.gmra.mxu0 %v252
        %v749 = vpop.f32.mrf.mxu0
        %v750 = vadd.f32 %v525, %v749
        %v751 = vpop.f32.mrf.mxu0
        %752 = vmatprep.mubr.f32.mxu0 0.0
        %753 = vmatmul.mubr.f32.gmra.mxu0 %v253
        %v754 = vpop.f32.mrf.mxu0
        %v755 = vadd.f32 %v530, %v754
        %v756 = vpop.f32.mrf.mxu0
        %757 = vmatprep.mubr.f32.mxu0 0.0
        %758 = vmatmul.mubr.f32.gmra.mxu0 %v255
        %v759 = vpop.f32.mrf.mxu0
        %v760 = vadd.f32 %v535, %v759
        %v761 = vpop.f32.mrf.mxu0
        %762 = vmatprep.mubr.f32.mxu0 0.0
        %763 = vmatmul.mubr.f32.gmra.mxu0 %v256
        %v764 = vpop.f32.mrf.mxu0
        %v765 = vadd.f32 %v540, %v764
        %v766 = vpop.f32.mrf.mxu0
        %767 = vmatprep.mubr.f32.mxu0 0.0
        %768 = vmatmul.mubr.f32.gmra.mxu0 %v258
        %v769 = vpop.f32.mrf.mxu0
        %v770 = vadd.f32 %v545, %v769
        %v771 = vpop.f32.mrf.mxu0
        %772 = vmatprep.mubr.f32.mxu0 0.0
        %773 = vmatmul.mubr.f32.gmra.mxu0 %v259
        %v774 = vpop.f32.mrf.mxu0
        %v775 = vadd.f32 %v550, %v774
        %v776 = vpop.f32.mrf.mxu0
        %777 = vmatprep.mubr.f32.mxu0 0.0
        %778 = vmatmul.mubr.f32.gmra.mxu0 %v261
        %v779 = vpop.f32.mrf.mxu0
        %v780 = vadd.f32 %v555, %v779
        %v781 = vpop.f32.mrf.mxu0
        %782 = vmatprep.mubr.f32.mxu0 0.0
        %783 = vmatmul.mubr.f32.gmra.mxu0 %v262
        %v784 = vpop.f32.mrf.mxu0
        %v785 = vadd.f32 %v560, %v784
        %v786 = vpop.f32.mrf.mxu0
        %787 = vmatprep.mubr.f32.mxu0 0.0
        %788 = vmatmul.mubr.f32.gmra.mxu0 %v264
        %v789 = vpop.f32.mrf.mxu0
        %v790 = vadd.f32 %v565, %v789
        %v791 = vpop.f32.mrf.mxu0
        %792 = vmatprep.mubr.f32.mxu0 0.0
        %793 = vmatmul.mubr.f32.gmra.mxu0 %v265
        %v794 = vpop.f32.mrf.mxu0
        %v795 = vadd.f32 %v570, %v794
        %v796 = vpop.f32.mrf.mxu0
        %797 = vmatprep.mubr.f32.mxu0 0.0
        %798 = vmatmul.mubr.f32.gmra.mxu0 %v267
        %v799 = vpop.f32.mrf.mxu0
        %v800 = vadd.f32 %v575, %v799
        %v801 = vpop.f32.mrf.mxu0
        %802 = vmatprep.mubr.f32.mxu0 0.0
        %803 = vmatmul.mubr.f32.gmra.mxu0 %v268
        %v804 = vpop.f32.mrf.mxu0
        %v805 = vadd.f32 %v580, %v804
        %v806 = vpop.f32.mrf.mxu0
        %807 = vmatprep.mubr.f32.mxu0 0.0
        %808 = vmatmul.mubr.f32.gmra.mxu0 %v270
        %v809 = vpop.f32.mrf.mxu0
        %v810 = vadd.f32 %v585, %v809
        %v811 = vpop.f32.mrf.mxu0
        %812 = vmatprep.mubr.f32.mxu0 0.0
        %813 = vmatmul.mubr.f32.gmra.mxu0 %v271
        %v814 = vpop.f32.mrf.mxu0
        %v815 = vadd.f32 %v590, %v814
        %v816 = vpop.f32.mrf.mxu0
        %817 = vmatprep.mubr.f32.mxu0 0.0
        %818 = vmatmul.mubr.f32.gmra.mxu0 %v273
        %v819 = vpop.f32.mrf.mxu0
        %v820 = vadd.f32 %v595, %v819
        %v821 = vpop.f32.mrf.mxu0
        %822 = vmatprep.mubr.f32.mxu0 0.0
        %823 = vmatmul.mubr.f32.gmra.mxu0 %v274
        %v824 = vpop.f32.mrf.mxu0
        %v825 = vadd.f32 %v600, %v824
        %v826 = vpop.f32.mrf.mxu0
        %827 = vmatprep.mubr.f32.mxu0 0.0
        %828 = vmatmul.mubr.f32.gmra.mxu0 %v276
        %v829 = vpop.f32.mrf.mxu0
        %v830 = vadd.f32 %v605, %v829
        %v831 = vpop.f32.mrf.mxu0
        %832 = vmatprep.mubr.f32.mxu0 0.0
        %833 = vmatmul.mubr.f32.gmra.mxu0 %v277
        %v834 = vpop.f32.mrf.mxu0
        %v835 = vadd.f32 %v610, %v834
        %v836 = vpop.f32.mrf.mxu0
        %837 = vmatprep.mubr.f32.mxu0 0.0
        %838 = vmatmul.mubr.f32.gmra.mxu0 %v279
        %v839 = vpop.f32.mrf.mxu0
        %v840 = vadd.f32 %v615, %v839
        %v841 = vpop.f32.mrf.mxu0
        %842 = vmatprep.mubr.f32.mxu0 0.0
        %843 = vmatmul.mubr.f32.gmra.mxu0 %v280
        %v844 = vpop.f32.mrf.mxu0
        %v845 = vadd.f32 %v620, %v844
        %v846 = vpop.f32.mrf.mxu0
        %847 = vdwg.mxu0
        %v848 = vrot.slane %v234, 2
        %v849 = vrot.slane %v235, 2
        %v850 = vrot.slane %v236, 2
        %v851 = vrot.slane %v237, 2
        %v852 = vrot.slane %v238, 2
        %v853 = vrot.slane %v239, 2
        %v854 = vrot.slane %v240, 2
        %v855 = vrot.slane %v241, 2
        %v856 = vrot.slane %v242, 2
        %v857 = vrot.slane %v243, 2
        %v858 = vrot.slane %v244, 2
        %v859 = vrot.slane %v245, 2
        %v860 = vrot.slane %v246, 2
        %v861 = vrot.slane %v247, 2
        %v862 = vrot.slane %v248, 2
        %v863 = vrot.slane %v249, 2
        %v864 = vrot.slane %v250, 2
        %v865 = vrot.slane %v251, 2
        %v866 = vrot.slane %v252, 2
        %v867 = vrot.slane %v253, 2
        %v868 = vrot.slane %v254, 2
        %v869 = vrot.slane %v255, 2
        %v870 = vrot.slane %v256, 2
        %v871 = vrot.slane %v257, 2
        %v872 = vrot.slane %v258, 2
        %v873 = vrot.slane %v259, 2
        %v874 = vrot.slane %v260, 2
        %v875 = vrot.slane %v261, 2
        %v876 = vrot.slane %v262, 2
        %v877 = vrot.slane %v263, 2
        %v878 = vrot.slane %v264, 2
        %v879 = vrot.slane %v265, 2
        %v880 = vrot.slane %v266, 2
        %v881 = vrot.slane %v267, 2
        %v882 = vrot.slane %v268, 2
        %v883 = vrot.slane %v269, 2
        %v884 = vrot.slane %v270, 2
        %v885 = vrot.slane %v271, 2
        %v886 = vrot.slane %v272, 2
        %v887 = vrot.slane %v273, 2
        %v888 = vrot.slane %v274, 2
        %v889 = vrot.slane %v275, 2
        %v890 = vrot.slane %v276, 2
        %v891 = vrot.slane %v277, 2
        %v892 = vrot.slane %v278, 2
        %v893 = vrot.slane %v279, 2
        %v894 = vrot.slane %v280, 2
        %v895 = vrot.slane %v281, 2
        %vm896 = vcmp.lt.s32.totalorder %v347, 6
        %v897 = vsel %vm896, %v894, %v895
        %v898 = vsel %vm896, %v893, %v894
        %v899 = vsel %vm896, %v891, %v892
        %v900 = vsel %vm896, %v890, %v891
        %v901 = vsel %vm896, %v888, %v889
        %v902 = vsel %vm896, %v887, %v888
        %v903 = vsel %vm896, %v885, %v886
        %v904 = vsel %vm896, %v884, %v885
        %v905 = vsel %vm896, %v882, %v883
        %v906 = vsel %vm896, %v881, %v882
        %v907 = vsel %vm896, %v879, %v880
        %v908 = vsel %vm896, %v878, %v879
        %v909 = vsel %vm896, %v876, %v877
        %v910 = vsel %vm896, %v875, %v876
        %v911 = vsel %vm896, %v873, %v874
        %v912 = vsel %vm896, %v872, %v873
        %v913 = vsel %vm896, %v870, %v871
        %v914 = vsel %vm896, %v869, %v870
        %v915 = vsel %vm896, %v867, %v868
        %v916 = vsel %vm896, %v866, %v867
        %v917 = vsel %vm896, %v864, %v865
        %v918 = vsel %vm896, %v863, %v864
        %v919 = vsel %vm896, %v861, %v862
        %v920 = vsel %vm896, %v860, %v861
        %v921 = vsel %vm896, %v858, %v859
        %v922 = vsel %vm896, %v857, %v858
        %v923 = vsel %vm896, %v855, %v856
        %v924 = vsel %vm896, %v854, %v855
        %v925 = vsel %vm896, %v852, %v853
        %v926 = vsel %vm896, %v851, %v852
        %v927 = vsel %vm896, %v849, %v850
        %v928 = vsel %vm896, %v848, %v849
        %s929 = scalar_lea.vmem [#allocation4], 256
        %v930 = vld [vmem:[%s929] sm:$0xff]
        %v931 = vld [vmem:[%s929 + $0x8] sm:$0xff]
        %v932 = vld [vmem:[%s929 + $0x10] sm:$0xff]
        %v933 = vld [vmem:[%s929 + $0x18] sm:$0xff]
        %v934 = vld [vmem:[%s929 + $0x20] sm:$0xff]
        %v935 = vld [vmem:[%s929 + $0x28] sm:$0xff]
        %v936 = vld [vmem:[%s929 + $0x30] sm:$0xff]
        %v937 = vld [vmem:[%s929 + $0x38] sm:$0xff]
        %v938 = vld [vmem:[%s929 + $0x40] sm:$0xff]
        %v939 = vld [vmem:[%s929 + $0x48] sm:$0xff]
        %v940 = vld [vmem:[%s929 + $0x50] sm:$0xff]
        %v941 = vld [vmem:[%s929 + $0x58] sm:$0xff]
        %v942 = vld [vmem:[%s929 + $0x60] sm:$0xff]
        %v943 = vld [vmem:[%s929 + $0x68] sm:$0xff]
        %v944 = vld [vmem:[%s929 + $0x70] sm:$0xff]
        %v945 = vld [vmem:[%s929 + $0x78] sm:$0xff]
        %946 = vmatprep.subr.mxu0 0.0
        %947 = vmatpush1.msra.mxu0 %v945
        %948 = vmatprep.subr.mxu0 0.0
        %949 = vmatpush1.msra.mxu0 %v944
        %950 = vmatprep.subr.mxu0 0.0
        %951 = vmatpush1.msra.mxu0 %v943
        %952 = vmatprep.subr.mxu0 0.0
        %953 = vmatpush1.msra.mxu0 %v942
        %954 = vmatprep.subr.mxu0 0.0
        %955 = vmatpush1.msra.mxu0 %v941
        %956 = vmatprep.subr.mxu0 0.0
        %957 = vmatpush1.msra.mxu0 %v940
        %958 = vmatprep.subr.mxu0 0.0
        %959 = vmatpush1.msra.mxu0 %v939
        %960 = vmatprep.subr.mxu0 0.0
        %961 = vmatpush1.msra.mxu0 %v938
        %962 = vmatprep.subr.mxu0 0.0
        %963 = vmatpush1.msra.mxu0 %v937
        %964 = vmatprep.subr.mxu0 0.0
        %965 = vmatpush1.msra.mxu0 %v936
        %966 = vmatprep.subr.mxu0 0.0
        %967 = vmatpush1.msra.mxu0 %v935
        %968 = vmatprep.subr.mxu0 0.0
        %969 = vmatpush1.msra.mxu0 %v934
        %970 = vmatprep.subr.mxu0 0.0
        %971 = vmatpush1.msra.mxu0 %v933
        %972 = vmatprep.subr.mxu0 0.0
        %973 = vmatpush1.msra.mxu0 %v932
        %974 = vmatprep.subr.mxu0 0.0
        %975 = vmatpush1.msra.mxu0 %v931
        %976 = vmatprep.subr.mxu0 0.0
        %977 = vmatpush1.msra.mxu0 %v930
        %978 = vmatprep.subr.mxu0 0.0
        %979 = vmatpush2.msra.mxu0 0.0
        %980 = vmatprep.subr.mxu0 0.0
        %981 = vmatpush2.msra.mxu0 0.0
        %982 = vmatprep.subr.mxu0 0.0
        %983 = vmatpush2.msra.mxu0 0.0
        %984 = vmatprep.subr.mxu0 0.0
        %985 = vmatpush2.msra.mxu0 0.0
        %986 = vmatprep.subr.mxu0 0.0
        %987 = vmatpush2.msra.mxu0 0.0
        %988 = vmatprep.subr.mxu0 0.0
        %989 = vmatpush2.msra.mxu0 0.0
        %990 = vmatprep.subr.mxu0 0.0
        %991 = vmatpush2.msra.mxu0 0.0
        %992 = vmatprep.subr.mxu0 0.0
        %993 = vmatpush2.msra.mxu0 0.0
        %994 = vmatprep.subr.mxu0 0.0
        %995 = vmatpush2.msra.mxu0 0.0
        %996 = vmatprep.subr.mxu0 0.0
        %997 = vmatpush2.msra.mxu0 0.0
        %998 = vmatprep.subr.mxu0 0.0
        %999 = vmatpush2.msra.mxu0 0.0
        %1000 = vmatprep.subr.mxu0 0.0
        %1001 = vmatpush2.msra.mxu0 0.0
        %1002 = vmatprep.subr.mxu0 0.0
        %1003 = vmatpush2.msra.mxu0 0.0
        %1004 = vmatprep.subr.mxu0 0.0
        %1005 = vmatpush2.msra.mxu0 0.0
        %1006 = vmatprep.subr.mxu0 0.0
        %1007 = vmatpush2.msra.mxu0 0.0
        %1008 = vmatprep.subr.mxu0 0.0
        %1009 = vmatpush2.msra.mxu0 0.0
        %1010 = vmatprep.mubr.f32.mxu0 0.0
        %1011 = vmatmul.mubr.f32.gmra.mxu0 %v928
        %v1012 = vpop.f32.mrf.mxu0
        %v1013 = vadd.f32 0.0, %v1012
        %v1014 = vpop.f32.mrf.mxu0
        %1015 = vmatprep.mubr.f32.mxu0 0.0
        %1016 = vmatmul.mubr.f32.gmra.mxu0 %v927
        %v1017 = vpop.f32.mrf.mxu0
        %v1018 = vadd.f32 0.0, %v1017
        %v1019 = vpop.f32.mrf.mxu0
        %1020 = vmatprep.mubr.f32.mxu0 0.0
        %1021 = vmatmul.mubr.f32.gmra.mxu0 %v926
        %v1022 = vpop.f32.mrf.mxu0
        %v1023 = vadd.f32 0.0, %v1022
        %v1024 = vpop.f32.mrf.mxu0
        %1025 = vmatprep.mubr.f32.mxu0 0.0
        %1026 = vmatmul.mubr.f32.gmra.mxu0 %v925
        %v1027 = vpop.f32.mrf.mxu0
        %v1028 = vadd.f32 0.0, %v1027
        %v1029 = vpop.f32.mrf.mxu0
        %1030 = vmatprep.mubr.f32.mxu0 0.0
        %1031 = vmatmul.mubr.f32.gmra.mxu0 %v924
        %v1032 = vpop.f32.mrf.mxu0
        %v1033 = vadd.f32 0.0, %v1032
        %v1034 = vpop.f32.mrf.mxu0
        %1035 = vmatprep.mubr.f32.mxu0 0.0
        %1036 = vmatmul.mubr.f32.gmra.mxu0 %v923
        %v1037 = vpop.f32.mrf.mxu0
        %v1038 = vadd.f32 0.0, %v1037
        %v1039 = vpop.f32.mrf.mxu0
        %1040 = vmatprep.mubr.f32.mxu0 0.0
        %1041 = vmatmul.mubr.f32.gmra.mxu0 %v922
        %v1042 = vpop.f32.mrf.mxu0
        %v1043 = vadd.f32 0.0, %v1042
        %v1044 = vpop.f32.mrf.mxu0
        %1045 = vmatprep.mubr.f32.mxu0 0.0
        %1046 = vmatmul.mubr.f32.gmra.mxu0 %v921
        %v1047 = vpop.f32.mrf.mxu0
        %v1048 = vadd.f32 0.0, %v1047
        %v1049 = vpop.f32.mrf.mxu0
        %1050 = vmatprep.mubr.f32.mxu0 0.0
        %1051 = vmatmul.mubr.f32.gmra.mxu0 %v920
        %v1052 = vpop.f32.mrf.mxu0
        %v1053 = vadd.f32 0.0, %v1052
        %v1054 = vpop.f32.mrf.mxu0
        %1055 = vmatprep.mubr.f32.mxu0 0.0
        %1056 = vmatmul.mubr.f32.gmra.mxu0 %v919
        %v1057 = vpop.f32.mrf.mxu0
        %v1058 = vadd.f32 0.0, %v1057
        %v1059 = vpop.f32.mrf.mxu0
        %1060 = vmatprep.mubr.f32.mxu0 0.0
        %1061 = vmatmul.mubr.f32.gmra.mxu0 %v918
        %v1062 = vpop.f32.mrf.mxu0
        %v1063 = vadd.f32 0.0, %v1062
        %v1064 = vpop.f32.mrf.mxu0
        %1065 = vmatprep.mubr.f32.mxu0 0.0
        %1066 = vmatmul.mubr.f32.gmra.mxu0 %v917
        %v1067 = vpop.f32.mrf.mxu0
        %v1068 = vadd.f32 0.0, %v1067
        %v1069 = vpop.f32.mrf.mxu0
        %1070 = vmatprep.mubr.f32.mxu0 0.0
        %1071 = vmatmul.mubr.f32.gmra.mxu0 %v916
        %v1072 = vpop.f32.mrf.mxu0
        %v1073 = vadd.f32 0.0, %v1072
        %v1074 = vpop.f32.mrf.mxu0
        %1075 = vmatprep.mubr.f32.mxu0 0.0
        %1076 = vmatmul.mubr.f32.gmra.mxu0 %v915
        %v1077 = vpop.f32.mrf.mxu0
        %v1078 = vadd.f32 0.0, %v1077
        %v1079 = vpop.f32.mrf.mxu0
        %1080 = vmatprep.mubr.f32.mxu0 0.0
        %1081 = vmatmul.mubr.f32.gmra.mxu0 %v914
        %v1082 = vpop.f32.mrf.mxu0
        %v1083 = vadd.f32 0.0, %v1082
        %v1084 = vpop.f32.mrf.mxu0
        %1085 = vmatprep.mubr.f32.mxu0 0.0
        %1086 = vmatmul.mubr.f32.gmra.mxu0 %v913
        %v1087 = vpop.f32.mrf.mxu0
        %v1088 = vadd.f32 0.0, %v1087
        %v1089 = vpop.f32.mrf.mxu0
        %1090 = vmatprep.mubr.f32.mxu0 0.0
        %1091 = vmatmul.mubr.f32.gmra.mxu0 %v912
        %v1092 = vpop.f32.mrf.mxu0
        %v1093 = vadd.f32 0.0, %v1092
        %v1094 = vpop.f32.mrf.mxu0
        %1095 = vmatprep.mubr.f32.mxu0 0.0
        %1096 = vmatmul.mubr.f32.gmra.mxu0 %v911
        %v1097 = vpop.f32.mrf.mxu0
        %v1098 = vadd.f32 0.0, %v1097
        %v1099 = vpop.f32.mrf.mxu0
        %1100 = vmatprep.mubr.f32.mxu0 0.0
        %1101 = vmatmul.mubr.f32.gmra.mxu0 %v910
        %v1102 = vpop.f32.mrf.mxu0
        %v1103 = vadd.f32 0.0, %v1102
        %v1104 = vpop.f32.mrf.mxu0
        %1105 = vmatprep.mubr.f32.mxu0 0.0
        %1106 = vmatmul.mubr.f32.gmra.mxu0 %v909
        %v1107 = vpop.f32.mrf.mxu0
        %v1108 = vadd.f32 0.0, %v1107
        %v1109 = vpop.f32.mrf.mxu0
        %1110 = vmatprep.mubr.f32.mxu0 0.0
        %1111 = vmatmul.mubr.f32.gmra.mxu0 %v908
        %v1112 = vpop.f32.mrf.mxu0
        %v1113 = vadd.f32 0.0, %v1112
        %v1114 = vpop.f32.mrf.mxu0
        %1115 = vmatprep.mubr.f32.mxu0 0.0
        %1116 = vmatmul.mubr.f32.gmra.mxu0 %v907
        %v1117 = vpop.f32.mrf.mxu0
        %v1118 = vadd.f32 0.0, %v1117
        %v1119 = vpop.f32.mrf.mxu0
        %1120 = vmatprep.mubr.f32.mxu0 0.0
        %1121 = vmatmul.mubr.f32.gmra.mxu0 %v906
        %v1122 = vpop.f32.mrf.mxu0
        %v1123 = vadd.f32 0.0, %v1122
        %v1124 = vpop.f32.mrf.mxu0
        %1125 = vmatprep.mubr.f32.mxu0 0.0
        %1126 = vmatmul.mubr.f32.gmra.mxu0 %v905
        %v1127 = vpop.f32.mrf.mxu0
        %v1128 = vadd.f32 0.0, %v1127
        %v1129 = vpop.f32.mrf.mxu0
        %1130 = vmatprep.mubr.f32.mxu0 0.0
        %1131 = vmatmul.mubr.f32.gmra.mxu0 %v904
        %v1132 = vpop.f32.mrf.mxu0
        %v1133 = vadd.f32 0.0, %v1132
        %v1134 = vpop.f32.mrf.mxu0
        %1135 = vmatprep.mubr.f32.mxu0 0.0
        %1136 = vmatmul.mubr.f32.gmra.mxu0 %v903
        %v1137 = vpop.f32.mrf.mxu0
        %v1138 = vadd.f32 0.0, %v1137
        %v1139 = vpop.f32.mrf.mxu0
        %1140 = vmatprep.mubr.f32.mxu0 0.0
        %1141 = vmatmul.mubr.f32.gmra.mxu0 %v902
        %v1142 = vpop.f32.mrf.mxu0
        %v1143 = vadd.f32 0.0, %v1142
        %v1144 = vpop.f32.mrf.mxu0
        %1145 = vmatprep.mubr.f32.mxu0 0.0
        %1146 = vmatmul.mubr.f32.gmra.mxu0 %v901
        %v1147 = vpop.f32.mrf.mxu0
        %v1148 = vadd.f32 0.0, %v1147
        %v1149 = vpop.f32.mrf.mxu0
        %1150 = vmatprep.mubr.f32.mxu0 0.0
        %1151 = vmatmul.mubr.f32.gmra.mxu0 %v900
        %v1152 = vpop.f32.mrf.mxu0
        %v1153 = vadd.f32 0.0, %v1152
        %v1154 = vpop.f32.mrf.mxu0
        %1155 = vmatprep.mubr.f32.mxu0 0.0
        %1156 = vmatmul.mubr.f32.gmra.mxu0 %v899
        %v1157 = vpop.f32.mrf.mxu0
        %v1158 = vadd.f32 0.0, %v1157
        %v1159 = vpop.f32.mrf.mxu0
        %1160 = vmatprep.mubr.f32.mxu0 0.0
        %1161 = vmatmul.mubr.f32.gmra.mxu0 %v898
        %v1162 = vpop.f32.mrf.mxu0
        %v1163 = vadd.f32 0.0, %v1162
        %v1164 = vpop.f32.mrf.mxu0
        %1165 = vmatprep.mubr.f32.mxu0 0.0
        %1166 = vmatmul.mubr.f32.gmra.mxu0 %v897
        %v1167 = vpop.f32.mrf.mxu0
        %v1168 = vadd.f32 0.0, %v1167
        %v1169 = vpop.f32.mrf.mxu0
        %1170 = vdwg.mxu0
        %v1171 = vadd.f32 %v690, %v1013
        %v1172 = vadd.f32 %v695, %v1018
        %v1173 = vadd.f32 %v700, %v1023
        %v1174 = vadd.f32 %v705, %v1028
        %v1175 = vadd.f32 %v710, %v1033
        %v1176 = vadd.f32 %v715, %v1038
        %v1177 = vadd.f32 %v720, %v1043
        %v1178 = vadd.f32 %v725, %v1048
        %v1179 = vadd.f32 %v730, %v1053
        %v1180 = vadd.f32 %v735, %v1058
        %v1181 = vadd.f32 %v740, %v1063
        %v1182 = vadd.f32 %v745, %v1068
        %v1183 = vadd.f32 %v750, %v1073
        %v1184 = vadd.f32 %v755, %v1078
        %v1185 = vadd.f32 %v760, %v1083
        %v1186 = vadd.f32 %v765, %v1088
        %v1187 = vadd.f32 %v770, %v1093
        %v1188 = vadd.f32 %v775, %v1098
        %v1189 = vadd.f32 %v780, %v1103
        %v1190 = vadd.f32 %v785, %v1108
        %v1191 = vadd.f32 %v790, %v1113
        %v1192 = vadd.f32 %v795, %v1118
        %v1193 = vadd.f32 %v800, %v1123
        %v1194 = vadd.f32 %v805, %v1128
        %v1195 = vadd.f32 %v810, %v1133
        %v1196 = vadd.f32 %v815, %v1138
        %v1197 = vadd.f32 %v820, %v1143
        %v1198 = vadd.f32 %v825, %v1148
        %v1199 = vadd.f32 %v830, %v1153
        %v1200 = vadd.f32 %v835, %v1158
        %v1201 = vadd.f32 %v840, %v1163
        %v1202 = vadd.f32 %v845, %v1168
        %s1203 = sadd.s32 24, %s232
        %s1204 = scalar_lea.vmem [#allocation2], %s1203
        %v1205 = vld [vmem:[%s1204] sm:$0xff]
        %v1206 = vld [vmem:[%s1204 + $0x8] sm:$0xff]
        %v1207 = vld [vmem:[%s1204 + $0x10] sm:$0xff]
        %v1208 = vld [vmem:[%s1204 + $0x18] sm:$0xff]
        %v1209 = vld [vmem:[%s1204 + $0x20] sm:$0xff]
        %v1210 = vld [vmem:[%s1204 + $0x28] sm:$0xff]
        %v1211 = vld [vmem:[%s1204 + $0x30] sm:$0xff]
        %v1212 = vld [vmem:[%s1204 + $0x38] sm:$0xff]
        %v1213 = vld [vmem:[%s1204 + $0x40] sm:$0xff]
        %v1214 = vld [vmem:[%s1204 + $0x48] sm:$0xff]
        %v1215 = vld [vmem:[%s1204 + $0x50] sm:$0xff]
        %v1216 = vld [vmem:[%s1204 + $0x58] sm:$0xff]
        %v1217 = vld [vmem:[%s1204 + $0x60] sm:$0xff]
        %v1218 = vld [vmem:[%s1204 + $0x68] sm:$0xff]
        %v1219 = vld [vmem:[%s1204 + $0x70] sm:$0xff]
        %v1220 = vld [vmem:[%s1204 + $0x78] sm:$0xff]
        %v1221 = vld [vmem:[%s1204 + $0x80] sm:$0xff]
        %v1222 = vld [vmem:[%s1204 + $0x88] sm:$0xff]
        %v1223 = vld [vmem:[%s1204 + $0x90] sm:$0xff]
        %v1224 = vld [vmem:[%s1204 + $0x98] sm:$0xff]
        %v1225 = vld [vmem:[%s1204 + $0xa0] sm:$0xff]
        %v1226 = vld [vmem:[%s1204 + $0xa8] sm:$0xff]
        %v1227 = vld [vmem:[%s1204 + $0xb0] sm:$0xff]
        %v1228 = vld [vmem:[%s1204 + $0xb8] sm:$0xff]
        %v1229 = vld [vmem:[%s1204 + $0xc0] sm:$0xff]
        %v1230 = vld [vmem:[%s1204 + $0xc8] sm:$0xff]
        %v1231 = vld [vmem:[%s1204 + $0xd0] sm:$0xff]
        %v1232 = vld [vmem:[%s1204 + $0xd8] sm:$0xff]
        %v1233 = vld [vmem:[%s1204 + $0xe0] sm:$0xff]
        %v1234 = vld [vmem:[%s1204 + $0xe8] sm:$0xff]
        %v1235 = vld [vmem:[%s1204 + $0xf0] sm:$0xff]
        %v1236 = vld [vmem:[%s1204 + $0xf8] sm:$0xff]
        %v1237 = vld [vmem:[%s1204 + $0x100] sm:$0xff]
        %v1238 = vld [vmem:[%s1204 + $0x108] sm:$0xff]
        %v1239 = vld [vmem:[%s1204 + $0x110] sm:$0xff]
        %v1240 = vld [vmem:[%s1204 + $0x118] sm:$0xff]
        %v1241 = vld [vmem:[%s1204 + $0x120] sm:$0xff]
        %v1242 = vld [vmem:[%s1204 + $0x128] sm:$0xff]
        %v1243 = vld [vmem:[%s1204 + $0x130] sm:$0xff]
        %v1244 = vld [vmem:[%s1204 + $0x138] sm:$0xff]
        %v1245 = vld [vmem:[%s1204 + $0x140] sm:$0xff]
        %v1246 = vld [vmem:[%s1204 + $0x148] sm:$0xff]
        %v1247 = vld [vmem:[%s1204 + $0x150] sm:$0xff]
        %v1248 = vld [vmem:[%s1204 + $0x158] sm:$0xff]
        %v1249 = vld [vmem:[%s1204 + $0x160] sm:$0xff]
        %v1250 = vld [vmem:[%s1204 + $0x168] sm:$0xff]
        %v1251 = vld [vmem:[%s1204 + $0x170] sm:$0xff]
        %v1252 = vld [vmem:[%s1204 + $0x178] sm:$0xff]
        %s1253 = scalar_lea.vmem [#allocation4], 384
        %v1254 = vld [vmem:[%s1253] sm:$0xff]
        %v1255 = vld [vmem:[%s1253 + $0x8] sm:$0xff]
        %v1256 = vld [vmem:[%s1253 + $0x10] sm:$0xff]
        %v1257 = vld [vmem:[%s1253 + $0x18] sm:$0xff]
        %v1258 = vld [vmem:[%s1253 + $0x20] sm:$0xff]
        %v1259 = vld [vmem:[%s1253 + $0x28] sm:$0xff]
        %v1260 = vld [vmem:[%s1253 + $0x30] sm:$0xff]
        %v1261 = vld [vmem:[%s1253 + $0x38] sm:$0xff]
        %v1262 = vld [vmem:[%s1253 + $0x40] sm:$0xff]
        %v1263 = vld [vmem:[%s1253 + $0x48] sm:$0xff]
        %v1264 = vld [vmem:[%s1253 + $0x50] sm:$0xff]
        %v1265 = vld [vmem:[%s1253 + $0x58] sm:$0xff]
        %v1266 = vld [vmem:[%s1253 + $0x60] sm:$0xff]
        %v1267 = vld [vmem:[%s1253 + $0x68] sm:$0xff]
        %v1268 = vld [vmem:[%s1253 + $0x70] sm:$0xff]
        %v1269 = vld [vmem:[%s1253 + $0x78] sm:$0xff]
        %1270 = vmatprep.subr.mxu0 0.0
        %1271 = vmatpush1.msra.mxu0 %v1269
        %1272 = vmatprep.subr.mxu0 0.0
        %1273 = vmatpush1.msra.mxu0 %v1268
        %1274 = vmatprep.subr.mxu0 0.0
        %1275 = vmatpush1.msra.mxu0 %v1267
        %1276 = vmatprep.subr.mxu0 0.0
        %1277 = vmatpush1.msra.mxu0 %v1266
        %1278 = vmatprep.subr.mxu0 0.0
        %1279 = vmatpush1.msra.mxu0 %v1265
        %1280 = vmatprep.subr.mxu0 0.0
        %1281 = vmatpush1.msra.mxu0 %v1264
        %1282 = vmatprep.subr.mxu0 0.0
        %1283 = vmatpush1.msra.mxu0 %v1263
        %1284 = vmatprep.subr.mxu0 0.0
        %1285 = vmatpush1.msra.mxu0 %v1262
        %1286 = vmatprep.subr.mxu0 0.0
        %1287 = vmatpush1.msra.mxu0 %v1261
        %1288 = vmatprep.subr.mxu0 0.0
        %1289 = vmatpush1.msra.mxu0 %v1260
        %1290 = vmatprep.subr.mxu0 0.0
        %1291 = vmatpush1.msra.mxu0 %v1259
        %1292 = vmatprep.subr.mxu0 0.0
        %1293 = vmatpush1.msra.mxu0 %v1258
        %1294 = vmatprep.subr.mxu0 0.0
        %1295 = vmatpush1.msra.mxu0 %v1257
        %1296 = vmatprep.subr.mxu0 0.0
        %1297 = vmatpush1.msra.mxu0 %v1256
        %1298 = vmatprep.subr.mxu0 0.0
        %1299 = vmatpush1.msra.mxu0 %v1255
        %1300 = vmatprep.subr.mxu0 0.0
        %1301 = vmatpush1.msra.mxu0 %v1254
        %1302 = vmatprep.subr.mxu0 0.0
        %1303 = vmatpush2.msra.mxu0 0.0
        %1304 = vmatprep.subr.mxu0 0.0
        %1305 = vmatpush2.msra.mxu0 0.0
        %1306 = vmatprep.subr.mxu0 0.0
        %1307 = vmatpush2.msra.mxu0 0.0
        %1308 = vmatprep.subr.mxu0 0.0
        %1309 = vmatpush2.msra.mxu0 0.0
        %1310 = vmatprep.subr.mxu0 0.0
        %1311 = vmatpush2.msra.mxu0 0.0
        %1312 = vmatprep.subr.mxu0 0.0
        %1313 = vmatpush2.msra.mxu0 0.0
        %1314 = vmatprep.subr.mxu0 0.0
        %1315 = vmatpush2.msra.mxu0 0.0
        %1316 = vmatprep.subr.mxu0 0.0
        %1317 = vmatpush2.msra.mxu0 0.0
        %1318 = vmatprep.subr.mxu0 0.0
        %1319 = vmatpush2.msra.mxu0 0.0
        %1320 = vmatprep.subr.mxu0 0.0
        %1321 = vmatpush2.msra.mxu0 0.0
        %1322 = vmatprep.subr.mxu0 0.0
        %1323 = vmatpush2.msra.mxu0 0.0
        %1324 = vmatprep.subr.mxu0 0.0
        %1325 = vmatpush2.msra.mxu0 0.0
        %1326 = vmatprep.subr.mxu0 0.0
        %1327 = vmatpush2.msra.mxu0 0.0
        %1328 = vmatprep.subr.mxu0 0.0
        %1329 = vmatpush2.msra.mxu0 0.0
        %1330 = vmatprep.subr.mxu0 0.0
        %1331 = vmatpush2.msra.mxu0 0.0
        %1332 = vmatprep.subr.mxu0 0.0
        %1333 = vmatpush2.msra.mxu0 0.0
        %1334 = vmatprep.mubr.f32.mxu0 0.0
        %1335 = vmatmul.mubr.f32.gmra.mxu0 %v1205
        %v1336 = vpop.f32.mrf.mxu0
        %v1337 = vadd.f32 0.0, %v1336
        %v1338 = vpop.f32.mrf.mxu0
        %1339 = vmatprep.mubr.f32.mxu0 0.0
        %1340 = vmatmul.mubr.f32.gmra.mxu0 %v1206
        %v1341 = vpop.f32.mrf.mxu0
        %v1342 = vadd.f32 0.0, %v1341
        %v1343 = vpop.f32.mrf.mxu0
        %1344 = vmatprep.mubr.f32.mxu0 0.0
        %1345 = vmatmul.mubr.f32.gmra.mxu0 %v1208
        %v1346 = vpop.f32.mrf.mxu0
        %v1347 = vadd.f32 0.0, %v1346
        %v1348 = vpop.f32.mrf.mxu0
        %1349 = vmatprep.mubr.f32.mxu0 0.0
        %1350 = vmatmul.mubr.f32.gmra.mxu0 %v1209
        %v1351 = vpop.f32.mrf.mxu0
        %v1352 = vadd.f32 0.0, %v1351
        %v1353 = vpop.f32.mrf.mxu0
        %1354 = vmatprep.mubr.f32.mxu0 0.0
        %1355 = vmatmul.mubr.f32.gmra.mxu0 %v1211
        %v1356 = vpop.f32.mrf.mxu0
        %v1357 = vadd.f32 0.0, %v1356
        %v1358 = vpop.f32.mrf.mxu0
        %1359 = vmatprep.mubr.f32.mxu0 0.0
        %1360 = vmatmul.mubr.f32.gmra.mxu0 %v1212
        %v1361 = vpop.f32.mrf.mxu0
        %v1362 = vadd.f32 0.0, %v1361
        %v1363 = vpop.f32.mrf.mxu0
        %1364 = vmatprep.mubr.f32.mxu0 0.0
        %1365 = vmatmul.mubr.f32.gmra.mxu0 %v1214
        %v1366 = vpop.f32.mrf.mxu0
        %v1367 = vadd.f32 0.0, %v1366
        %v1368 = vpop.f32.mrf.mxu0
        %1369 = vmatprep.mubr.f32.mxu0 0.0
        %1370 = vmatmul.mubr.f32.gmra.mxu0 %v1215
        %v1371 = vpop.f32.mrf.mxu0
        %v1372 = vadd.f32 0.0, %v1371
        %v1373 = vpop.f32.mrf.mxu0
        %1374 = vmatprep.mubr.f32.mxu0 0.0
        %1375 = vmatmul.mubr.f32.gmra.mxu0 %v1217
        %v1376 = vpop.f32.mrf.mxu0
        %v1377 = vadd.f32 0.0, %v1376
        %v1378 = vpop.f32.mrf.mxu0
        %1379 = vmatprep.mubr.f32.mxu0 0.0
        %1380 = vmatmul.mubr.f32.gmra.mxu0 %v1218
        %v1381 = vpop.f32.mrf.mxu0
        %v1382 = vadd.f32 0.0, %v1381
        %v1383 = vpop.f32.mrf.mxu0
        %1384 = vmatprep.mubr.f32.mxu0 0.0
        %1385 = vmatmul.mubr.f32.gmra.mxu0 %v1220
        %v1386 = vpop.f32.mrf.mxu0
        %v1387 = vadd.f32 0.0, %v1386
        %v1388 = vpop.f32.mrf.mxu0
        %1389 = vmatprep.mubr.f32.mxu0 0.0
        %1390 = vmatmul.mubr.f32.gmra.mxu0 %v1221
        %v1391 = vpop.f32.mrf.mxu0
        %v1392 = vadd.f32 0.0, %v1391
        %v1393 = vpop.f32.mrf.mxu0
        %1394 = vmatprep.mubr.f32.mxu0 0.0
        %1395 = vmatmul.mubr.f32.gmra.mxu0 %v1223
        %v1396 = vpop.f32.mrf.mxu0
        %v1397 = vadd.f32 0.0, %v1396
        %v1398 = vpop.f32.mrf.mxu0
        %1399 = vmatprep.mubr.f32.mxu0 0.0
        %1400 = vmatmul.mubr.f32.gmra.mxu0 %v1224
        %v1401 = vpop.f32.mrf.mxu0
        %v1402 = vadd.f32 0.0, %v1401
        %v1403 = vpop.f32.mrf.mxu0
        %1404 = vmatprep.mubr.f32.mxu0 0.0
        %1405 = vmatmul.mubr.f32.gmra.mxu0 %v1226
        %v1406 = vpop.f32.mrf.mxu0
        %v1407 = vadd.f32 0.0, %v1406
        %v1408 = vpop.f32.mrf.mxu0
        %1409 = vmatprep.mubr.f32.mxu0 0.0
        %1410 = vmatmul.mubr.f32.gmra.mxu0 %v1227
        %v1411 = vpop.f32.mrf.mxu0
        %v1412 = vadd.f32 0.0, %v1411
        %v1413 = vpop.f32.mrf.mxu0
        %1414 = vmatprep.mubr.f32.mxu0 0.0
        %1415 = vmatmul.mubr.f32.gmra.mxu0 %v1229
        %v1416 = vpop.f32.mrf.mxu0
        %v1417 = vadd.f32 0.0, %v1416
        %v1418 = vpop.f32.mrf.mxu0
        %1419 = vmatprep.mubr.f32.mxu0 0.0
        %1420 = vmatmul.mubr.f32.gmra.mxu0 %v1230
        %v1421 = vpop.f32.mrf.mxu0
        %v1422 = vadd.f32 0.0, %v1421
        %v1423 = vpop.f32.mrf.mxu0
        %1424 = vmatprep.mubr.f32.mxu0 0.0
        %1425 = vmatmul.mubr.f32.gmra.mxu0 %v1232
        %v1426 = vpop.f32.mrf.mxu0
        %v1427 = vadd.f32 0.0, %v1426
        %v1428 = vpop.f32.mrf.mxu0
        %1429 = vmatprep.mubr.f32.mxu0 0.0
        %1430 = vmatmul.mubr.f32.gmra.mxu0 %v1233
        %v1431 = vpop.f32.mrf.mxu0
        %v1432 = vadd.f32 0.0, %v1431
        %v1433 = vpop.f32.mrf.mxu0
        %1434 = vmatprep.mubr.f32.mxu0 0.0
        %1435 = vmatmul.mubr.f32.gmra.mxu0 %v1235
        %v1436 = vpop.f32.mrf.mxu0
        %v1437 = vadd.f32 0.0, %v1436
        %v1438 = vpop.f32.mrf.mxu0
        %1439 = vmatprep.mubr.f32.mxu0 0.0
        %1440 = vmatmul.mubr.f32.gmra.mxu0 %v1236
        %v1441 = vpop.f32.mrf.mxu0
        %v1442 = vadd.f32 0.0, %v1441
        %v1443 = vpop.f32.mrf.mxu0
        %1444 = vmatprep.mubr.f32.mxu0 0.0
        %1445 = vmatmul.mubr.f32.gmra.mxu0 %v1238
        %v1446 = vpop.f32.mrf.mxu0
        %v1447 = vadd.f32 0.0, %v1446
        %v1448 = vpop.f32.mrf.mxu0
        %1449 = vmatprep.mubr.f32.mxu0 0.0
        %1450 = vmatmul.mubr.f32.gmra.mxu0 %v1239
        %v1451 = vpop.f32.mrf.mxu0
        %v1452 = vadd.f32 0.0, %v1451
        %v1453 = vpop.f32.mrf.mxu0
        %1454 = vmatprep.mubr.f32.mxu0 0.0
        %1455 = vmatmul.mubr.f32.gmra.mxu0 %v1241
        %v1456 = vpop.f32.mrf.mxu0
        %v1457 = vadd.f32 0.0, %v1456
        %v1458 = vpop.f32.mrf.mxu0
        %1459 = vmatprep.mubr.f32.mxu0 0.0
        %1460 = vmatmul.mubr.f32.gmra.mxu0 %v1242
        %v1461 = vpop.f32.mrf.mxu0
        %v1462 = vadd.f32 0.0, %v1461
        %v1463 = vpop.f32.mrf.mxu0
        %1464 = vmatprep.mubr.f32.mxu0 0.0
        %1465 = vmatmul.mubr.f32.gmra.mxu0 %v1244
        %v1466 = vpop.f32.mrf.mxu0
        %v1467 = vadd.f32 0.0, %v1466
        %v1468 = vpop.f32.mrf.mxu0
        %1469 = vmatprep.mubr.f32.mxu0 0.0
        %1470 = vmatmul.mubr.f32.gmra.mxu0 %v1245
        %v1471 = vpop.f32.mrf.mxu0
        %v1472 = vadd.f32 0.0, %v1471
        %v1473 = vpop.f32.mrf.mxu0
        %1474 = vmatprep.mubr.f32.mxu0 0.0
        %1475 = vmatmul.mubr.f32.gmra.mxu0 %v1247
        %v1476 = vpop.f32.mrf.mxu0
        %v1477 = vadd.f32 0.0, %v1476
        %v1478 = vpop.f32.mrf.mxu0
        %1479 = vmatprep.mubr.f32.mxu0 0.0
        %1480 = vmatmul.mubr.f32.gmra.mxu0 %v1248
        %v1481 = vpop.f32.mrf.mxu0
        %v1482 = vadd.f32 0.0, %v1481
        %v1483 = vpop.f32.mrf.mxu0
        %1484 = vmatprep.mubr.f32.mxu0 0.0
        %1485 = vmatmul.mubr.f32.gmra.mxu0 %v1250
        %v1486 = vpop.f32.mrf.mxu0
        %v1487 = vadd.f32 0.0, %v1486
        %v1488 = vpop.f32.mrf.mxu0
        %1489 = vmatprep.mubr.f32.mxu0 0.0
        %1490 = vmatmul.mubr.f32.gmra.mxu0 %v1251
        %v1491 = vpop.f32.mrf.mxu0
        %v1492 = vadd.f32 0.0, %v1491
        %v1493 = vpop.f32.mrf.mxu0
        %1494 = vdwg.mxu0
        %v1495 = vadd.f32 %v1171, %v1337
        %v1496 = vadd.f32 %v1172, %v1342
        %v1497 = vadd.f32 %v1173, %v1347
        %v1498 = vadd.f32 %v1174, %v1352
        %v1499 = vadd.f32 %v1175, %v1357
        %v1500 = vadd.f32 %v1176, %v1362
        %v1501 = vadd.f32 %v1177, %v1367
        %v1502 = vadd.f32 %v1178, %v1372
        %v1503 = vadd.f32 %v1179, %v1377
        %v1504 = vadd.f32 %v1180, %v1382
        %v1505 = vadd.f32 %v1181, %v1387
        %v1506 = vadd.f32 %v1182, %v1392
        %v1507 = vadd.f32 %v1183, %v1397
        %v1508 = vadd.f32 %v1184, %v1402
        %v1509 = vadd.f32 %v1185, %v1407
        %v1510 = vadd.f32 %v1186, %v1412
        %v1511 = vadd.f32 %v1187, %v1417
        %v1512 = vadd.f32 %v1188, %v1422
        %v1513 = vadd.f32 %v1189, %v1427
        %v1514 = vadd.f32 %v1190, %v1432
        %v1515 = vadd.f32 %v1191, %v1437
        %v1516 = vadd.f32 %v1192, %v1442
        %v1517 = vadd.f32 %v1193, %v1447
        %v1518 = vadd.f32 %v1194, %v1452
        %v1519 = vadd.f32 %v1195, %v1457
        %v1520 = vadd.f32 %v1196, %v1462
        %v1521 = vadd.f32 %v1197, %v1467
        %v1522 = vadd.f32 %v1198, %v1472
        %v1523 = vadd.f32 %v1199, %v1477
        %v1524 = vadd.f32 %v1200, %v1482
        %v1525 = vadd.f32 %v1201, %v1487
        %v1526 = vadd.f32 %v1202, %v1492
        %v1527 = vrot.slane %v1205, 1
        %v1528 = vrot.slane %v1206, 1
        %v1529 = vrot.slane %v1207, 1
        %v1530 = vrot.slane %v1208, 1
        %v1531 = vrot.slane %v1209, 1
        %v1532 = vrot.slane %v1210, 1
        %v1533 = vrot.slane %v1211, 1
        %v1534 = vrot.slane %v1212, 1
        %v1535 = vrot.slane %v1213, 1
        %v1536 = vrot.slane %v1214, 1
        %v1537 = vrot.slane %v1215, 1
        %v1538 = vrot.slane %v1216, 1
        %v1539 = vrot.slane %v1217, 1
        %v1540 = vrot.slane %v1218, 1
        %v1541 = vrot.slane %v1219, 1
        %v1542 = vrot.slane %v1220, 1
        %v1543 = vrot.slane %v1221, 1
        %v1544 = vrot.slane %v1222, 1
        %v1545 = vrot.slane %v1223, 1
        %v1546 = vrot.slane %v1224, 1
        %v1547 = vrot.slane %v1225, 1
        %v1548 = vrot.slane %v1226, 1
        %v1549 = vrot.slane %v1227, 1
        %v1550 = vrot.slane %v1228, 1
        %v1551 = vrot.slane %v1229, 1
        %v1552 = vrot.slane %v1230, 1
        %v1553 = vrot.slane %v1231, 1
        %v1554 = vrot.slane %v1232, 1
        %v1555 = vrot.slane %v1233, 1
        %v1556 = vrot.slane %v1234, 1
        %v1557 = vrot.slane %v1235, 1
        %v1558 = vrot.slane %v1236, 1
        %v1559 = vrot.slane %v1237, 1
        %v1560 = vrot.slane %v1238, 1
        %v1561 = vrot.slane %v1239, 1
        %v1562 = vrot.slane %v1240, 1
        %v1563 = vrot.slane %v1241, 1
        %v1564 = vrot.slane %v1242, 1
        %v1565 = vrot.slane %v1243, 1
        %v1566 = vrot.slane %v1244, 1
        %v1567 = vrot.slane %v1245, 1
        %v1568 = vrot.slane %v1246, 1
        %v1569 = vrot.slane %v1247, 1
        %v1570 = vrot.slane %v1248, 1
        %v1571 = vrot.slane %v1249, 1
        %v1572 = vrot.slane %v1250, 1
        %v1573 = vrot.slane %v1251, 1
        %v1574 = vrot.slane %v1252, 1
        %v1575 = vsel %vm348, %v1573, %v1574
        %v1576 = vsel %vm348, %v1572, %v1573
        %v1577 = vsel %vm348, %v1570, %v1571
        %v1578 = vsel %vm348, %v1569, %v1570
        %v1579 = vsel %vm348, %v1567, %v1568
        %v1580 = vsel %vm348, %v1566, %v1567
        %v1581 = vsel %vm348, %v1564, %v1565
        %v1582 = vsel %vm348, %v1563, %v1564
        %v1583 = vsel %vm348, %v1561, %v1562
        %v1584 = vsel %vm348, %v1560, %v1561
        %v1585 = vsel %vm348, %v1558, %v1559
        %v1586 = vsel %vm348, %v1557, %v1558
        %v1587 = vsel %vm348, %v1555, %v1556
        %v1588 = vsel %vm348, %v1554, %v1555
        %v1589 = vsel %vm348, %v1552, %v1553
        %v1590 = vsel %vm348, %v1551, %v1552
        %v1591 = vsel %vm348, %v1549, %v1550
        %v1592 = vsel %vm348, %v1548, %v1549
        %v1593 = vsel %vm348, %v1546, %v1547
        %v1594 = vsel %vm348, %v1545, %v1546
        %v1595 = vsel %vm348, %v1543, %v1544
        %v1596 = vsel %vm348, %v1542, %v1543
        %v1597 = vsel %vm348, %v1540, %v1541
        %v1598 = vsel %vm348, %v1539, %v1540
        %v1599 = vsel %vm348, %v1537, %v1538
        %v1600 = vsel %vm348, %v1536, %v1537
        %v1601 = vsel %vm348, %v1534, %v1535
        %v1602 = vsel %vm348, %v1533, %v1534
        %v1603 = vsel %vm348, %v1531, %v1532
        %v1604 = vsel %vm348, %v1530, %v1531
        %v1605 = vsel %vm348, %v1528, %v1529
        %v1606 = vsel %vm348, %v1527, %v1528
        %s1607 = scalar_lea.vmem [#allocation4], 512
        %v1608 = vld [vmem:[%s1607] sm:$0xff]
        %v1609 = vld [vmem:[%s1607 + $0x8] sm:$0xff]
        %v1610 = vld [vmem:[%s1607 + $0x10] sm:$0xff]
        %v1611 = vld [vmem:[%s1607 + $0x18] sm:$0xff]
        %v1612 = vld [vmem:[%s1607 + $0x20] sm:$0xff]
        %v1613 = vld [vmem:[%s1607 + $0x28] sm:$0xff]
        %v1614 = vld [vmem:[%s1607 + $0x30] sm:$0xff]
        %v1615 = vld [vmem:[%s1607 + $0x38] sm:$0xff]
        %v1616 = vld [vmem:[%s1607 + $0x40] sm:$0xff]
        %v1617 = vld [vmem:[%s1607 + $0x48] sm:$0xff]
        %v1618 = vld [vmem:[%s1607 + $0x50] sm:$0xff]
        %v1619 = vld [vmem:[%s1607 + $0x58] sm:$0xff]
        %v1620 = vld [vmem:[%s1607 + $0x60] sm:$0xff]
        %v1621 = vld [vmem:[%s1607 + $0x68] sm:$0xff]
        %v1622 = vld [vmem:[%s1607 + $0x70] sm:$0xff]
        %v1623 = vld [vmem:[%s1607 + $0x78] sm:$0xff]
        %1624 = vmatprep.subr.mxu0 0.0
        %1625 = vmatpush1.msra.mxu0 %v1623
        %1626 = vmatprep.subr.mxu0 0.0
        %1627 = vmatpush1.msra.mxu0 %v1622
        %1628 = vmatprep.subr.mxu0 0.0
        %1629 = vmatpush1.msra.mxu0 %v1621
        %1630 = vmatprep.subr.mxu0 0.0
        %1631 = vmatpush1.msra.mxu0 %v1620
        %1632 = vmatprep.subr.mxu0 0.0
        %1633 = vmatpush1.msra.mxu0 %v1619
        %1634 = vmatprep.subr.mxu0 0.0
        %1635 = vmatpush1.msra.mxu0 %v1618
        %1636 = vmatprep.subr.mxu0 0.0
        %1637 = vmatpush1.msra.mxu0 %v1617
        %1638 = vmatprep.subr.mxu0 0.0
        %1639 = vmatpush1.msra.mxu0 %v1616
        %1640 = vmatprep.subr.mxu0 0.0
        %1641 = vmatpush1.msra.mxu0 %v1615
        %1642 = vmatprep.subr.mxu0 0.0
        %1643 = vmatpush1.msra.mxu0 %v1614
        %1644 = vmatprep.subr.mxu0 0.0
        %1645 = vmatpush1.msra.mxu0 %v1613
        %1646 = vmatprep.subr.mxu0 0.0
        %1647 = vmatpush1.msra.mxu0 %v1612
        %1648 = vmatprep.subr.mxu0 0.0
        %1649 = vmatpush1.msra.mxu0 %v1611
        %1650 = vmatprep.subr.mxu0 0.0
        %1651 = vmatpush1.msra.mxu0 %v1610
        %1652 = vmatprep.subr.mxu0 0.0
        %1653 = vmatpush1.msra.mxu0 %v1609
        %1654 = vmatprep.subr.mxu0 0.0
        %1655 = vmatpush1.msra.mxu0 %v1608
        %1656 = vmatprep.subr.mxu0 0.0
        %1657 = vmatpush2.msra.mxu0 0.0
        %1658 = vmatprep.subr.mxu0 0.0
        %1659 = vmatpush2.msra.mxu0 0.0
        %1660 = vmatprep.subr.mxu0 0.0
        %1661 = vmatpush2.msra.mxu0 0.0
        %1662 = vmatprep.subr.mxu0 0.0
        %1663 = vmatpush2.msra.mxu0 0.0
        %1664 = vmatprep.subr.mxu0 0.0
        %1665 = vmatpush2.msra.mxu0 0.0
        %1666 = vmatprep.subr.mxu0 0.0
        %1667 = vmatpush2.msra.mxu0 0.0
        %1668 = vmatprep.subr.mxu0 0.0
        %1669 = vmatpush2.msra.mxu0 0.0
        %1670 = vmatprep.subr.mxu0 0.0
        %1671 = vmatpush2.msra.mxu0 0.0
        %1672 = vmatprep.subr.mxu0 0.0
        %1673 = vmatpush2.msra.mxu0 0.0
        %1674 = vmatprep.subr.mxu0 0.0
        %1675 = vmatpush2.msra.mxu0 0.0
        %1676 = vmatprep.subr.mxu0 0.0
        %1677 = vmatpush2.msra.mxu0 0.0
        %1678 = vmatprep.subr.mxu0 0.0
        %1679 = vmatpush2.msra.mxu0 0.0
        %1680 = vmatprep.subr.mxu0 0.0
        %1681 = vmatpush2.msra.mxu0 0.0
        %1682 = vmatprep.subr.mxu0 0.0
        %1683 = vmatpush2.msra.mxu0 0.0
        %1684 = vmatprep.subr.mxu0 0.0
        %1685 = vmatpush2.msra.mxu0 0.0
        %1686 = vmatprep.subr.mxu0 0.0
        %1687 = vmatpush2.msra.mxu0 0.0
        %1688 = vmatprep.mubr.f32.mxu0 0.0
        %1689 = vmatmul.mubr.f32.gmra.mxu0 %v1606
        %v1690 = vpop.f32.mrf.mxu0
        %v1691 = vadd.f32 0.0, %v1690
        %v1692 = vpop.f32.mrf.mxu0
        %1693 = vmatprep.mubr.f32.mxu0 0.0
        %1694 = vmatmul.mubr.f32.gmra.mxu0 %v1605
        %v1695 = vpop.f32.mrf.mxu0
        %v1696 = vadd.f32 0.0, %v1695
        %v1697 = vpop.f32.mrf.mxu0
        %1698 = vmatprep.mubr.f32.mxu0 0.0
        %1699 = vmatmul.mubr.f32.gmra.mxu0 %v1604
        %v1700 = vpop.f32.mrf.mxu0
        %v1701 = vadd.f32 0.0, %v1700
        %v1702 = vpop.f32.mrf.mxu0
        %1703 = vmatprep.mubr.f32.mxu0 0.0
        %1704 = vmatmul.mubr.f32.gmra.mxu0 %v1603
        %v1705 = vpop.f32.mrf.mxu0
        %v1706 = vadd.f32 0.0, %v1705
        %v1707 = vpop.f32.mrf.mxu0
        %1708 = vmatprep.mubr.f32.mxu0 0.0
        %1709 = vmatmul.mubr.f32.gmra.mxu0 %v1602
        %v1710 = vpop.f32.mrf.mxu0
        %v1711 = vadd.f32 0.0, %v1710
        %v1712 = vpop.f32.mrf.mxu0
        %1713 = vmatprep.mubr.f32.mxu0 0.0
        %1714 = vmatmul.mubr.f32.gmra.mxu0 %v1601
        %v1715 = vpop.f32.mrf.mxu0
        %v1716 = vadd.f32 0.0, %v1715
        %v1717 = vpop.f32.mrf.mxu0
        %1718 = vmatprep.mubr.f32.mxu0 0.0
        %1719 = vmatmul.mubr.f32.gmra.mxu0 %v1600
        %v1720 = vpop.f32.mrf.mxu0
        %v1721 = vadd.f32 0.0, %v1720
        %v1722 = vpop.f32.mrf.mxu0
        %1723 = vmatprep.mubr.f32.mxu0 0.0
        %1724 = vmatmul.mubr.f32.gmra.mxu0 %v1599
        %v1725 = vpop.f32.mrf.mxu0
        %v1726 = vadd.f32 0.0, %v1725
        %v1727 = vpop.f32.mrf.mxu0
        %1728 = vmatprep.mubr.f32.mxu0 0.0
        %1729 = vmatmul.mubr.f32.gmra.mxu0 %v1598
        %v1730 = vpop.f32.mrf.mxu0
        %v1731 = vadd.f32 0.0, %v1730
        %v1732 = vpop.f32.mrf.mxu0
        %1733 = vmatprep.mubr.f32.mxu0 0.0
        %1734 = vmatmul.mubr.f32.gmra.mxu0 %v1597
        %v1735 = vpop.f32.mrf.mxu0
        %v1736 = vadd.f32 0.0, %v1735
        %v1737 = vpop.f32.mrf.mxu0
        %1738 = vmatprep.mubr.f32.mxu0 0.0
        %1739 = vmatmul.mubr.f32.gmra.mxu0 %v1596
        %v1740 = vpop.f32.mrf.mxu0
        %v1741 = vadd.f32 0.0, %v1740
        %v1742 = vpop.f32.mrf.mxu0
        %1743 = vmatprep.mubr.f32.mxu0 0.0
        %1744 = vmatmul.mubr.f32.gmra.mxu0 %v1595
        %v1745 = vpop.f32.mrf.mxu0
        %v1746 = vadd.f32 0.0, %v1745
        %v1747 = vpop.f32.mrf.mxu0
        %1748 = vmatprep.mubr.f32.mxu0 0.0
        %1749 = vmatmul.mubr.f32.gmra.mxu0 %v1594
        %v1750 = vpop.f32.mrf.mxu0
        %v1751 = vadd.f32 0.0, %v1750
        %v1752 = vpop.f32.mrf.mxu0
        %1753 = vmatprep.mubr.f32.mxu0 0.0
        %1754 = vmatmul.mubr.f32.gmra.mxu0 %v1593
        %v1755 = vpop.f32.mrf.mxu0
        %v1756 = vadd.f32 0.0, %v1755
        %v1757 = vpop.f32.mrf.mxu0
        %1758 = vmatprep.mubr.f32.mxu0 0.0
        %1759 = vmatmul.mubr.f32.gmra.mxu0 %v1592
        %v1760 = vpop.f32.mrf.mxu0
        %v1761 = vadd.f32 0.0, %v1760
        %v1762 = vpop.f32.mrf.mxu0
        %1763 = vmatprep.mubr.f32.mxu0 0.0
        %1764 = vmatmul.mubr.f32.gmra.mxu0 %v1591
        %v1765 = vpop.f32.mrf.mxu0
        %v1766 = vadd.f32 0.0, %v1765
        %v1767 = vpop.f32.mrf.mxu0
        %1768 = vmatprep.mubr.f32.mxu0 0.0
        %1769 = vmatmul.mubr.f32.gmra.mxu0 %v1590
        %v1770 = vpop.f32.mrf.mxu0
        %v1771 = vadd.f32 0.0, %v1770
        %v1772 = vpop.f32.mrf.mxu0
        %1773 = vmatprep.mubr.f32.mxu0 0.0
        %1774 = vmatmul.mubr.f32.gmra.mxu0 %v1589
        %v1775 = vpop.f32.mrf.mxu0
        %v1776 = vadd.f32 0.0, %v1775
        %v1777 = vpop.f32.mrf.mxu0
        %1778 = vmatprep.mubr.f32.mxu0 0.0
        %1779 = vmatmul.mubr.f32.gmra.mxu0 %v1588
        %v1780 = vpop.f32.mrf.mxu0
        %v1781 = vadd.f32 0.0, %v1780
        %v1782 = vpop.f32.mrf.mxu0
        %1783 = vmatprep.mubr.f32.mxu0 0.0
        %1784 = vmatmul.mubr.f32.gmra.mxu0 %v1587
        %v1785 = vpop.f32.mrf.mxu0
        %v1786 = vadd.f32 0.0, %v1785
        %v1787 = vpop.f32.mrf.mxu0
        %1788 = vmatprep.mubr.f32.mxu0 0.0
        %1789 = vmatmul.mubr.f32.gmra.mxu0 %v1586
        %v1790 = vpop.f32.mrf.mxu0
        %v1791 = vadd.f32 0.0, %v1790
        %v1792 = vpop.f32.mrf.mxu0
        %1793 = vmatprep.mubr.f32.mxu0 0.0
        %1794 = vmatmul.mubr.f32.gmra.mxu0 %v1585
        %v1795 = vpop.f32.mrf.mxu0
        %v1796 = vadd.f32 0.0, %v1795
        %v1797 = vpop.f32.mrf.mxu0
        %1798 = vmatprep.mubr.f32.mxu0 0.0
        %1799 = vmatmul.mubr.f32.gmra.mxu0 %v1584
        %v1800 = vpop.f32.mrf.mxu0
        %v1801 = vadd.f32 0.0, %v1800
        %v1802 = vpop.f32.mrf.mxu0
        %1803 = vmatprep.mubr.f32.mxu0 0.0
        %1804 = vmatmul.mubr.f32.gmra.mxu0 %v1583
        %v1805 = vpop.f32.mrf.mxu0
        %v1806 = vadd.f32 0.0, %v1805
        %v1807 = vpop.f32.mrf.mxu0
        %1808 = vmatprep.mubr.f32.mxu0 0.0
        %1809 = vmatmul.mubr.f32.gmra.mxu0 %v1582
        %v1810 = vpop.f32.mrf.mxu0
        %v1811 = vadd.f32 0.0, %v1810
        %v1812 = vpop.f32.mrf.mxu0
        %1813 = vmatprep.mubr.f32.mxu0 0.0
        %1814 = vmatmul.mubr.f32.gmra.mxu0 %v1581
        %v1815 = vpop.f32.mrf.mxu0
        %v1816 = vadd.f32 0.0, %v1815
        %v1817 = vpop.f32.mrf.mxu0
        %1818 = vmatprep.mubr.f32.mxu0 0.0
        %1819 = vmatmul.mubr.f32.gmra.mxu0 %v1580
        %v1820 = vpop.f32.mrf.mxu0
        %v1821 = vadd.f32 0.0, %v1820
        %v1822 = vpop.f32.mrf.mxu0
        %1823 = vmatprep.mubr.f32.mxu0 0.0
        %1824 = vmatmul.mubr.f32.gmra.mxu0 %v1579
        %v1825 = vpop.f32.mrf.mxu0
        %v1826 = vadd.f32 0.0, %v1825
        %v1827 = vpop.f32.mrf.mxu0
        %1828 = vmatprep.mubr.f32.mxu0 0.0
        %1829 = vmatmul.mubr.f32.gmra.mxu0 %v1578
        %v1830 = vpop.f32.mrf.mxu0
        %v1831 = vadd.f32 0.0, %v1830
        %v1832 = vpop.f32.mrf.mxu0
        %1833 = vmatprep.mubr.f32.mxu0 0.0
        %1834 = vmatmul.mubr.f32.gmra.mxu0 %v1577
        %v1835 = vpop.f32.mrf.mxu0
        %v1836 = vadd.f32 0.0, %v1835
        %v1837 = vpop.f32.mrf.mxu0
        %1838 = vmatprep.mubr.f32.mxu0 0.0
        %1839 = vmatmul.mubr.f32.gmra.mxu0 %v1576
        %v1840 = vpop.f32.mrf.mxu0
        %v1841 = vadd.f32 0.0, %v1840
        %v1842 = vpop.f32.mrf.mxu0
        %1843 = vmatprep.mubr.f32.mxu0 0.0
        %1844 = vmatmul.mubr.f32.gmra.mxu0 %v1575
        %v1845 = vpop.f32.mrf.mxu0
        %v1846 = vadd.f32 0.0, %v1845
        %v1847 = vpop.f32.mrf.mxu0
        %1848 = vdwg.mxu0
        %v1849 = vadd.f32 %v1495, %v1691
        %v1850 = vadd.f32 %v1496, %v1696
        %v1851 = vadd.f32 %v1497, %v1701
        %v1852 = vadd.f32 %v1498, %v1706
        %v1853 = vadd.f32 %v1499, %v1711
        %v1854 = vadd.f32 %v1500, %v1716
        %v1855 = vadd.f32 %v1501, %v1721
        %v1856 = vadd.f32 %v1502, %v1726
        %v1857 = vadd.f32 %v1503, %v1731
        %v1858 = vadd.f32 %v1504, %v1736
        %v1859 = vadd.f32 %v1505, %v1741
        %v1860 = vadd.f32 %v1506, %v1746
        %v1861 = vadd.f32 %v1507, %v1751
        %v1862 = vadd.f32 %v1508, %v1756
        %v1863 = vadd.f32 %v1509, %v1761
        %v1864 = vadd.f32 %v1510, %v1766
        %v1865 = vadd.f32 %v1511, %v1771
        %v1866 = vadd.f32 %v1512, %v1776
        %v1867 = vadd.f32 %v1513, %v1781
        %v1868 = vadd.f32 %v1514, %v1786
        %v1869 = vadd.f32 %v1515, %v1791
        %v1870 = vadd.f32 %v1516, %v1796
        %v1871 = vadd.f32 %v1517, %v1801
        %v1872 = vadd.f32 %v1518, %v1806
        %v1873 = vadd.f32 %v1519, %v1811
        %v1874 = vadd.f32 %v1520, %v1816
        %v1875 = vadd.f32 %v1521, %v1821
        %v1876 = vadd.f32 %v1522, %v1826
        %v1877 = vadd.f32 %v1523, %v1831
        %v1878 = vadd.f32 %v1524, %v1836
        %v1879 = vadd.f32 %v1525, %v1841
        %v1880 = vadd.f32 %v1526, %v1846
        %v1881 = vrot.slane %v1205, 2
        %v1882 = vrot.slane %v1206, 2
        %v1883 = vrot.slane %v1207, 2
        %v1884 = vrot.slane %v1208, 2
        %v1885 = vrot.slane %v1209, 2
        %v1886 = vrot.slane %v1210, 2
        %v1887 = vrot.slane %v1211, 2
        %v1888 = vrot.slane %v1212, 2
        %v1889 = vrot.slane %v1213, 2
        %v1890 = vrot.slane %v1214, 2
        %v1891 = vrot.slane %v1215, 2
        %v1892 = vrot.slane %v1216, 2
        %v1893 = vrot.slane %v1217, 2
        %v1894 = vrot.slane %v1218, 2
        %v1895 = vrot.slane %v1219, 2
        %v1896 = vrot.slane %v1220, 2
        %v1897 = vrot.slane %v1221, 2
        %v1898 = vrot.slane %v1222, 2
        %v1899 = vrot.slane %v1223, 2
        %v1900 = vrot.slane %v1224, 2
        %v1901 = vrot.slane %v1225, 2
        %v1902 = vrot.slane %v1226, 2
        %v1903 = vrot.slane %v1227, 2
        %v1904 = vrot.slane %v1228, 2
        %v1905 = vrot.slane %v1229, 2
        %v1906 = vrot.slane %v1230, 2
        %v1907 = vrot.slane %v1231, 2
        %v1908 = vrot.slane %v1232, 2
        %v1909 = vrot.slane %v1233, 2
        %v1910 = vrot.slane %v1234, 2
        %v1911 = vrot.slane %v1235, 2
        %v1912 = vrot.slane %v1236, 2
        %v1913 = vrot.slane %v1237, 2
        %v1914 = vrot.slane %v1238, 2
        %v1915 = vrot.slane %v1239, 2
        %v1916 = vrot.slane %v1240, 2
        %v1917 = vrot.slane %v1241, 2
        %v1918 = vrot.slane %v1242, 2
        %v1919 = vrot.slane %v1243, 2
        %v1920 = vrot.slane %v1244, 2
        %v1921 = vrot.slane %v1245, 2
        %v1922 = vrot.slane %v1246, 2
        %v1923 = vrot.slane %v1247, 2
        %v1924 = vrot.slane %v1248, 2
        %v1925 = vrot.slane %v1249, 2
        %v1926 = vrot.slane %v1250, 2
        %v1927 = vrot.slane %v1251, 2
        %v1928 = vrot.slane %v1252, 2
        %v1929 = vsel %vm896, %v1927, %v1928
        %v1930 = vsel %vm896, %v1926, %v1927
        %v1931 = vsel %vm896, %v1924, %v1925
        %v1932 = vsel %vm896, %v1923, %v1924
        %v1933 = vsel %vm896, %v1921, %v1922
        %v1934 = vsel %vm896, %v1920, %v1921
        %v1935 = vsel %vm896, %v1918, %v1919
        %v1936 = vsel %vm896, %v1917, %v1918
        %v1937 = vsel %vm896, %v1915, %v1916
        %v1938 = vsel %vm896, %v1914, %v1915
        %v1939 = vsel %vm896, %v1912, %v1913
        %v1940 = vsel %vm896, %v1911, %v1912
        %v1941 = vsel %vm896, %v1909, %v1910
        %v1942 = vsel %vm896, %v1908, %v1909
        %v1943 = vsel %vm896, %v1906, %v1907
        %v1944 = vsel %vm896, %v1905, %v1906
        %v1945 = vsel %vm896, %v1903, %v1904
        %v1946 = vsel %vm896, %v1902, %v1903
        %v1947 = vsel %vm896, %v1900, %v1901
        %v1948 = vsel %vm896, %v1899, %v1900
        %v1949 = vsel %vm896, %v1897, %v1898
        %v1950 = vsel %vm896, %v1896, %v1897
        %v1951 = vsel %vm896, %v1894, %v1895
        %v1952 = vsel %vm896, %v1893, %v1894
        %v1953 = vsel %vm896, %v1891, %v1892
        %v1954 = vsel %vm896, %v1890, %v1891
        %v1955 = vsel %vm896, %v1888, %v1889
        %v1956 = vsel %vm896, %v1887, %v1888
        %v1957 = vsel %vm896, %v1885, %v1886
        %v1958 = vsel %vm896, %v1884, %v1885
        %v1959 = vsel %vm896, %v1882, %v1883
        %v1960 = vsel %vm896, %v1881, %v1882
        %s1961 = scalar_lea.vmem [#allocation4], 640
        %v1962 = vld [vmem:[%s1961] sm:$0xff]
        %v1963 = vld [vmem:[%s1961 + $0x8] sm:$0xff]
        %v1964 = vld [vmem:[%s1961 + $0x10] sm:$0xff]
        %v1965 = vld [vmem:[%s1961 + $0x18] sm:$0xff]
        %v1966 = vld [vmem:[%s1961 + $0x20] sm:$0xff]
        %v1967 = vld [vmem:[%s1961 + $0x28] sm:$0xff]
        %v1968 = vld [vmem:[%s1961 + $0x30] sm:$0xff]
        %v1969 = vld [vmem:[%s1961 + $0x38] sm:$0xff]
        %v1970 = vld [vmem:[%s1961 + $0x40] sm:$0xff]
        %v1971 = vld [vmem:[%s1961 + $0x48] sm:$0xff]
        %v1972 = vld [vmem:[%s1961 + $0x50] sm:$0xff]
        %v1973 = vld [vmem:[%s1961 + $0x58] sm:$0xff]
        %v1974 = vld [vmem:[%s1961 + $0x60] sm:$0xff]
        %v1975 = vld [vmem:[%s1961 + $0x68] sm:$0xff]
        %v1976 = vld [vmem:[%s1961 + $0x70] sm:$0xff]
        %v1977 = vld [vmem:[%s1961 + $0x78] sm:$0xff]
        %1978 = vmatprep.subr.mxu0 0.0
        %1979 = vmatpush1.msra.mxu0 %v1977
        %1980 = vmatprep.subr.mxu0 0.0
        %1981 = vmatpush1.msra.mxu0 %v1976
        %1982 = vmatprep.subr.mxu0 0.0
        %1983 = vmatpush1.msra.mxu0 %v1975
        %1984 = vmatprep.subr.mxu0 0.0
        %1985 = vmatpush1.msra.mxu0 %v1974
        %1986 = vmatprep.subr.mxu0 0.0
        %1987 = vmatpush1.msra.mxu0 %v1973
        %1988 = vmatprep.subr.mxu0 0.0
        %1989 = vmatpush1.msra.mxu0 %v1972
        %1990 = vmatprep.subr.mxu0 0.0
        %1991 = vmatpush1.msra.mxu0 %v1971
        %1992 = vmatprep.subr.mxu0 0.0
        %1993 = vmatpush1.msra.mxu0 %v1970
        %1994 = vmatprep.subr.mxu0 0.0
        %1995 = vmatpush1.msra.mxu0 %v1969
        %1996 = vmatprep.subr.mxu0 0.0
        %1997 = vmatpush1.msra.mxu0 %v1968
        %1998 = vmatprep.subr.mxu0 0.0
        %1999 = vmatpush1.msra.mxu0 %v1967
        %2000 = vmatprep.subr.mxu0 0.0
        %2001 = vmatpush1.msra.mxu0 %v1966
        %2002 = vmatprep.subr.mxu0 0.0
        %2003 = vmatpush1.msra.mxu0 %v1965
        %2004 = vmatprep.subr.mxu0 0.0
        %2005 = vmatpush1.msra.mxu0 %v1964
        %2006 = vmatprep.subr.mxu0 0.0
        %2007 = vmatpush1.msra.mxu0 %v1963
        %2008 = vmatprep.subr.mxu0 0.0
        %2009 = vmatpush1.msra.mxu0 %v1962
        %2010 = vmatprep.subr.mxu0 0.0
        %2011 = vmatpush2.msra.mxu0 0.0
        %2012 = vmatprep.subr.mxu0 0.0
        %2013 = vmatpush2.msra.mxu0 0.0
        %2014 = vmatprep.subr.mxu0 0.0
        %2015 = vmatpush2.msra.mxu0 0.0
        %2016 = vmatprep.subr.mxu0 0.0
        %2017 = vmatpush2.msra.mxu0 0.0
        %2018 = vmatprep.subr.mxu0 0.0
        %2019 = vmatpush2.msra.mxu0 0.0
        %2020 = vmatprep.subr.mxu0 0.0
        %2021 = vmatpush2.msra.mxu0 0.0
        %2022 = vmatprep.subr.mxu0 0.0
        %2023 = vmatpush2.msra.mxu0 0.0
        %2024 = vmatprep.subr.mxu0 0.0
        %2025 = vmatpush2.msra.mxu0 0.0
        %2026 = vmatprep.subr.mxu0 0.0
        %2027 = vmatpush2.msra.mxu0 0.0
        %2028 = vmatprep.subr.mxu0 0.0
        %2029 = vmatpush2.msra.mxu0 0.0
        %2030 = vmatprep.subr.mxu0 0.0
        %2031 = vmatpush2.msra.mxu0 0.0
        %2032 = vmatprep.subr.mxu0 0.0
        %2033 = vmatpush2.msra.mxu0 0.0
        %2034 = vmatprep.subr.mxu0 0.0
        %2035 = vmatpush2.msra.mxu0 0.0
        %2036 = vmatprep.subr.mxu0 0.0
        %2037 = vmatpush2.msra.mxu0 0.0
        %2038 = vmatprep.subr.mxu0 0.0
        %2039 = vmatpush2.msra.mxu0 0.0
        %2040 = vmatprep.subr.mxu0 0.0
        %2041 = vmatpush2.msra.mxu0 0.0
        %2042 = vmatprep.mubr.f32.mxu0 0.0
        %2043 = vmatmul.mubr.f32.gmra.mxu0 %v1960
        %v2044 = vpop.f32.mrf.mxu0
        %v2045 = vadd.f32 0.0, %v2044
        %v2046 = vpop.f32.mrf.mxu0
        %2047 = vmatprep.mubr.f32.mxu0 0.0
        %2048 = vmatmul.mubr.f32.gmra.mxu0 %v1959
        %v2049 = vpop.f32.mrf.mxu0
        %v2050 = vadd.f32 0.0, %v2049
        %v2051 = vpop.f32.mrf.mxu0
        %2052 = vmatprep.mubr.f32.mxu0 0.0
        %2053 = vmatmul.mubr.f32.gmra.mxu0 %v1958
        %v2054 = vpop.f32.mrf.mxu0
        %v2055 = vadd.f32 0.0, %v2054
        %v2056 = vpop.f32.mrf.mxu0
        %2057 = vmatprep.mubr.f32.mxu0 0.0
        %2058 = vmatmul.mubr.f32.gmra.mxu0 %v1957
        %v2059 = vpop.f32.mrf.mxu0
        %v2060 = vadd.f32 0.0, %v2059
        %v2061 = vpop.f32.mrf.mxu0
        %2062 = vmatprep.mubr.f32.mxu0 0.0
        %2063 = vmatmul.mubr.f32.gmra.mxu0 %v1956
        %v2064 = vpop.f32.mrf.mxu0
        %v2065 = vadd.f32 0.0, %v2064
        %v2066 = vpop.f32.mrf.mxu0
        %2067 = vmatprep.mubr.f32.mxu0 0.0
        %2068 = vmatmul.mubr.f32.gmra.mxu0 %v1955
        %v2069 = vpop.f32.mrf.mxu0
        %v2070 = vadd.f32 0.0, %v2069
        %v2071 = vpop.f32.mrf.mxu0
        %2072 = vmatprep.mubr.f32.mxu0 0.0
        %2073 = vmatmul.mubr.f32.gmra.mxu0 %v1954
        %v2074 = vpop.f32.mrf.mxu0
        %v2075 = vadd.f32 0.0, %v2074
        %v2076 = vpop.f32.mrf.mxu0
        %2077 = vmatprep.mubr.f32.mxu0 0.0
        %2078 = vmatmul.mubr.f32.gmra.mxu0 %v1953
        %v2079 = vpop.f32.mrf.mxu0
        %v2080 = vadd.f32 0.0, %v2079
        %v2081 = vpop.f32.mrf.mxu0
        %2082 = vmatprep.mubr.f32.mxu0 0.0
        %2083 = vmatmul.mubr.f32.gmra.mxu0 %v1952
        %v2084 = vpop.f32.mrf.mxu0
        %v2085 = vadd.f32 0.0, %v2084
        %v2086 = vpop.f32.mrf.mxu0
        %2087 = vmatprep.mubr.f32.mxu0 0.0
        %2088 = vmatmul.mubr.f32.gmra.mxu0 %v1951
        %v2089 = vpop.f32.mrf.mxu0
        %v2090 = vadd.f32 0.0, %v2089
        %v2091 = vpop.f32.mrf.mxu0
        %2092 = vmatprep.mubr.f32.mxu0 0.0
        %2093 = vmatmul.mubr.f32.gmra.mxu0 %v1950
        %v2094 = vpop.f32.mrf.mxu0
        %v2095 = vadd.f32 0.0, %v2094
        %v2096 = vpop.f32.mrf.mxu0
        %2097 = vmatprep.mubr.f32.mxu0 0.0
        %2098 = vmatmul.mubr.f32.gmra.mxu0 %v1949
        %v2099 = vpop.f32.mrf.mxu0
        %v2100 = vadd.f32 0.0, %v2099
        %v2101 = vpop.f32.mrf.mxu0
        %2102 = vmatprep.mubr.f32.mxu0 0.0
        %2103 = vmatmul.mubr.f32.gmra.mxu0 %v1948
        %v2104 = vpop.f32.mrf.mxu0
        %v2105 = vadd.f32 0.0, %v2104
        %v2106 = vpop.f32.mrf.mxu0
        %2107 = vmatprep.mubr.f32.mxu0 0.0
        %2108 = vmatmul.mubr.f32.gmra.mxu0 %v1947
        %v2109 = vpop.f32.mrf.mxu0
        %v2110 = vadd.f32 0.0, %v2109
        %v2111 = vpop.f32.mrf.mxu0
        %2112 = vmatprep.mubr.f32.mxu0 0.0
        %2113 = vmatmul.mubr.f32.gmra.mxu0 %v1946
        %v2114 = vpop.f32.mrf.mxu0
        %v2115 = vadd.f32 0.0, %v2114
        %v2116 = vpop.f32.mrf.mxu0
        %2117 = vmatprep.mubr.f32.mxu0 0.0
        %2118 = vmatmul.mubr.f32.gmra.mxu0 %v1945
        %v2119 = vpop.f32.mrf.mxu0
        %v2120 = vadd.f32 0.0, %v2119
        %v2121 = vpop.f32.mrf.mxu0
        %2122 = vmatprep.mubr.f32.mxu0 0.0
        %2123 = vmatmul.mubr.f32.gmra.mxu0 %v1944
        %v2124 = vpop.f32.mrf.mxu0
        %v2125 = vadd.f32 0.0, %v2124
        %v2126 = vpop.f32.mrf.mxu0
        %2127 = vmatprep.mubr.f32.mxu0 0.0
        %2128 = vmatmul.mubr.f32.gmra.mxu0 %v1943
        %v2129 = vpop.f32.mrf.mxu0
        %v2130 = vadd.f32 0.0, %v2129
        %v2131 = vpop.f32.mrf.mxu0
        %2132 = vmatprep.mubr.f32.mxu0 0.0
        %2133 = vmatmul.mubr.f32.gmra.mxu0 %v1942
        %v2134 = vpop.f32.mrf.mxu0
        %v2135 = vadd.f32 0.0, %v2134
        %v2136 = vpop.f32.mrf.mxu0
        %2137 = vmatprep.mubr.f32.mxu0 0.0
        %2138 = vmatmul.mubr.f32.gmra.mxu0 %v1941
        %v2139 = vpop.f32.mrf.mxu0
        %v2140 = vadd.f32 0.0, %v2139
        %v2141 = vpop.f32.mrf.mxu0
        %2142 = vmatprep.mubr.f32.mxu0 0.0
        %2143 = vmatmul.mubr.f32.gmra.mxu0 %v1940
        %v2144 = vpop.f32.mrf.mxu0
        %v2145 = vadd.f32 0.0, %v2144
        %v2146 = vpop.f32.mrf.mxu0
        %2147 = vmatprep.mubr.f32.mxu0 0.0
        %2148 = vmatmul.mubr.f32.gmra.mxu0 %v1939
        %v2149 = vpop.f32.mrf.mxu0
        %v2150 = vadd.f32 0.0, %v2149
        %v2151 = vpop.f32.mrf.mxu0
        %2152 = vmatprep.mubr.f32.mxu0 0.0
        %2153 = vmatmul.mubr.f32.gmra.mxu0 %v1938
        %v2154 = vpop.f32.mrf.mxu0
        %v2155 = vadd.f32 0.0, %v2154
        %v2156 = vpop.f32.mrf.mxu0
        %2157 = vmatprep.mubr.f32.mxu0 0.0
        %2158 = vmatmul.mubr.f32.gmra.mxu0 %v1937
        %v2159 = vpop.f32.mrf.mxu0
        %v2160 = vadd.f32 0.0, %v2159
        %v2161 = vpop.f32.mrf.mxu0
        %2162 = vmatprep.mubr.f32.mxu0 0.0
        %2163 = vmatmul.mubr.f32.gmra.mxu0 %v1936
        %v2164 = vpop.f32.mrf.mxu0
        %v2165 = vadd.f32 0.0, %v2164
        %v2166 = vpop.f32.mrf.mxu0
        %2167 = vmatprep.mubr.f32.mxu0 0.0
        %2168 = vmatmul.mubr.f32.gmra.mxu0 %v1935
        %v2169 = vpop.f32.mrf.mxu0
        %v2170 = vadd.f32 0.0, %v2169
        %v2171 = vpop.f32.mrf.mxu0
        %2172 = vmatprep.mubr.f32.mxu0 0.0
        %2173 = vmatmul.mubr.f32.gmra.mxu0 %v1934
        %v2174 = vpop.f32.mrf.mxu0
        %v2175 = vadd.f32 0.0, %v2174
        %v2176 = vpop.f32.mrf.mxu0
        %2177 = vmatprep.mubr.f32.mxu0 0.0
        %2178 = vmatmul.mubr.f32.gmra.mxu0 %v1933
        %v2179 = vpop.f32.mrf.mxu0
        %v2180 = vadd.f32 0.0, %v2179
        %v2181 = vpop.f32.mrf.mxu0
        %2182 = vmatprep.mubr.f32.mxu0 0.0
        %2183 = vmatmul.mubr.f32.gmra.mxu0 %v1932
        %v2184 = vpop.f32.mrf.mxu0
        %v2185 = vadd.f32 0.0, %v2184
        %v2186 = vpop.f32.mrf.mxu0
        %2187 = vmatprep.mubr.f32.mxu0 0.0
        %2188 = vmatmul.mubr.f32.gmra.mxu0 %v1931
        %v2189 = vpop.f32.mrf.mxu0
        %v2190 = vadd.f32 0.0, %v2189
        %v2191 = vpop.f32.mrf.mxu0
        %2192 = vmatprep.mubr.f32.mxu0 0.0
        %2193 = vmatmul.mubr.f32.gmra.mxu0 %v1930
        %v2194 = vpop.f32.mrf.mxu0
        %v2195 = vadd.f32 0.0, %v2194
        %v2196 = vpop.f32.mrf.mxu0
        %2197 = vmatprep.mubr.f32.mxu0 0.0
        %2198 = vmatmul.mubr.f32.gmra.mxu0 %v1929
        %v2199 = vpop.f32.mrf.mxu0
        %v2200 = vadd.f32 0.0, %v2199
        %v2201 = vpop.f32.mrf.mxu0
        %2202 = vdwg.mxu0
        %v2203 = vadd.f32 %v1849, %v2045
        %v2204 = vadd.f32 %v1850, %v2050
        %v2205 = vadd.f32 %v1851, %v2055
        %v2206 = vadd.f32 %v1852, %v2060
        %v2207 = vadd.f32 %v1853, %v2065
        %v2208 = vadd.f32 %v1854, %v2070
        %v2209 = vadd.f32 %v1855, %v2075
        %v2210 = vadd.f32 %v1856, %v2080
        %v2211 = vadd.f32 %v1857, %v2085
        %v2212 = vadd.f32 %v1858, %v2090
        %v2213 = vadd.f32 %v1859, %v2095
        %v2214 = vadd.f32 %v1860, %v2100
        %v2215 = vadd.f32 %v1861, %v2105
        %v2216 = vadd.f32 %v1862, %v2110
        %v2217 = vadd.f32 %v1863, %v2115
        %v2218 = vadd.f32 %v1864, %v2120
        %v2219 = vadd.f32 %v1865, %v2125
        %v2220 = vadd.f32 %v1866, %v2130
        %v2221 = vadd.f32 %v1867, %v2135
        %v2222 = vadd.f32 %v1868, %v2140
        %v2223 = vadd.f32 %v1869, %v2145
        %v2224 = vadd.f32 %v1870, %v2150
        %v2225 = vadd.f32 %v1871, %v2155
        %v2226 = vadd.f32 %v1872, %v2160
        %v2227 = vadd.f32 %v1873, %v2165
        %v2228 = vadd.f32 %v1874, %v2170
        %v2229 = vadd.f32 %v1875, %v2175
        %v2230 = vadd.f32 %v1876, %v2180
        %v2231 = vadd.f32 %v1877, %v2185
        %v2232 = vadd.f32 %v1878, %v2190
        %v2233 = vadd.f32 %v1879, %v2195
        %v2234 = vadd.f32 %v1880, %v2200
        %s2235 = sadd.s32 48, %s232
        %s2236 = scalar_lea.vmem [#allocation2], %s2235
        %v2237 = vld [vmem:[%s2236] sm:$0xff]
        %v2238 = vld [vmem:[%s2236 + $0x8] sm:$0xff]
        %v2239 = vld [vmem:[%s2236 + $0x10] sm:$0xff]
        %v2240 = vld [vmem:[%s2236 + $0x18] sm:$0xff]
        %v2241 = vld [vmem:[%s2236 + $0x20] sm:$0xff]
        %v2242 = vld [vmem:[%s2236 + $0x28] sm:$0xff]
        %v2243 = vld [vmem:[%s2236 + $0x30] sm:$0xff]
        %v2244 = vld [vmem:[%s2236 + $0x38] sm:$0xff]
        %v2245 = vld [vmem:[%s2236 + $0x40] sm:$0xff]
        %v2246 = vld [vmem:[%s2236 + $0x48] sm:$0xff]
        %v2247 = vld [vmem:[%s2236 + $0x50] sm:$0xff]
        %v2248 = vld [vmem:[%s2236 + $0x58] sm:$0xff]
        %v2249 = vld [vmem:[%s2236 + $0x60] sm:$0xff]
        %v2250 = vld [vmem:[%s2236 + $0x68] sm:$0xff]
        %v2251 = vld [vmem:[%s2236 + $0x70] sm:$0xff]
        %v2252 = vld [vmem:[%s2236 + $0x78] sm:$0xff]
        %v2253 = vld [vmem:[%s2236 + $0x80] sm:$0xff]
        %v2254 = vld [vmem:[%s2236 + $0x88] sm:$0xff]
        %v2255 = vld [vmem:[%s2236 + $0x90] sm:$0xff]
        %v2256 = vld [vmem:[%s2236 + $0x98] sm:$0xff]
        %v2257 = vld [vmem:[%s2236 + $0xa0] sm:$0xff]
        %v2258 = vld [vmem:[%s2236 + $0xa8] sm:$0xff]
        %v2259 = vld [vmem:[%s2236 + $0xb0] sm:$0xff]
        %v2260 = vld [vmem:[%s2236 + $0xb8] sm:$0xff]
        %v2261 = vld [vmem:[%s2236 + $0xc0] sm:$0xff]
        %v2262 = vld [vmem:[%s2236 + $0xc8] sm:$0xff]
        %v2263 = vld [vmem:[%s2236 + $0xd0] sm:$0xff]
        %v2264 = vld [vmem:[%s2236 + $0xd8] sm:$0xff]
        %v2265 = vld [vmem:[%s2236 + $0xe0] sm:$0xff]
        %v2266 = vld [vmem:[%s2236 + $0xe8] sm:$0xff]
        %v2267 = vld [vmem:[%s2236 + $0xf0] sm:$0xff]
        %v2268 = vld [vmem:[%s2236 + $0xf8] sm:$0xff]
        %v2269 = vld [vmem:[%s2236 + $0x100] sm:$0xff]
        %v2270 = vld [vmem:[%s2236 + $0x108] sm:$0xff]
        %v2271 = vld [vmem:[%s2236 + $0x110] sm:$0xff]
        %v2272 = vld [vmem:[%s2236 + $0x118] sm:$0xff]
        %v2273 = vld [vmem:[%s2236 + $0x120] sm:$0xff]
        %v2274 = vld [vmem:[%s2236 + $0x128] sm:$0xff]
        %v2275 = vld [vmem:[%s2236 + $0x130] sm:$0xff]
        %v2276 = vld [vmem:[%s2236 + $0x138] sm:$0xff]
        %v2277 = vld [vmem:[%s2236 + $0x140] sm:$0xff]
        %v2278 = vld [vmem:[%s2236 + $0x148] sm:$0xff]
        %v2279 = vld [vmem:[%s2236 + $0x150] sm:$0xff]
        %v2280 = vld [vmem:[%s2236 + $0x158] sm:$0xff]
        %v2281 = vld [vmem:[%s2236 + $0x160] sm:$0xff]
        %v2282 = vld [vmem:[%s2236 + $0x168] sm:$0xff]
        %v2283 = vld [vmem:[%s2236 + $0x170] sm:$0xff]
        %v2284 = vld [vmem:[%s2236 + $0x178] sm:$0xff]
        %s2285 = scalar_lea.vmem [#allocation4], 768
        %v2286 = vld [vmem:[%s2285] sm:$0xff]
        %v2287 = vld [vmem:[%s2285 + $0x8] sm:$0xff]
        %v2288 = vld [vmem:[%s2285 + $0x10] sm:$0xff]
        %v2289 = vld [vmem:[%s2285 + $0x18] sm:$0xff]
        %v2290 = vld [vmem:[%s2285 + $0x20] sm:$0xff]
        %v2291 = vld [vmem:[%s2285 + $0x28] sm:$0xff]
        %v2292 = vld [vmem:[%s2285 + $0x30] sm:$0xff]
        %v2293 = vld [vmem:[%s2285 + $0x38] sm:$0xff]
        %v2294 = vld [vmem:[%s2285 + $0x40] sm:$0xff]
        %v2295 = vld [vmem:[%s2285 + $0x48] sm:$0xff]
        %v2296 = vld [vmem:[%s2285 + $0x50] sm:$0xff]
        %v2297 = vld [vmem:[%s2285 + $0x58] sm:$0xff]
        %v2298 = vld [vmem:[%s2285 + $0x60] sm:$0xff]
        %v2299 = vld [vmem:[%s2285 + $0x68] sm:$0xff]
        %v2300 = vld [vmem:[%s2285 + $0x70] sm:$0xff]
        %v2301 = vld [vmem:[%s2285 + $0x78] sm:$0xff]
        %2302 = vmatprep.subr.mxu0 0.0
        %2303 = vmatpush1.msra.mxu0 %v2301
        %2304 = vmatprep.subr.mxu0 0.0
        %2305 = vmatpush1.msra.mxu0 %v2300
        %2306 = vmatprep.subr.mxu0 0.0
        %2307 = vmatpush1.msra.mxu0 %v2299
        %2308 = vmatprep.subr.mxu0 0.0
        %2309 = vmatpush1.msra.mxu0 %v2298
        %2310 = vmatprep.subr.mxu0 0.0
        %2311 = vmatpush1.msra.mxu0 %v2297
        %2312 = vmatprep.subr.mxu0 0.0
        %2313 = vmatpush1.msra.mxu0 %v2296
        %2314 = vmatprep.subr.mxu0 0.0
        %2315 = vmatpush1.msra.mxu0 %v2295
        %2316 = vmatprep.subr.mxu0 0.0
        %2317 = vmatpush1.msra.mxu0 %v2294
        %2318 = vmatprep.subr.mxu0 0.0
        %2319 = vmatpush1.msra.mxu0 %v2293
        %2320 = vmatprep.subr.mxu0 0.0
        %2321 = vmatpush1.msra.mxu0 %v2292
        %2322 = vmatprep.subr.mxu0 0.0
        %2323 = vmatpush1.msra.mxu0 %v2291
        %2324 = vmatprep.subr.mxu0 0.0
        %2325 = vmatpush1.msra.mxu0 %v2290
        %2326 = vmatprep.subr.mxu0 0.0
        %2327 = vmatpush1.msra.mxu0 %v2289
        %2328 = vmatprep.subr.mxu0 0.0
        %2329 = vmatpush1.msra.mxu0 %v2288
        %2330 = vmatprep.subr.mxu0 0.0
        %2331 = vmatpush1.msra.mxu0 %v2287
        %2332 = vmatprep.subr.mxu0 0.0
        %2333 = vmatpush1.msra.mxu0 %v2286
        %2334 = vmatprep.subr.mxu0 0.0
        %2335 = vmatpush2.msra.mxu0 0.0
        %2336 = vmatprep.subr.mxu0 0.0
        %2337 = vmatpush2.msra.mxu0 0.0
        %2338 = vmatprep.subr.mxu0 0.0
        %2339 = vmatpush2.msra.mxu0 0.0
        %2340 = vmatprep.subr.mxu0 0.0
        %2341 = vmatpush2.msra.mxu0 0.0
        %2342 = vmatprep.subr.mxu0 0.0
        %2343 = vmatpush2.msra.mxu0 0.0
        %2344 = vmatprep.subr.mxu0 0.0
        %2345 = vmatpush2.msra.mxu0 0.0
        %2346 = vmatprep.subr.mxu0 0.0
        %2347 = vmatpush2.msra.mxu0 0.0
        %2348 = vmatprep.subr.mxu0 0.0
        %2349 = vmatpush2.msra.mxu0 0.0
        %2350 = vmatprep.subr.mxu0 0.0
        %2351 = vmatpush2.msra.mxu0 0.0
        %2352 = vmatprep.subr.mxu0 0.0
        %2353 = vmatpush2.msra.mxu0 0.0
        %2354 = vmatprep.subr.mxu0 0.0
        %2355 = vmatpush2.msra.mxu0 0.0
        %2356 = vmatprep.subr.mxu0 0.0
        %2357 = vmatpush2.msra.mxu0 0.0
        %2358 = vmatprep.subr.mxu0 0.0
        %2359 = vmatpush2.msra.mxu0 0.0
        %2360 = vmatprep.subr.mxu0 0.0
        %2361 = vmatpush2.msra.mxu0 0.0
        %2362 = vmatprep.subr.mxu0 0.0
        %2363 = vmatpush2.msra.mxu0 0.0
        %2364 = vmatprep.subr.mxu0 0.0
        %2365 = vmatpush2.msra.mxu0 0.0
        %2366 = vmatprep.mubr.f32.mxu0 0.0
        %2367 = vmatmul.mubr.f32.gmra.mxu0 %v2237
        %v2368 = vpop.f32.mrf.mxu0
        %v2369 = vadd.f32 0.0, %v2368
        %v2370 = vpop.f32.mrf.mxu0
        %2371 = vmatprep.mubr.f32.mxu0 0.0
        %2372 = vmatmul.mubr.f32.gmra.mxu0 %v2238
        %v2373 = vpop.f32.mrf.mxu0
        %v2374 = vadd.f32 0.0, %v2373
        %v2375 = vpop.f32.mrf.mxu0
        %2376 = vmatprep.mubr.f32.mxu0 0.0
        %2377 = vmatmul.mubr.f32.gmra.mxu0 %v2240
        %v2378 = vpop.f32.mrf.mxu0
        %v2379 = vadd.f32 0.0, %v2378
        %v2380 = vpop.f32.mrf.mxu0
        %2381 = vmatprep.mubr.f32.mxu0 0.0
        %2382 = vmatmul.mubr.f32.gmra.mxu0 %v2241
        %v2383 = vpop.f32.mrf.mxu0
        %v2384 = vadd.f32 0.0, %v2383
        %v2385 = vpop.f32.mrf.mxu0
        %2386 = vmatprep.mubr.f32.mxu0 0.0
        %2387 = vmatmul.mubr.f32.gmra.mxu0 %v2243
        %v2388 = vpop.f32.mrf.mxu0
        %v2389 = vadd.f32 0.0, %v2388
        %v2390 = vpop.f32.mrf.mxu0
        %2391 = vmatprep.mubr.f32.mxu0 0.0
        %2392 = vmatmul.mubr.f32.gmra.mxu0 %v2244
        %v2393 = vpop.f32.mrf.mxu0
        %v2394 = vadd.f32 0.0, %v2393
        %v2395 = vpop.f32.mrf.mxu0
        %2396 = vmatprep.mubr.f32.mxu0 0.0
        %2397 = vmatmul.mubr.f32.gmra.mxu0 %v2246
        %v2398 = vpop.f32.mrf.mxu0
        %v2399 = vadd.f32 0.0, %v2398
        %v2400 = vpop.f32.mrf.mxu0
        %2401 = vmatprep.mubr.f32.mxu0 0.0
        %2402 = vmatmul.mubr.f32.gmra.mxu0 %v2247
        %v2403 = vpop.f32.mrf.mxu0
        %v2404 = vadd.f32 0.0, %v2403
        %v2405 = vpop.f32.mrf.mxu0
        %2406 = vmatprep.mubr.f32.mxu0 0.0
        %2407 = vmatmul.mubr.f32.gmra.mxu0 %v2249
        %v2408 = vpop.f32.mrf.mxu0
        %v2409 = vadd.f32 0.0, %v2408
        %v2410 = vpop.f32.mrf.mxu0
        %2411 = vmatprep.mubr.f32.mxu0 0.0
        %2412 = vmatmul.mubr.f32.gmra.mxu0 %v2250
        %v2413 = vpop.f32.mrf.mxu0
        %v2414 = vadd.f32 0.0, %v2413
        %v2415 = vpop.f32.mrf.mxu0
        %2416 = vmatprep.mubr.f32.mxu0 0.0
        %2417 = vmatmul.mubr.f32.gmra.mxu0 %v2252
        %v2418 = vpop.f32.mrf.mxu0
        %v2419 = vadd.f32 0.0, %v2418
        %v2420 = vpop.f32.mrf.mxu0
        %2421 = vmatprep.mubr.f32.mxu0 0.0
        %2422 = vmatmul.mubr.f32.gmra.mxu0 %v2253
        %v2423 = vpop.f32.mrf.mxu0
        %v2424 = vadd.f32 0.0, %v2423
        %v2425 = vpop.f32.mrf.mxu0
        %2426 = vmatprep.mubr.f32.mxu0 0.0
        %2427 = vmatmul.mubr.f32.gmra.mxu0 %v2255
        %v2428 = vpop.f32.mrf.mxu0
        %v2429 = vadd.f32 0.0, %v2428
        %v2430 = vpop.f32.mrf.mxu0
        %2431 = vmatprep.mubr.f32.mxu0 0.0
        %2432 = vmatmul.mubr.f32.gmra.mxu0 %v2256
        %v2433 = vpop.f32.mrf.mxu0
        %v2434 = vadd.f32 0.0, %v2433
        %v2435 = vpop.f32.mrf.mxu0
        %2436 = vmatprep.mubr.f32.mxu0 0.0
        %2437 = vmatmul.mubr.f32.gmra.mxu0 %v2258
        %v2438 = vpop.f32.mrf.mxu0
        %v2439 = vadd.f32 0.0, %v2438
        %v2440 = vpop.f32.mrf.mxu0
        %2441 = vmatprep.mubr.f32.mxu0 0.0
        %2442 = vmatmul.mubr.f32.gmra.mxu0 %v2259
        %v2443 = vpop.f32.mrf.mxu0
        %v2444 = vadd.f32 0.0, %v2443
        %v2445 = vpop.f32.mrf.mxu0
        %2446 = vmatprep.mubr.f32.mxu0 0.0
        %2447 = vmatmul.mubr.f32.gmra.mxu0 %v2261
        %v2448 = vpop.f32.mrf.mxu0
        %v2449 = vadd.f32 0.0, %v2448
        %v2450 = vpop.f32.mrf.mxu0
        %2451 = vmatprep.mubr.f32.mxu0 0.0
        %2452 = vmatmul.mubr.f32.gmra.mxu0 %v2262
        %v2453 = vpop.f32.mrf.mxu0
        %v2454 = vadd.f32 0.0, %v2453
        %v2455 = vpop.f32.mrf.mxu0
        %2456 = vmatprep.mubr.f32.mxu0 0.0
        %2457 = vmatmul.mubr.f32.gmra.mxu0 %v2264
        %v2458 = vpop.f32.mrf.mxu0
        %v2459 = vadd.f32 0.0, %v2458
        %v2460 = vpop.f32.mrf.mxu0
        %2461 = vmatprep.mubr.f32.mxu0 0.0
        %2462 = vmatmul.mubr.f32.gmra.mxu0 %v2265
        %v2463 = vpop.f32.mrf.mxu0
        %v2464 = vadd.f32 0.0, %v2463
        %v2465 = vpop.f32.mrf.mxu0
        %2466 = vmatprep.mubr.f32.mxu0 0.0
        %2467 = vmatmul.mubr.f32.gmra.mxu0 %v2267
        %v2468 = vpop.f32.mrf.mxu0
        %v2469 = vadd.f32 0.0, %v2468
        %v2470 = vpop.f32.mrf.mxu0
        %2471 = vmatprep.mubr.f32.mxu0 0.0
        %2472 = vmatmul.mubr.f32.gmra.mxu0 %v2268
        %v2473 = vpop.f32.mrf.mxu0
        %v2474 = vadd.f32 0.0, %v2473
        %v2475 = vpop.f32.mrf.mxu0
        %2476 = vmatprep.mubr.f32.mxu0 0.0
        %2477 = vmatmul.mubr.f32.gmra.mxu0 %v2270
        %v2478 = vpop.f32.mrf.mxu0
        %v2479 = vadd.f32 0.0, %v2478
        %v2480 = vpop.f32.mrf.mxu0
        %2481 = vmatprep.mubr.f32.mxu0 0.0
        %2482 = vmatmul.mubr.f32.gmra.mxu0 %v2271
        %v2483 = vpop.f32.mrf.mxu0
        %v2484 = vadd.f32 0.0, %v2483
        %v2485 = vpop.f32.mrf.mxu0
        %2486 = vmatprep.mubr.f32.mxu0 0.0
        %2487 = vmatmul.mubr.f32.gmra.mxu0 %v2273
        %v2488 = vpop.f32.mrf.mxu0
        %v2489 = vadd.f32 0.0, %v2488
        %v2490 = vpop.f32.mrf.mxu0
        %2491 = vmatprep.mubr.f32.mxu0 0.0
        %2492 = vmatmul.mubr.f32.gmra.mxu0 %v2274
        %v2493 = vpop.f32.mrf.mxu0
        %v2494 = vadd.f32 0.0, %v2493
        %v2495 = vpop.f32.mrf.mxu0
        %2496 = vmatprep.mubr.f32.mxu0 0.0
        %2497 = vmatmul.mubr.f32.gmra.mxu0 %v2276
        %v2498 = vpop.f32.mrf.mxu0
        %v2499 = vadd.f32 0.0, %v2498
        %v2500 = vpop.f32.mrf.mxu0
        %2501 = vmatprep.mubr.f32.mxu0 0.0
        %2502 = vmatmul.mubr.f32.gmra.mxu0 %v2277
        %v2503 = vpop.f32.mrf.mxu0
        %v2504 = vadd.f32 0.0, %v2503
        %v2505 = vpop.f32.mrf.mxu0
        %2506 = vmatprep.mubr.f32.mxu0 0.0
        %2507 = vmatmul.mubr.f32.gmra.mxu0 %v2279
        %v2508 = vpop.f32.mrf.mxu0
        %v2509 = vadd.f32 0.0, %v2508
        %v2510 = vpop.f32.mrf.mxu0
        %2511 = vmatprep.mubr.f32.mxu0 0.0
        %2512 = vmatmul.mubr.f32.gmra.mxu0 %v2280
        %v2513 = vpop.f32.mrf.mxu0
        %v2514 = vadd.f32 0.0, %v2513
        %v2515 = vpop.f32.mrf.mxu0
        %2516 = vmatprep.mubr.f32.mxu0 0.0
        %2517 = vmatmul.mubr.f32.gmra.mxu0 %v2282
        %v2518 = vpop.f32.mrf.mxu0
        %v2519 = vadd.f32 0.0, %v2518
        %v2520 = vpop.f32.mrf.mxu0
        %2521 = vmatprep.mubr.f32.mxu0 0.0
        %2522 = vmatmul.mubr.f32.gmra.mxu0 %v2283
        %v2523 = vpop.f32.mrf.mxu0
        %v2524 = vadd.f32 0.0, %v2523
        %v2525 = vpop.f32.mrf.mxu0
        %2526 = vdwg.mxu0
        %v2527 = vadd.f32 %v2203, %v2369
        %v2528 = vadd.f32 %v2204, %v2374
        %v2529 = vadd.f32 %v2205, %v2379
        %v2530 = vadd.f32 %v2206, %v2384
        %v2531 = vadd.f32 %v2207, %v2389
        %v2532 = vadd.f32 %v2208, %v2394
        %v2533 = vadd.f32 %v2209, %v2399
        %v2534 = vadd.f32 %v2210, %v2404
        %v2535 = vadd.f32 %v2211, %v2409
        %v2536 = vadd.f32 %v2212, %v2414
        %v2537 = vadd.f32 %v2213, %v2419
        %v2538 = vadd.f32 %v2214, %v2424
        %v2539 = vadd.f32 %v2215, %v2429
        %v2540 = vadd.f32 %v2216, %v2434
        %v2541 = vadd.f32 %v2217, %v2439
        %v2542 = vadd.f32 %v2218, %v2444
        %v2543 = vadd.f32 %v2219, %v2449
        %v2544 = vadd.f32 %v2220, %v2454
        %v2545 = vadd.f32 %v2221, %v2459
        %v2546 = vadd.f32 %v2222, %v2464
        %v2547 = vadd.f32 %v2223, %v2469
        %v2548 = vadd.f32 %v2224, %v2474
        %v2549 = vadd.f32 %v2225, %v2479
        %v2550 = vadd.f32 %v2226, %v2484
        %v2551 = vadd.f32 %v2227, %v2489
        %v2552 = vadd.f32 %v2228, %v2494
        %v2553 = vadd.f32 %v2229, %v2499
        %v2554 = vadd.f32 %v2230, %v2504
        %v2555 = vadd.f32 %v2231, %v2509
        %v2556 = vadd.f32 %v2232, %v2514
        %v2557 = vadd.f32 %v2233, %v2519
        %v2558 = vadd.f32 %v2234, %v2524
        %v2559 = vrot.slane %v2237, 1
        %v2560 = vrot.slane %v2238, 1
        %v2561 = vrot.slane %v2239, 1
        %v2562 = vrot.slane %v2240, 1
        %v2563 = vrot.slane %v2241, 1
        %v2564 = vrot.slane %v2242, 1
        %v2565 = vrot.slane %v2243, 1
        %v2566 = vrot.slane %v2244, 1
        %v2567 = vrot.slane %v2245, 1
        %v2568 = vrot.slane %v2246, 1
        %v2569 = vrot.slane %v2247, 1
        %v2570 = vrot.slane %v2248, 1
        %v2571 = vrot.slane %v2249, 1
        %v2572 = vrot.slane %v2250, 1
        %v2573 = vrot.slane %v2251, 1
        %v2574 = vrot.slane %v2252, 1
        %v2575 = vrot.slane %v2253, 1
        %v2576 = vrot.slane %v2254, 1
        %v2577 = vrot.slane %v2255, 1
        %v2578 = vrot.slane %v2256, 1
        %v2579 = vrot.slane %v2257, 1
        %v2580 = vrot.slane %v2258, 1
        %v2581 = vrot.slane %v2259, 1
        %v2582 = vrot.slane %v2260, 1
        %v2583 = vrot.slane %v2261, 1
        %v2584 = vrot.slane %v2262, 1
        %v2585 = vrot.slane %v2263, 1
        %v2586 = vrot.slane %v2264, 1
        %v2587 = vrot.slane %v2265, 1
        %v2588 = vrot.slane %v2266, 1
        %v2589 = vrot.slane %v2267, 1
        %v2590 = vrot.slane %v2268, 1
        %v2591 = vrot.slane %v2269, 1
        %v2592 = vrot.slane %v2270, 1
        %v2593 = vrot.slane %v2271, 1
        %v2594 = vrot.slane %v2272, 1
        %v2595 = vrot.slane %v2273, 1
        %v2596 = vrot.slane %v2274, 1
        %v2597 = vrot.slane %v2275, 1
        %v2598 = vrot.slane %v2276, 1
        %v2599 = vrot.slane %v2277, 1
        %v2600 = vrot.slane %v2278, 1
        %v2601 = vrot.slane %v2279, 1
        %v2602 = vrot.slane %v2280, 1
        %v2603 = vrot.slane %v2281, 1
        %v2604 = vrot.slane %v2282, 1
        %v2605 = vrot.slane %v2283, 1
        %v2606 = vrot.slane %v2284, 1
        %v2607 = vsel %vm348, %v2605, %v2606
        %v2608 = vsel %vm348, %v2604, %v2605
        %v2609 = vsel %vm348, %v2602, %v2603
        %v2610 = vsel %vm348, %v2601, %v2602
        %v2611 = vsel %vm348, %v2599, %v2600
        %v2612 = vsel %vm348, %v2598, %v2599
        %v2613 = vsel %vm348, %v2596, %v2597
        %v2614 = vsel %vm348, %v2595, %v2596
        %v2615 = vsel %vm348, %v2593, %v2594
        %v2616 = vsel %vm348, %v2592, %v2593
        %v2617 = vsel %vm348, %v2590, %v2591
        %v2618 = vsel %vm348, %v2589, %v2590
        %v2619 = vsel %vm348, %v2587, %v2588
        %v2620 = vsel %vm348, %v2586, %v2587
        %v2621 = vsel %vm348, %v2584, %v2585
        %v2622 = vsel %vm348, %v2583, %v2584
        %v2623 = vsel %vm348, %v2581, %v2582
        %v2624 = vsel %vm348, %v2580, %v2581
        %v2625 = vsel %vm348, %v2578, %v2579
        %v2626 = vsel %vm348, %v2577, %v2578
        %v2627 = vsel %vm348, %v2575, %v2576
        %v2628 = vsel %vm348, %v2574, %v2575
        %v2629 = vsel %vm348, %v2572, %v2573
        %v2630 = vsel %vm348, %v2571, %v2572
        %v2631 = vsel %vm348, %v2569, %v2570
        %v2632 = vsel %vm348, %v2568, %v2569
        %v2633 = vsel %vm348, %v2566, %v2567
        %v2634 = vsel %vm348, %v2565, %v2566
        %v2635 = vsel %vm348, %v2563, %v2564
        %v2636 = vsel %vm348, %v2562, %v2563
        %v2637 = vsel %vm348, %v2560, %v2561
        %v2638 = vsel %vm348, %v2559, %v2560
        %s2639 = scalar_lea.vmem [#allocation4], 896
        %v2640 = vld [vmem:[%s2639] sm:$0xff]
        %v2641 = vld [vmem:[%s2639 + $0x8] sm:$0xff]
        %v2642 = vld [vmem:[%s2639 + $0x10] sm:$0xff]
        %v2643 = vld [vmem:[%s2639 + $0x18] sm:$0xff]
        %v2644 = vld [vmem:[%s2639 + $0x20] sm:$0xff]
        %v2645 = vld [vmem:[%s2639 + $0x28] sm:$0xff]
        %v2646 = vld [vmem:[%s2639 + $0x30] sm:$0xff]
        %v2647 = vld [vmem:[%s2639 + $0x38] sm:$0xff]
        %v2648 = vld [vmem:[%s2639 + $0x40] sm:$0xff]
        %v2649 = vld [vmem:[%s2639 + $0x48] sm:$0xff]
        %v2650 = vld [vmem:[%s2639 + $0x50] sm:$0xff]
        %v2651 = vld [vmem:[%s2639 + $0x58] sm:$0xff]
        %v2652 = vld [vmem:[%s2639 + $0x60] sm:$0xff]
        %v2653 = vld [vmem:[%s2639 + $0x68] sm:$0xff]
        %v2654 = vld [vmem:[%s2639 + $0x70] sm:$0xff]
        %v2655 = vld [vmem:[%s2639 + $0x78] sm:$0xff]
        %2656 = vmatprep.subr.mxu0 0.0
        %2657 = vmatpush1.msra.mxu0 %v2655
        %2658 = vmatprep.subr.mxu0 0.0
        %2659 = vmatpush1.msra.mxu0 %v2654
        %2660 = vmatprep.subr.mxu0 0.0
        %2661 = vmatpush1.msra.mxu0 %v2653
        %2662 = vmatprep.subr.mxu0 0.0
        %2663 = vmatpush1.msra.mxu0 %v2652
        %2664 = vmatprep.subr.mxu0 0.0
        %2665 = vmatpush1.msra.mxu0 %v2651
        %2666 = vmatprep.subr.mxu0 0.0
        %2667 = vmatpush1.msra.mxu0 %v2650
        %2668 = vmatprep.subr.mxu0 0.0
        %2669 = vmatpush1.msra.mxu0 %v2649
        %2670 = vmatprep.subr.mxu0 0.0
        %2671 = vmatpush1.msra.mxu0 %v2648
        %2672 = vmatprep.subr.mxu0 0.0
        %2673 = vmatpush1.msra.mxu0 %v2647
        %2674 = vmatprep.subr.mxu0 0.0
        %2675 = vmatpush1.msra.mxu0 %v2646
        %2676 = vmatprep.subr.mxu0 0.0
        %2677 = vmatpush1.msra.mxu0 %v2645
        %2678 = vmatprep.subr.mxu0 0.0
        %2679 = vmatpush1.msra.mxu0 %v2644
        %2680 = vmatprep.subr.mxu0 0.0
        %2681 = vmatpush1.msra.mxu0 %v2643
        %2682 = vmatprep.subr.mxu0 0.0
        %2683 = vmatpush1.msra.mxu0 %v2642
        %2684 = vmatprep.subr.mxu0 0.0
        %2685 = vmatpush1.msra.mxu0 %v2641
        %2686 = vmatprep.subr.mxu0 0.0
        %2687 = vmatpush1.msra.mxu0 %v2640
        %2688 = vmatprep.subr.mxu0 0.0
        %2689 = vmatpush2.msra.mxu0 0.0
        %2690 = vmatprep.subr.mxu0 0.0
        %2691 = vmatpush2.msra.mxu0 0.0
        %2692 = vmatprep.subr.mxu0 0.0
        %2693 = vmatpush2.msra.mxu0 0.0
        %2694 = vmatprep.subr.mxu0 0.0
        %2695 = vmatpush2.msra.mxu0 0.0
        %2696 = vmatprep.subr.mxu0 0.0
        %2697 = vmatpush2.msra.mxu0 0.0
        %2698 = vmatprep.subr.mxu0 0.0
        %2699 = vmatpush2.msra.mxu0 0.0
        %2700 = vmatprep.subr.mxu0 0.0
        %2701 = vmatpush2.msra.mxu0 0.0
        %2702 = vmatprep.subr.mxu0 0.0
        %2703 = vmatpush2.msra.mxu0 0.0
        %2704 = vmatprep.subr.mxu0 0.0
        %2705 = vmatpush2.msra.mxu0 0.0
        %2706 = vmatprep.subr.mxu0 0.0
        %2707 = vmatpush2.msra.mxu0 0.0
        %2708 = vmatprep.subr.mxu0 0.0
        %2709 = vmatpush2.msra.mxu0 0.0
        %2710 = vmatprep.subr.mxu0 0.0
        %2711 = vmatpush2.msra.mxu0 0.0
        %2712 = vmatprep.subr.mxu0 0.0
        %2713 = vmatpush2.msra.mxu0 0.0
        %2714 = vmatprep.subr.mxu0 0.0
        %2715 = vmatpush2.msra.mxu0 0.0
        %2716 = vmatprep.subr.mxu0 0.0
        %2717 = vmatpush2.msra.mxu0 0.0
        %2718 = vmatprep.subr.mxu0 0.0
        %2719 = vmatpush2.msra.mxu0 0.0
        %2720 = vmatprep.mubr.f32.mxu0 0.0
        %2721 = vmatmul.mubr.f32.gmra.mxu0 %v2638
        %v2722 = vpop.f32.mrf.mxu0
        %v2723 = vadd.f32 0.0, %v2722
        %v2724 = vpop.f32.mrf.mxu0
        %2725 = vmatprep.mubr.f32.mxu0 0.0
        %2726 = vmatmul.mubr.f32.gmra.mxu0 %v2637
        %v2727 = vpop.f32.mrf.mxu0
        %v2728 = vadd.f32 0.0, %v2727
        %v2729 = vpop.f32.mrf.mxu0
        %2730 = vmatprep.mubr.f32.mxu0 0.0
        %2731 = vmatmul.mubr.f32.gmra.mxu0 %v2636
        %v2732 = vpop.f32.mrf.mxu0
        %v2733 = vadd.f32 0.0, %v2732
        %v2734 = vpop.f32.mrf.mxu0
        %2735 = vmatprep.mubr.f32.mxu0 0.0
        %2736 = vmatmul.mubr.f32.gmra.mxu0 %v2635
        %v2737 = vpop.f32.mrf.mxu0
        %v2738 = vadd.f32 0.0, %v2737
        %v2739 = vpop.f32.mrf.mxu0
        %2740 = vmatprep.mubr.f32.mxu0 0.0
        %2741 = vmatmul.mubr.f32.gmra.mxu0 %v2634
        %v2742 = vpop.f32.mrf.mxu0
        %v2743 = vadd.f32 0.0, %v2742
        %v2744 = vpop.f32.mrf.mxu0
        %2745 = vmatprep.mubr.f32.mxu0 0.0
        %2746 = vmatmul.mubr.f32.gmra.mxu0 %v2633
        %v2747 = vpop.f32.mrf.mxu0
        %v2748 = vadd.f32 0.0, %v2747
        %v2749 = vpop.f32.mrf.mxu0
        %2750 = vmatprep.mubr.f32.mxu0 0.0
        %2751 = vmatmul.mubr.f32.gmra.mxu0 %v2632
        %v2752 = vpop.f32.mrf.mxu0
        %v2753 = vadd.f32 0.0, %v2752
        %v2754 = vpop.f32.mrf.mxu0
        %2755 = vmatprep.mubr.f32.mxu0 0.0
        %2756 = vmatmul.mubr.f32.gmra.mxu0 %v2631
        %v2757 = vpop.f32.mrf.mxu0
        %v2758 = vadd.f32 0.0, %v2757
        %v2759 = vpop.f32.mrf.mxu0
        %2760 = vmatprep.mubr.f32.mxu0 0.0
        %2761 = vmatmul.mubr.f32.gmra.mxu0 %v2630
        %v2762 = vpop.f32.mrf.mxu0
        %v2763 = vadd.f32 0.0, %v2762
        %v2764 = vpop.f32.mrf.mxu0
        %2765 = vmatprep.mubr.f32.mxu0 0.0
        %2766 = vmatmul.mubr.f32.gmra.mxu0 %v2629
        %v2767 = vpop.f32.mrf.mxu0
        %v2768 = vadd.f32 0.0, %v2767
        %v2769 = vpop.f32.mrf.mxu0
        %2770 = vmatprep.mubr.f32.mxu0 0.0
        %2771 = vmatmul.mubr.f32.gmra.mxu0 %v2628
        %v2772 = vpop.f32.mrf.mxu0
        %v2773 = vadd.f32 0.0, %v2772
        %v2774 = vpop.f32.mrf.mxu0
        %2775 = vmatprep.mubr.f32.mxu0 0.0
        %2776 = vmatmul.mubr.f32.gmra.mxu0 %v2627
        %v2777 = vpop.f32.mrf.mxu0
        %v2778 = vadd.f32 0.0, %v2777
        %v2779 = vpop.f32.mrf.mxu0
        %2780 = vmatprep.mubr.f32.mxu0 0.0
        %2781 = vmatmul.mubr.f32.gmra.mxu0 %v2626
        %v2782 = vpop.f32.mrf.mxu0
        %v2783 = vadd.f32 0.0, %v2782
        %v2784 = vpop.f32.mrf.mxu0
        %2785 = vmatprep.mubr.f32.mxu0 0.0
        %2786 = vmatmul.mubr.f32.gmra.mxu0 %v2625
        %v2787 = vpop.f32.mrf.mxu0
        %v2788 = vadd.f32 0.0, %v2787
        %v2789 = vpop.f32.mrf.mxu0
        %2790 = vmatprep.mubr.f32.mxu0 0.0
        %2791 = vmatmul.mubr.f32.gmra.mxu0 %v2624
        %v2792 = vpop.f32.mrf.mxu0
        %v2793 = vadd.f32 0.0, %v2792
        %v2794 = vpop.f32.mrf.mxu0
        %2795 = vmatprep.mubr.f32.mxu0 0.0
        %2796 = vmatmul.mubr.f32.gmra.mxu0 %v2623
        %v2797 = vpop.f32.mrf.mxu0
        %v2798 = vadd.f32 0.0, %v2797
        %v2799 = vpop.f32.mrf.mxu0
        %2800 = vmatprep.mubr.f32.mxu0 0.0
        %2801 = vmatmul.mubr.f32.gmra.mxu0 %v2622
        %v2802 = vpop.f32.mrf.mxu0
        %v2803 = vadd.f32 0.0, %v2802
        %v2804 = vpop.f32.mrf.mxu0
        %2805 = vmatprep.mubr.f32.mxu0 0.0
        %2806 = vmatmul.mubr.f32.gmra.mxu0 %v2621
        %v2807 = vpop.f32.mrf.mxu0
        %v2808 = vadd.f32 0.0, %v2807
        %v2809 = vpop.f32.mrf.mxu0
        %2810 = vmatprep.mubr.f32.mxu0 0.0
        %2811 = vmatmul.mubr.f32.gmra.mxu0 %v2620
        %v2812 = vpop.f32.mrf.mxu0
        %v2813 = vadd.f32 0.0, %v2812
        %v2814 = vpop.f32.mrf.mxu0
        %2815 = vmatprep.mubr.f32.mxu0 0.0
        %2816 = vmatmul.mubr.f32.gmra.mxu0 %v2619
        %v2817 = vpop.f32.mrf.mxu0
        %v2818 = vadd.f32 0.0, %v2817
        %v2819 = vpop.f32.mrf.mxu0
        %2820 = vmatprep.mubr.f32.mxu0 0.0
        %2821 = vmatmul.mubr.f32.gmra.mxu0 %v2618
        %v2822 = vpop.f32.mrf.mxu0
        %v2823 = vadd.f32 0.0, %v2822
        %v2824 = vpop.f32.mrf.mxu0
        %2825 = vmatprep.mubr.f32.mxu0 0.0
        %2826 = vmatmul.mubr.f32.gmra.mxu0 %v2617
        %v2827 = vpop.f32.mrf.mxu0
        %v2828 = vadd.f32 0.0, %v2827
        %v2829 = vpop.f32.mrf.mxu0
        %2830 = vmatprep.mubr.f32.mxu0 0.0
        %2831 = vmatmul.mubr.f32.gmra.mxu0 %v2616
        %v2832 = vpop.f32.mrf.mxu0
        %v2833 = vadd.f32 0.0, %v2832
        %v2834 = vpop.f32.mrf.mxu0
        %2835 = vmatprep.mubr.f32.mxu0 0.0
        %2836 = vmatmul.mubr.f32.gmra.mxu0 %v2615
        %v2837 = vpop.f32.mrf.mxu0
        %v2838 = vadd.f32 0.0, %v2837
        %v2839 = vpop.f32.mrf.mxu0
        %2840 = vmatprep.mubr.f32.mxu0 0.0
        %2841 = vmatmul.mubr.f32.gmra.mxu0 %v2614
        %v2842 = vpop.f32.mrf.mxu0
        %v2843 = vadd.f32 0.0, %v2842
        %v2844 = vpop.f32.mrf.mxu0
        %2845 = vmatprep.mubr.f32.mxu0 0.0
        %2846 = vmatmul.mubr.f32.gmra.mxu0 %v2613
        %v2847 = vpop.f32.mrf.mxu0
        %v2848 = vadd.f32 0.0, %v2847
        %v2849 = vpop.f32.mrf.mxu0
        %2850 = vmatprep.mubr.f32.mxu0 0.0
        %2851 = vmatmul.mubr.f32.gmra.mxu0 %v2612
        %v2852 = vpop.f32.mrf.mxu0
        %v2853 = vadd.f32 0.0, %v2852
        %v2854 = vpop.f32.mrf.mxu0
        %2855 = vmatprep.mubr.f32.mxu0 0.0
        %2856 = vmatmul.mubr.f32.gmra.mxu0 %v2611
        %v2857 = vpop.f32.mrf.mxu0
        %v2858 = vadd.f32 0.0, %v2857
        %v2859 = vpop.f32.mrf.mxu0
        %2860 = vmatprep.mubr.f32.mxu0 0.0
        %2861 = vmatmul.mubr.f32.gmra.mxu0 %v2610
        %v2862 = vpop.f32.mrf.mxu0
        %v2863 = vadd.f32 0.0, %v2862
        %v2864 = vpop.f32.mrf.mxu0
        %2865 = vmatprep.mubr.f32.mxu0 0.0
        %2866 = vmatmul.mubr.f32.gmra.mxu0 %v2609
        %v2867 = vpop.f32.mrf.mxu0
        %v2868 = vadd.f32 0.0, %v2867
        %v2869 = vpop.f32.mrf.mxu0
        %2870 = vmatprep.mubr.f32.mxu0 0.0
        %2871 = vmatmul.mubr.f32.gmra.mxu0 %v2608
        %v2872 = vpop.f32.mrf.mxu0
        %v2873 = vadd.f32 0.0, %v2872
        %v2874 = vpop.f32.mrf.mxu0
        %2875 = vmatprep.mubr.f32.mxu0 0.0
        %2876 = vmatmul.mubr.f32.gmra.mxu0 %v2607
        %v2877 = vpop.f32.mrf.mxu0
        %v2878 = vadd.f32 0.0, %v2877
        %v2879 = vpop.f32.mrf.mxu0
        %2880 = vdwg.mxu0
        %v2881 = vadd.f32 %v2527, %v2723
        %v2882 = vadd.f32 %v2528, %v2728
        %v2883 = vadd.f32 %v2529, %v2733
        %v2884 = vadd.f32 %v2530, %v2738
        %v2885 = vadd.f32 %v2531, %v2743
        %v2886 = vadd.f32 %v2532, %v2748
        %v2887 = vadd.f32 %v2533, %v2753
        %v2888 = vadd.f32 %v2534, %v2758
        %v2889 = vadd.f32 %v2535, %v2763
        %v2890 = vadd.f32 %v2536, %v2768
        %v2891 = vadd.f32 %v2537, %v2773
        %v2892 = vadd.f32 %v2538, %v2778
        %v2893 = vadd.f32 %v2539, %v2783
        %v2894 = vadd.f32 %v2540, %v2788
        %v2895 = vadd.f32 %v2541, %v2793
        %v2896 = vadd.f32 %v2542, %v2798
        %v2897 = vadd.f32 %v2543, %v2803
        %v2898 = vadd.f32 %v2544, %v2808
        %v2899 = vadd.f32 %v2545, %v2813
        %v2900 = vadd.f32 %v2546, %v2818
        %v2901 = vadd.f32 %v2547, %v2823
        %v2902 = vadd.f32 %v2548, %v2828
        %v2903 = vadd.f32 %v2549, %v2833
        %v2904 = vadd.f32 %v2550, %v2838
        %v2905 = vadd.f32 %v2551, %v2843
        %v2906 = vadd.f32 %v2552, %v2848
        %v2907 = vadd.f32 %v2553, %v2853
        %v2908 = vadd.f32 %v2554, %v2858
        %v2909 = vadd.f32 %v2555, %v2863
        %v2910 = vadd.f32 %v2556, %v2868
        %v2911 = vadd.f32 %v2557, %v2873
        %v2912 = vadd.f32 %v2558, %v2878
        %v2913 = vrot.slane %v2237, 2
        %v2914 = vrot.slane %v2238, 2
        %v2915 = vrot.slane %v2239, 2
        %v2916 = vrot.slane %v2240, 2
        %v2917 = vrot.slane %v2241, 2
        %v2918 = vrot.slane %v2242, 2
        %v2919 = vrot.slane %v2243, 2
        %v2920 = vrot.slane %v2244, 2
        %v2921 = vrot.slane %v2245, 2
        %v2922 = vrot.slane %v2246, 2
        %v2923 = vrot.slane %v2247, 2
        %v2924 = vrot.slane %v2248, 2
        %v2925 = vrot.slane %v2249, 2
        %v2926 = vrot.slane %v2250, 2
        %v2927 = vrot.slane %v2251, 2
        %v2928 = vrot.slane %v2252, 2
        %v2929 = vrot.slane %v2253, 2
        %v2930 = vrot.slane %v2254, 2
        %v2931 = vrot.slane %v2255, 2
        %v2932 = vrot.slane %v2256, 2
        %v2933 = vrot.slane %v2257, 2
        %v2934 = vrot.slane %v2258, 2
        %v2935 = vrot.slane %v2259, 2
        %v2936 = vrot.slane %v2260, 2
        %v2937 = vrot.slane %v2261, 2
        %v2938 = vrot.slane %v2262, 2
        %v2939 = vrot.slane %v2263, 2
        %v2940 = vrot.slane %v2264, 2
        %v2941 = vrot.slane %v2265, 2
        %v2942 = vrot.slane %v2266, 2
        %v2943 = vrot.slane %v2267, 2
        %v2944 = vrot.slane %v2268, 2
        %v2945 = vrot.slane %v2269, 2
        %v2946 = vrot.slane %v2270, 2
        %v2947 = vrot.slane %v2271, 2
        %v2948 = vrot.slane %v2272, 2
        %v2949 = vrot.slane %v2273, 2
        %v2950 = vrot.slane %v2274, 2
        %v2951 = vrot.slane %v2275, 2
        %v2952 = vrot.slane %v2276, 2
        %v2953 = vrot.slane %v2277, 2
        %v2954 = vrot.slane %v2278, 2
        %v2955 = vrot.slane %v2279, 2
        %v2956 = vrot.slane %v2280, 2
        %v2957 = vrot.slane %v2281, 2
        %v2958 = vrot.slane %v2282, 2
        %v2959 = vrot.slane %v2283, 2
        %v2960 = vrot.slane %v2284, 2
        %v2961 = vsel %vm896, %v2959, %v2960
        %v2962 = vsel %vm896, %v2958, %v2959
        %v2963 = vsel %vm896, %v2956, %v2957
        %v2964 = vsel %vm896, %v2955, %v2956
        %v2965 = vsel %vm896, %v2953, %v2954
        %v2966 = vsel %vm896, %v2952, %v2953
        %v2967 = vsel %vm896, %v2950, %v2951
        %v2968 = vsel %vm896, %v2949, %v2950
        %v2969 = vsel %vm896, %v2947, %v2948
        %v2970 = vsel %vm896, %v2946, %v2947
        %v2971 = vsel %vm896, %v2944, %v2945
        %v2972 = vsel %vm896, %v2943, %v2944
        %v2973 = vsel %vm896, %v2941, %v2942
        %v2974 = vsel %vm896, %v2940, %v2941
        %v2975 = vsel %vm896, %v2938, %v2939
        %v2976 = vsel %vm896, %v2937, %v2938
        %v2977 = vsel %vm896, %v2935, %v2936
        %v2978 = vsel %vm896, %v2934, %v2935
        %v2979 = vsel %vm896, %v2932, %v2933
        %v2980 = vsel %vm896, %v2931, %v2932
        %v2981 = vsel %vm896, %v2929, %v2930
        %v2982 = vsel %vm896, %v2928, %v2929
        %v2983 = vsel %vm896, %v2926, %v2927
        %v2984 = vsel %vm896, %v2925, %v2926
        %v2985 = vsel %vm896, %v2923, %v2924
        %v2986 = vsel %vm896, %v2922, %v2923
        %v2987 = vsel %vm896, %v2920, %v2921
        %v2988 = vsel %vm896, %v2919, %v2920
        %v2989 = vsel %vm896, %v2917, %v2918
        %v2990 = vsel %vm896, %v2916, %v2917
        %v2991 = vsel %vm896, %v2914, %v2915
        %v2992 = vsel %vm896, %v2913, %v2914
        %s2993 = scalar_lea.vmem [#allocation4], 1024
        %v2994 = vld [vmem:[%s2993] sm:$0xff]
        %v2995 = vld [vmem:[%s2993 + $0x8] sm:$0xff]
        %v2996 = vld [vmem:[%s2993 + $0x10] sm:$0xff]
        %v2997 = vld [vmem:[%s2993 + $0x18] sm:$0xff]
        %v2998 = vld [vmem:[%s2993 + $0x20] sm:$0xff]
        %v2999 = vld [vmem:[%s2993 + $0x28] sm:$0xff]
        %v3000 = vld [vmem:[%s2993 + $0x30] sm:$0xff]
        %v3001 = vld [vmem:[%s2993 + $0x38] sm:$0xff]
        %v3002 = vld [vmem:[%s2993 + $0x40] sm:$0xff]
        %v3003 = vld [vmem:[%s2993 + $0x48] sm:$0xff]
        %v3004 = vld [vmem:[%s2993 + $0x50] sm:$0xff]
        %v3005 = vld [vmem:[%s2993 + $0x58] sm:$0xff]
        %v3006 = vld [vmem:[%s2993 + $0x60] sm:$0xff]
        %v3007 = vld [vmem:[%s2993 + $0x68] sm:$0xff]
        %v3008 = vld [vmem:[%s2993 + $0x70] sm:$0xff]
        %v3009 = vld [vmem:[%s2993 + $0x78] sm:$0xff]
        %3010 = vmatprep.subr.mxu0 0.0
        %3011 = vmatpush1.msra.mxu0 %v3009
        %3012 = vmatprep.subr.mxu0 0.0
        %3013 = vmatpush1.msra.mxu0 %v3008
        %3014 = vmatprep.subr.mxu0 0.0
        %3015 = vmatpush1.msra.mxu0 %v3007
        %3016 = vmatprep.subr.mxu0 0.0
        %3017 = vmatpush1.msra.mxu0 %v3006
        %3018 = vmatprep.subr.mxu0 0.0
        %3019 = vmatpush1.msra.mxu0 %v3005
        %3020 = vmatprep.subr.mxu0 0.0
        %3021 = vmatpush1.msra.mxu0 %v3004
        %3022 = vmatprep.subr.mxu0 0.0
        %3023 = vmatpush1.msra.mxu0 %v3003
        %3024 = vmatprep.subr.mxu0 0.0
        %3025 = vmatpush1.msra.mxu0 %v3002
        %3026 = vmatprep.subr.mxu0 0.0
        %3027 = vmatpush1.msra.mxu0 %v3001
        %3028 = vmatprep.subr.mxu0 0.0
        %3029 = vmatpush1.msra.mxu0 %v3000
        %3030 = vmatprep.subr.mxu0 0.0
        %3031 = vmatpush1.msra.mxu0 %v2999
        %3032 = vmatprep.subr.mxu0 0.0
        %3033 = vmatpush1.msra.mxu0 %v2998
        %3034 = vmatprep.subr.mxu0 0.0
        %3035 = vmatpush1.msra.mxu0 %v2997
        %3036 = vmatprep.subr.mxu0 0.0
        %3037 = vmatpush1.msra.mxu0 %v2996
        %3038 = vmatprep.subr.mxu0 0.0
        %3039 = vmatpush1.msra.mxu0 %v2995
        %3040 = vmatprep.subr.mxu0 0.0
        %3041 = vmatpush1.msra.mxu0 %v2994
        %3042 = vmatprep.subr.mxu0 0.0
        %3043 = vmatpush2.msra.mxu0 0.0
        %3044 = vmatprep.subr.mxu0 0.0
        %3045 = vmatpush2.msra.mxu0 0.0
        %3046 = vmatprep.subr.mxu0 0.0
        %3047 = vmatpush2.msra.mxu0 0.0
        %3048 = vmatprep.subr.mxu0 0.0
        %3049 = vmatpush2.msra.mxu0 0.0
        %3050 = vmatprep.subr.mxu0 0.0
        %3051 = vmatpush2.msra.mxu0 0.0
        %3052 = vmatprep.subr.mxu0 0.0
        %3053 = vmatpush2.msra.mxu0 0.0
        %3054 = vmatprep.subr.mxu0 0.0
        %3055 = vmatpush2.msra.mxu0 0.0
        %3056 = vmatprep.subr.mxu0 0.0
        %3057 = vmatpush2.msra.mxu0 0.0
        %3058 = vmatprep.subr.mxu0 0.0
        %3059 = vmatpush2.msra.mxu0 0.0
        %3060 = vmatprep.subr.mxu0 0.0
        %3061 = vmatpush2.msra.mxu0 0.0
        %3062 = vmatprep.subr.mxu0 0.0
        %3063 = vmatpush2.msra.mxu0 0.0
        %3064 = vmatprep.subr.mxu0 0.0
        %3065 = vmatpush2.msra.mxu0 0.0
        %3066 = vmatprep.subr.mxu0 0.0
        %3067 = vmatpush2.msra.mxu0 0.0
        %3068 = vmatprep.subr.mxu0 0.0
        %3069 = vmatpush2.msra.mxu0 0.0
        %3070 = vmatprep.subr.mxu0 0.0
        %3071 = vmatpush2.msra.mxu0 0.0
        %3072 = vmatprep.subr.mxu0 0.0
        %3073 = vmatpush2.msra.mxu0 0.0
        %3074 = vmatprep.mubr.f32.mxu0 0.0
        %3075 = vmatmul.mubr.f32.gmra.mxu0 %v2992
        %v3076 = vpop.f32.mrf.mxu0
        %v3077 = vadd.f32 0.0, %v3076
        %v3078 = vpop.f32.mrf.mxu0
        %3079 = vmatprep.mubr.f32.mxu0 0.0
        %3080 = vmatmul.mubr.f32.gmra.mxu0 %v2991
        %v3081 = vpop.f32.mrf.mxu0
        %v3082 = vadd.f32 0.0, %v3081
        %v3083 = vpop.f32.mrf.mxu0
        %3084 = vmatprep.mubr.f32.mxu0 0.0
        %3085 = vmatmul.mubr.f32.gmra.mxu0 %v2990
        %v3086 = vpop.f32.mrf.mxu0
        %v3087 = vadd.f32 0.0, %v3086
        %v3088 = vpop.f32.mrf.mxu0
        %3089 = vmatprep.mubr.f32.mxu0 0.0
        %3090 = vmatmul.mubr.f32.gmra.mxu0 %v2989
        %v3091 = vpop.f32.mrf.mxu0
        %v3092 = vadd.f32 0.0, %v3091
        %v3093 = vpop.f32.mrf.mxu0
        %3094 = vmatprep.mubr.f32.mxu0 0.0
        %3095 = vmatmul.mubr.f32.gmra.mxu0 %v2988
        %v3096 = vpop.f32.mrf.mxu0
        %v3097 = vadd.f32 0.0, %v3096
        %v3098 = vpop.f32.mrf.mxu0
        %3099 = vmatprep.mubr.f32.mxu0 0.0
        %3100 = vmatmul.mubr.f32.gmra.mxu0 %v2987
        %v3101 = vpop.f32.mrf.mxu0
        %v3102 = vadd.f32 0.0, %v3101
        %v3103 = vpop.f32.mrf.mxu0
        %3104 = vmatprep.mubr.f32.mxu0 0.0
        %3105 = vmatmul.mubr.f32.gmra.mxu0 %v2986
        %v3106 = vpop.f32.mrf.mxu0
        %v3107 = vadd.f32 0.0, %v3106
        %v3108 = vpop.f32.mrf.mxu0
        %3109 = vmatprep.mubr.f32.mxu0 0.0
        %3110 = vmatmul.mubr.f32.gmra.mxu0 %v2985
        %v3111 = vpop.f32.mrf.mxu0
        %v3112 = vadd.f32 0.0, %v3111
        %v3113 = vpop.f32.mrf.mxu0
        %3114 = vmatprep.mubr.f32.mxu0 0.0
        %3115 = vmatmul.mubr.f32.gmra.mxu0 %v2984
        %v3116 = vpop.f32.mrf.mxu0
        %v3117 = vadd.f32 0.0, %v3116
        %v3118 = vpop.f32.mrf.mxu0
        %3119 = vmatprep.mubr.f32.mxu0 0.0
        %3120 = vmatmul.mubr.f32.gmra.mxu0 %v2983
        %v3121 = vpop.f32.mrf.mxu0
        %v3122 = vadd.f32 0.0, %v3121
        %v3123 = vpop.f32.mrf.mxu0
        %3124 = vmatprep.mubr.f32.mxu0 0.0
        %3125 = vmatmul.mubr.f32.gmra.mxu0 %v2982
        %v3126 = vpop.f32.mrf.mxu0
        %v3127 = vadd.f32 0.0, %v3126
        %v3128 = vpop.f32.mrf.mxu0
        %3129 = vmatprep.mubr.f32.mxu0 0.0
        %3130 = vmatmul.mubr.f32.gmra.mxu0 %v2981
        %v3131 = vpop.f32.mrf.mxu0
        %v3132 = vadd.f32 0.0, %v3131
        %v3133 = vpop.f32.mrf.mxu0
        %3134 = vmatprep.mubr.f32.mxu0 0.0
        %3135 = vmatmul.mubr.f32.gmra.mxu0 %v2980
        %v3136 = vpop.f32.mrf.mxu0
        %v3137 = vadd.f32 0.0, %v3136
        %v3138 = vpop.f32.mrf.mxu0
        %3139 = vmatprep.mubr.f32.mxu0 0.0
        %3140 = vmatmul.mubr.f32.gmra.mxu0 %v2979
        %v3141 = vpop.f32.mrf.mxu0
        %v3142 = vadd.f32 0.0, %v3141
        %v3143 = vpop.f32.mrf.mxu0
        %3144 = vmatprep.mubr.f32.mxu0 0.0
        %3145 = vmatmul.mubr.f32.gmra.mxu0 %v2978
        %v3146 = vpop.f32.mrf.mxu0
        %v3147 = vadd.f32 0.0, %v3146
        %v3148 = vpop.f32.mrf.mxu0
        %3149 = vmatprep.mubr.f32.mxu0 0.0
        %3150 = vmatmul.mubr.f32.gmra.mxu0 %v2977
        %v3151 = vpop.f32.mrf.mxu0
        %v3152 = vadd.f32 0.0, %v3151
        %v3153 = vpop.f32.mrf.mxu0
        %3154 = vmatprep.mubr.f32.mxu0 0.0
        %3155 = vmatmul.mubr.f32.gmra.mxu0 %v2976
        %v3156 = vpop.f32.mrf.mxu0
        %v3157 = vadd.f32 0.0, %v3156
        %v3158 = vpop.f32.mrf.mxu0
        %3159 = vmatprep.mubr.f32.mxu0 0.0
        %3160 = vmatmul.mubr.f32.gmra.mxu0 %v2975
        %v3161 = vpop.f32.mrf.mxu0
        %v3162 = vadd.f32 0.0, %v3161
        %v3163 = vpop.f32.mrf.mxu0
        %3164 = vmatprep.mubr.f32.mxu0 0.0
        %3165 = vmatmul.mubr.f32.gmra.mxu0 %v2974
        %v3166 = vpop.f32.mrf.mxu0
        %v3167 = vadd.f32 0.0, %v3166
        %v3168 = vpop.f32.mrf.mxu0
        %3169 = vmatprep.mubr.f32.mxu0 0.0
        %3170 = vmatmul.mubr.f32.gmra.mxu0 %v2973
        %v3171 = vpop.f32.mrf.mxu0
        %v3172 = vadd.f32 0.0, %v3171
        %v3173 = vpop.f32.mrf.mxu0
        %3174 = vmatprep.mubr.f32.mxu0 0.0
        %3175 = vmatmul.mubr.f32.gmra.mxu0 %v2972
        %v3176 = vpop.f32.mrf.mxu0
        %v3177 = vadd.f32 0.0, %v3176
        %v3178 = vpop.f32.mrf.mxu0
        %3179 = vmatprep.mubr.f32.mxu0 0.0
        %3180 = vmatmul.mubr.f32.gmra.mxu0 %v2971
        %v3181 = vpop.f32.mrf.mxu0
        %v3182 = vadd.f32 0.0, %v3181
        %v3183 = vpop.f32.mrf.mxu0
        %3184 = vmatprep.mubr.f32.mxu0 0.0
        %3185 = vmatmul.mubr.f32.gmra.mxu0 %v2970
        %v3186 = vpop.f32.mrf.mxu0
        %v3187 = vadd.f32 0.0, %v3186
        %v3188 = vpop.f32.mrf.mxu0
        %3189 = vmatprep.mubr.f32.mxu0 0.0
        %3190 = vmatmul.mubr.f32.gmra.mxu0 %v2969
        %v3191 = vpop.f32.mrf.mxu0
        %v3192 = vadd.f32 0.0, %v3191
        %v3193 = vpop.f32.mrf.mxu0
        %3194 = vmatprep.mubr.f32.mxu0 0.0
        %3195 = vmatmul.mubr.f32.gmra.mxu0 %v2968
        %v3196 = vpop.f32.mrf.mxu0
        %v3197 = vadd.f32 0.0, %v3196
        %v3198 = vpop.f32.mrf.mxu0
        %3199 = vmatprep.mubr.f32.mxu0 0.0
        %3200 = vmatmul.mubr.f32.gmra.mxu0 %v2967
        %v3201 = vpop.f32.mrf.mxu0
        %v3202 = vadd.f32 0.0, %v3201
        %v3203 = vpop.f32.mrf.mxu0
        %3204 = vmatprep.mubr.f32.mxu0 0.0
        %3205 = vmatmul.mubr.f32.gmra.mxu0 %v2966
        %v3206 = vpop.f32.mrf.mxu0
        %v3207 = vadd.f32 0.0, %v3206
        %v3208 = vpop.f32.mrf.mxu0
        %3209 = vmatprep.mubr.f32.mxu0 0.0
        %3210 = vmatmul.mubr.f32.gmra.mxu0 %v2965
        %v3211 = vpop.f32.mrf.mxu0
        %v3212 = vadd.f32 0.0, %v3211
        %v3213 = vpop.f32.mrf.mxu0
        %3214 = vmatprep.mubr.f32.mxu0 0.0
        %3215 = vmatmul.mubr.f32.gmra.mxu0 %v2964
        %v3216 = vpop.f32.mrf.mxu0
        %v3217 = vadd.f32 0.0, %v3216
        %v3218 = vpop.f32.mrf.mxu0
        %3219 = vmatprep.mubr.f32.mxu0 0.0
        %3220 = vmatmul.mubr.f32.gmra.mxu0 %v2963
        %v3221 = vpop.f32.mrf.mxu0
        %v3222 = vadd.f32 0.0, %v3221
        %v3223 = vpop.f32.mrf.mxu0
        %3224 = vmatprep.mubr.f32.mxu0 0.0
        %3225 = vmatmul.mubr.f32.gmra.mxu0 %v2962
        %v3226 = vpop.f32.mrf.mxu0
        %v3227 = vadd.f32 0.0, %v3226
        %v3228 = vpop.f32.mrf.mxu0
        %3229 = vmatprep.mubr.f32.mxu0 0.0
        %3230 = vmatmul.mubr.f32.gmra.mxu0 %v2961
        %v3231 = vpop.f32.mrf.mxu0
        %v3232 = vadd.f32 0.0, %v3231
        %v3233 = vpop.f32.mrf.mxu0
        %3234 = vdwg.mxu0
        %v3235 = vadd.f32 %v2881, %v3077
        %v3236 = vadd.f32 %v2882, %v3082
        %v3237 = vadd.f32 %v2883, %v3087
        %v3238 = vadd.f32 %v2884, %v3092
        %v3239 = vadd.f32 %v2885, %v3097
        %v3240 = vadd.f32 %v2886, %v3102
        %v3241 = vadd.f32 %v2887, %v3107
        %v3242 = vadd.f32 %v2888, %v3112
        %v3243 = vadd.f32 %v2889, %v3117
        %v3244 = vadd.f32 %v2890, %v3122
        %v3245 = vadd.f32 %v2891, %v3127
        %v3246 = vadd.f32 %v2892, %v3132
        %v3247 = vadd.f32 %v2893, %v3137
        %v3248 = vadd.f32 %v2894, %v3142
        %v3249 = vadd.f32 %v2895, %v3147
        %v3250 = vadd.f32 %v2896, %v3152
        %v3251 = vadd.f32 %v2897, %v3157
        %v3252 = vadd.f32 %v2898, %v3162
        %v3253 = vadd.f32 %v2899, %v3167
        %v3254 = vadd.f32 %v2900, %v3172
        %v3255 = vadd.f32 %v2901, %v3177
        %v3256 = vadd.f32 %v2902, %v3182
        %v3257 = vadd.f32 %v2903, %v3187
        %v3258 = vadd.f32 %v2904, %v3192
        %v3259 = vadd.f32 %v2905, %v3197
        %v3260 = vadd.f32 %v2906, %v3202
        %v3261 = vadd.f32 %v2907, %v3207
        %v3262 = vadd.f32 %v2908, %v3212
        %v3263 = vadd.f32 %v2909, %v3217
        %v3264 = vadd.f32 %v2910, %v3222
        %v3265 = vadd.f32 %v2911, %v3227
        %v3266 = vadd.f32 %v2912, %v3232
        %v3267 = vld [vmem:[%s2] sm:$0x1]
        %v3269 = vlaneseq
        %v3270 = vshrl.u32 %v3269, 7
        %v3271 = vsub.s32 0, %v3270
        %v3272 = vrot.slane %v3267, %v3271
        %v3274 = vadd.f32 %v3235, %v3272
        %v3275 = vadd.f32 %v3236, %v3272
        %v3276 = vadd.f32 %v3237, %v3272
        %v3277 = vadd.f32 %v3238, %v3272
        %v3278 = vadd.f32 %v3239, %v3272
        %v3279 = vadd.f32 %v3240, %v3272
        %v3280 = vadd.f32 %v3241, %v3272
        %v3281 = vadd.f32 %v3242, %v3272
        %v3282 = vadd.f32 %v3243, %v3272
        %v3283 = vadd.f32 %v3244, %v3272
        %v3284 = vadd.f32 %v3245, %v3272
        %v3285 = vadd.f32 %v3246, %v3272
        %v3286 = vadd.f32 %v3247, %v3272
        %v3287 = vadd.f32 %v3248, %v3272
        %v3288 = vadd.f32 %v3249, %v3272
        %v3289 = vadd.f32 %v3250, %v3272
        %v3290 = vadd.f32 %v3251, %v3272
        %v3291 = vadd.f32 %v3252, %v3272
        %v3292 = vadd.f32 %v3253, %v3272
        %v3293 = vadd.f32 %v3254, %v3272
        %v3294 = vadd.f32 %v3255, %v3272
        %v3295 = vadd.f32 %v3256, %v3272
        %v3296 = vadd.f32 %v3257, %v3272
        %v3297 = vadd.f32 %v3258, %v3272
        %v3298 = vadd.f32 %v3259, %v3272
        %v3299 = vadd.f32 %v3260, %v3272
        %v3300 = vadd.f32 %v3261, %v3272
        %v3301 = vadd.f32 %v3262, %v3272
        %v3302 = vadd.f32 %v3263, %v3272
        %v3303 = vadd.f32 %v3264, %v3272
        %v3304 = vadd.f32 %v3265, %v3272
        %v3305 = vadd.f32 %v3266, %v3272
        %3306 = vst [vmem:[%s160] sm:$0xff] %v3274
        %3307 = vst [vmem:[%s160 + $0x8] sm:$0xff] %v3275
        %3308 = vst [vmem:[%s160 + $0x10] sm:$0xff] %v3276
        %3309 = vst [vmem:[%s160 + $0x18] sm:$0xff] %v3277
        %3310 = vst [vmem:[%s160 + $0x20] sm:$0xff] %v3278
        %3311 = vst [vmem:[%s160 + $0x28] sm:$0xff] %v3279
        %3312 = vst [vmem:[%s160 + $0x30] sm:$0xff] %v3280
        %3313 = vst [vmem:[%s160 + $0x38] sm:$0xff] %v3281
        %3314 = vst [vmem:[%s160 + $0x40] sm:$0xff] %v3282
        %3315 = vst [vmem:[%s160 + $0x48] sm:$0xff] %v3283
        %3316 = vst [vmem:[%s160 + $0x50] sm:$0xff] %v3284
        %3317 = vst [vmem:[%s160 + $0x58] sm:$0xff] %v3285
        %3318 = vst [vmem:[%s160 + $0x60] sm:$0xff] %v3286
        %3319 = vst [vmem:[%s160 + $0x68] sm:$0xff] %v3287
        %3320 = vst [vmem:[%s160 + $0x70] sm:$0xff] %v3288
        %3321 = vst [vmem:[%s160 + $0x78] sm:$0xff] %v3289
        %3322 = vst [vmem:[%s160 + $0x80] sm:$0xff] %v3290
        %3323 = vst [vmem:[%s160 + $0x88] sm:$0xff] %v3291
        %3324 = vst [vmem:[%s160 + $0x90] sm:$0xff] %v3292
        %3325 = vst [vmem:[%s160 + $0x98] sm:$0xff] %v3293
        %3326 = vst [vmem:[%s160 + $0xa0] sm:$0xff] %v3294
        %3327 = vst [vmem:[%s160 + $0xa8] sm:$0xff] %v3295
        %3328 = vst [vmem:[%s160 + $0xb0] sm:$0xff] %v3296
        %3329 = vst [vmem:[%s160 + $0xb8] sm:$0xff] %v3297
        %3330 = vst [vmem:[%s160 + $0xc0] sm:$0xff] %v3298
        %3331 = vst [vmem:[%s160 + $0xc8] sm:$0xff] %v3299
        %3332 = vst [vmem:[%s160 + $0xd0] sm:$0xff] %v3300
        %3333 = vst [vmem:[%s160 + $0xd8] sm:$0xff] %v3301
        %3334 = vst [vmem:[%s160 + $0xe0] sm:$0xff] %v3302
        %3335 = vst [vmem:[%s160 + $0xe8] sm:$0xff] %v3303
        %3336 = vst [vmem:[%s160 + $0xf0] sm:$0xff] %v3304
        %3337 = vst [vmem:[%s160 + $0xf8] sm:$0xff] %v3305
        %s3338 = sand.u32 %s91, 1
        %s3339 = scalar_lea.sflag [#allocation6], %s3338
        %s3340 = sand.u32 %s91, 1
        %s3341 = smul.addr %s3340, 256
        %s3342 = scalar_lea.vmem [#allocation7], %s3341
        // Predicated region
        $region49: #{tpu_custom_call.1} parent=27 // pred_check
          %p3343 = pneg %p101
        $region50: #{tpu_custom_call.1} parent=27 // pred_check_branch
          %3345 = sbr.rel (%p3343) target = $region52
        $region51: #{tpu_custom_call.1} parent=27 // pred_region
          %s3346 = sadd.s32 %s24, %s25
          %s3347 = smul.u32 16, %s3346
          %s3349 = ssub.s32 4096, 4096
          %3350 = vsyncadd %s3339, %s3349
          %s3351 = smul.addr %s3347, 2
          %s3352 = smul.addr %s23, 32
          %s3353 = sadd.s32 %s3351, %s3352
          %s3354 = smul.addr %s3353, 128
          %s3355 = scalar_lea.hbm %s3, %s3354
          %s3356 = sshll.u32 %s3342, 4
          %s3357 = int_to_ptr.vmem [resolvable:$true] %s3356
          %3362 = dma.vmem_to_hbm [thread:$0]  %s3357, 4096, %s3355, %s3339, 128, 128, 8
        $region52: #{tpu_custom_call.1} parent=27 // pred_fallthru
          _
      $region28: #{tpu_custom_call.1} parent=5 // pred_fallthru
        _
      %p3363 = scmp.le.s32.totalorder 2, %s13
      // Predicated region
      $region53: #{tpu_custom_call.1} parent=5 // pred_check
        %p3364 = pneg %p3363
      $region54: #{tpu_custom_call.1} parent=5 // pred_check_branch
        %3366 = sbr.rel (%p3364) target = $region56
      $region55: #{tpu_custom_call.1} parent=5 // pred_region
        %s3367 = ssub.s32 %s13, 2
        // Predicated region
        $region57: #{tpu_custom_call.1} parent=55 // pred_check
          %p3368 = pneg %p107
        $region58: #{tpu_custom_call.1} parent=55 // pred_check_branch
          %3370 = sbr.rel (%p3368) target = $region60
        $region59: #{tpu_custom_call.1} parent=55 // pred_region
          %s3371 = sand.u32 %s92, 1
          %s3372 = scalar_lea.sflag [#allocation6], %s3371
          %s3373 = sand.u32 %s92, 1
          %s3374 = smul.addr %s3373, 256
          %s3375 = scalar_lea.vmem [#allocation7], %s3374
          %3376 = dma.done %s3372, 4096
        $region60: #{tpu_custom_call.1} parent=55 // pred_fallthru
          _
      $region56: #{tpu_custom_call.1} parent=5 // pred_fallthru
        _
    $region6: #{tpu_custom_call.1} parent=1 // loop_footer
      %s17 = sadd.s32 1, %s13
    $region7: #{tpu_custom_call.1} parent=1 // loop_footer_branch
      %12 = sbr.rel target = $region3
    $region8: #{tpu_custom_call.1} parent=1 // loop_exit
      _
    %3377 = vsyncpa [#allocation5], 1
    %s3378 = scalar_lea.sflag [#allocation5], 1
    %3379 = vsyncpa %s3378, 1
    %3380 = vsyncpa [#allocation6], 1
    %s3381 = scalar_lea.sflag [#allocation6], 1
    %3382 = vsyncpa %s3381, 1
  %3383 = vsyncmov [#allocation3]
  %s3384 = vpop.sfrf %3383
  %p3385 = scmp.eq.s32.totalorder %s3384, 0
  %p3386 = pneg %p3385
  %3388 = shalt.err (%p3386)
  %s3389 = scalar_lea.sflag [#allocation3], 1
  %3390 = vsyncmov %s3389
  %s3391 = vpop.sfrf %3390
  %p3392 = scmp.eq.s32.totalorder %s3391, 0
  %p3393 = pneg %p3392
  %3395 = shalt.err (%p3393)

</llo_original>
